<compile_context>
chip_gen: v6e
topology: v6e:2x2x1
jax: 0.10.0
libtpu: 0.0.40
codegen_flags: <defaults>
</compile_context>

<pallas_src>
import functools

import jax
import jax.numpy as jnp
from jax import lax
from jax.experimental import pallas as pl
from jax.experimental.pallas import tpu as pltpu


def _round_up(n, m):
    return ((n + m - 1) // m) * m


# ----------------------------------------------------------------------------
# Fused kernel factory: all LSTM layers + final Linear, one grid axis = time
# chunks ("arbitrary"), h/c carried across chunks in VMEM scratch.
# ----------------------------------------------------------------------------
def _make_fused_rnn_kernel(num_layers, t_blk, b_pad, h_pad, matmul_dtype):
    L, TB, Bp, Hp = num_layers, t_blk, b_pad, h_pad

    def kernel(*refs):
        # refs = [x2d, (w_ih_t, w_hh_t, bias) * L, fc_w_t, fc_b, out,
        #         h_scr, c_scr, seq_scr, gates_scr]
        x_ref = refs[0]
        layer_refs = refs[1:1 + 3 * L]
        fc_w_ref = refs[1 + 3 * L]
        fc_b_ref = refs[2 + 3 * L]
        out_ref = refs[3 + 3 * L]
        h_scr, c_scr, seq_scr, gates_scr = refs[4 + 3 * L:]

        tc = pl.program_id(0)

        @pl.when(tc == 0)
        def _init():
            h_scr[...] = jnp.zeros_like(h_scr)
            c_scr[...] = jnp.zeros_like(c_scr)

        h_last = None
        for layer in range(L):
            w_ih_ref = layer_refs[3 * layer + 0]
            w_hh_ref = layer_refs[3 * layer + 1]
            b_ref = layer_refs[3 * layer + 2]

            # (1) Hoisted input projection for the whole chunk, staged into a
            #     VMEM scratch ref (bias folded in).  Only h @ W_hh +
            #     elementwise math remains on the serial per-step path.
            x_all = x_ref[...] if layer == 0 else seq_scr[...]
            gates_scr[...] = (
                jnp.dot(x_all.astype(matmul_dtype), w_ih_ref[...],
                        preferred_element_type=jnp.float32)
                + b_ref[...])

            write_seq = (layer + 1) < L

            # (2) Serial recurrence over the chunk (moderately unrolled).
            def step(t, carry, w_hh_ref=w_hh_ref, write_seq=write_seq):
                h, c = carry
                row = pl.multiple_of(t * Bp, 8)
                gates = gates_scr[pl.ds(row, Bp), :] + jnp.dot(
                    h.astype(matmul_dtype), w_hh_ref[...],
                    preferred_element_type=jnp.float32)        # (Bp, 4Hp) f32
                # Gate order repacked to [i, f, o, g]: one sigmoid over a
                # contiguous 3Hp slab + one tanh over Hp.
                sig = jax.nn.sigmoid(gates[:, :3 * Hp])
                g_g = jnp.tanh(gates[:, 3 * Hp:])
                i_g = sig[:, 0 * Hp:1 * Hp]
                f_g = sig[:, 1 * Hp:2 * Hp]
                o_g = sig[:, 2 * Hp:3 * Hp]
                c = f_g * c + i_g * g_g
                h = o_g * jnp.tanh(c)
                if write_seq:                     # stage next layer's input
                    seq_scr[pl.ds(row, Bp), :] = h
                return h, c

            h_last, c_last = lax.fori_loop(
                0, TB, step, (h_scr[layer], c_scr[layer]),
                unroll=min(TB, 8))
            h_scr[layer] = h_last
            c_scr[layer] = c_last

        # (3) Fused final Linear on the last-layer hidden state, written only
        #     on the last time chunk (lane-dense padded output block).
        @pl.when(tc == pl.num_programs(0) - 1)
        def _finalize():
            out_ref[...] = (
                jnp.dot(h_last.astype(matmul_dtype), fc_w_ref[...],
                        preferred_element_type=jnp.float32)
                + fc_b_ref[...]).astype(out_ref.dtype)

    return kernel


# ----------------------------------------------------------------------------
# Wrapper
# ----------------------------------------------------------------------------
@functools.partial(jax.jit, static_argnames=("num_classes", "time_block"))
def rnn_forward(x, packed, num_classes, time_block=16):
    """Equivalent of RNN.forward.  x: (B, S, input_size), batch-first."""
    B, S, D = x.shape
    num_layers = len(packed["lstm"])
    Hp = packed["lstm"][0]["w_hh_t"].shape[0]
    Dp = packed["lstm"][0]["w_ih_t"].shape[0]
    Cp = packed["fc_w_t"].shape[1]
    matmul_dtype = packed["lstm"][0]["w_hh_t"].dtype
    Bp = _round_up(max(B, 1), 8)

    # Time-chunk size: largest divisor of S not exceeding time_block (time
    # padding would change the "last timestep", so chunk must divide S).
    tb = max(d for d in range(1, min(time_block, S) + 1) if S % d == 0)
    n_chunks = S // tb

    # Layout glue (outside the kernel, free): batch-first -> time-major, pad
    # batch/feature, flatten time into sublane rows (row t*Bp + b == (t, b)).
    xt = jnp.transpose(x, (1, 0, 2)).astype(jnp.float32)       # (S, B, D)
    xt = jnp.pad(xt, ((0, 0), (0, Bp - B), (0, Dp - D)))
    x2d = xt.reshape(S * Bp, Dp)

    args = [x2d]
    in_specs = [pl.BlockSpec((tb * Bp, Dp), lambda t: (t, 0))]  # pipelined
    for layer, lp in enumerate(packed["lstm"]):
        in_dim_p = Dp if layer == 0 else Hp
        args += [lp["w_ih_t"], lp["w_hh_t"], lp["bias"]]
        in_specs += [
            pl.BlockSpec((in_dim_p, 4 * Hp), lambda t: (0, 0)),  # resident
            pl.BlockSpec((Hp, 4 * Hp), lambda t: (0, 0)),        # resident
            pl.BlockSpec((1, 4 * Hp), lambda t: (0, 0)),
        ]
    args += [packed["fc_w_t"], packed["fc_b"]]
    in_specs += [pl.BlockSpec((Hp, Cp), lambda t: (0, 0)),
                 pl.BlockSpec((1, Cp), lambda t: (0, 0))]

    scratch_shapes = [
        pltpu.VMEM((num_layers, Bp, Hp), jnp.float32),   # h carry per layer
        pltpu.VMEM((num_layers, Bp, Hp), jnp.float32),   # c carry per layer
        pltpu.VMEM((tb * Bp, Hp), jnp.float32),          # inter-layer acts
        pltpu.VMEM((tb * Bp, 4 * Hp), jnp.float32),      # staged gate pre-acts
    ]

    # VMEM budget: resident weights + double-buffered x chunk + scratch.
    w_item = jnp.dtype(matmul_dtype).itemsize
    total = 2 * tb * Bp * Dp * 4
    for layer in range(num_layers):
        in_dim_p = Dp if layer == 0 else Hp
        total += (in_dim_p + Hp) * 4 * Hp * w_item + 4 * Hp * 4
    total += Hp * Cp * w_item + Cp * 4
    total += 2 * Bp * Cp * 4
    total += (2 * num_layers * Bp * Hp + tb * Bp * Hp + tb * Bp * 4 * Hp) * 4
    vmem_limit = int(min(max(2 * total + (8 << 20), 32 << 20), 56 << 20))

    kernel = _make_fused_rnn_kernel(num_layers, tb, Bp, Hp, matmul_dtype)

    out = pl.pallas_call(
        kernel,
        out_shape=jax.ShapeDtypeStruct((Bp, Cp), jnp.float32),
        grid_spec=pltpu.PrefetchScalarGridSpec(
            num_scalar_prefetch=0,
            grid=(n_chunks,),
            in_specs=in_specs,
            out_specs=pl.BlockSpec((Bp, Cp), lambda t: (0, 0)),
            scratch_shapes=scratch_shapes),
        compiler_params=pltpu.CompilerParams(
            dimension_semantics=("arbitrary",),
            vmem_limit_bytes=vmem_limit),
    )(*args)
    return out[:B, :num_classes]


# ----------------------------------------------------------------------------
# Parameter init (PyTorch layout) and kernel-layout packing
# ----------------------------------------------------------------------------
def init_params(key, input_size, hidden_size, num_layers, num_classes):
    """PyTorch-style uniform(-1/sqrt(H), 1/sqrt(H)), PyTorch layouts."""
    k = 1.0 / float(hidden_size) ** 0.5
    params = {"lstm": []}
    for layer in range(num_layers):
        in_dim = input_size if layer == 0 else hidden_size
        key, k1, k2, k3, k4 = jax.random.split(key, 5)
        params["lstm"].append(dict(
            w_ih=jax.random.uniform(k1, (4 * hidden_size, in_dim), jnp.float32, -k, k),
            w_hh=jax.random.uniform(k2, (4 * hidden_size, hidden_size), jnp.float32, -k, k),
            b_ih=jax.random.uniform(k3, (4 * hidden_size,), jnp.float32, -k, k),
            b_hh=jax.random.uniform(k4, (4 * hidden_size,), jnp.float32, -k, k),
        ))
    key, k5, k6 = jax.random.split(key, 3)
    params["fc_w"] = jax.random.uniform(k5, (num_classes, hidden_size), jnp.float32, -k, k)
    params["fc_b"] = jax.random.uniform(k6, (num_classes,), jnp.float32, -k, k)
    return params


def pack_params(params, input_size, hidden_size, num_classes,
                matmul_dtype=jnp.bfloat16):
    """PyTorch-layout params -> kernel layout.

    Gate order [i,f,g,o] -> [i,f,o,g]; weights transposed and zero-padded
    per gate to tile multiples (H->Hp=mult of 128, in_dim->Dp/Hp, C->Cp);
    the two LSTM biases folded; matmul operands stored in `matmul_dtype`.
    Zero padding preserves semantics: padded hidden units have zero weights
    and bias, so g=tanh(0)=0 keeps their c and h exactly 0 forever.
    """
    H = hidden_size
    Hp = _round_up(H, 128)
    Dp = _round_up(input_size, 128)
    Cp = _round_up(num_classes, 128)
    perm = (0, 1, 3, 2)   # [i, f, g, o] -> [i, f, o, g]

    packed = {"lstm": []}
    for layer, lp in enumerate(params["lstm"]):
        in_dim = input_size if layer == 0 else H
        in_dim_p = Dp if layer == 0 else Hp
        bias = lp["b_ih"] + lp["b_hh"]
        w_ih_t = jnp.zeros((in_dim_p, 4 * Hp), jnp.float32)
        w_hh_t = jnp.zeros((Hp, 4 * Hp), jnp.float32)
        b_pad = jnp.zeros((1, 4 * Hp), jnp.float32)
        for dst, src in enumerate(perm):
            w_ih_t = w_ih_t.at[:in_dim, dst * Hp:dst * Hp + H].set(
                lp["w_ih"][src * H:(src + 1) * H, :].T)
            w_hh_t = w_hh_t.at[:H, dst * Hp:dst * Hp + H].set(
                lp["w_hh"][src * H:(src + 1) * H, :].T)
            b_pad = b_pad.at[0, dst * Hp:dst * Hp + H].set(
                bias[src * H:(src + 1) * H])
        packed["lstm"].append(dict(
            w_ih_t=w_ih_t.astype(matmul_dtype),
            w_hh_t=w_hh_t.astype(matmul_dtype),
            bias=b_pad))
    fc_w_t = jnp.zeros((Hp, Cp), jnp.float32).at[:H, :num_classes].set(
        params["fc_w"].T)
    fc_b = jnp.zeros((1, Cp), jnp.float32).at[0, :num_classes].set(
        params["fc_b"])
    packed["fc_w_t"] = fc_w_t.astype(matmul_dtype)
    packed["fc_b"] = fc_b
    return packed


# ----------------------------------------------------------------------------
# Pure-JAX f32 reference (correctness check)
# ----------------------------------------------------------------------------
def rnn_reference(x, params):
    seq = jnp.transpose(x, (1, 0, 2)).astype(jnp.float32)    # (S, B, D)
    B = x.shape[0]
    for lp in params["lstm"]:
        H = lp["w_hh"].shape[1]
        w_ih_t, w_hh_t = lp["w_ih"].T, lp["w_hh"].T
        bias = (lp["b_ih"] + lp["b_hh"])[None, :]

        def step(carry, x_t, w_ih_t=w_ih_t, w_hh_t=w_hh_t, bias=bias, H=H):
            h, c = carry
            gates = x_t @ w_ih_t + h @ w_hh_t + bias
            i = jax.nn.sigmoid(gates[:, 0 * H:1 * H])
            f = jax.nn.sigmoid(gates[:, 1 * H:2 * H])
            g = jnp.tanh(gates[:, 2 * H:3 * H])
            o = jax.nn.sigmoid(gates[:, 3 * H:4 * H])
            c = f * c + i * g
            h = o * jnp.tanh(c)
            return (h, c), h

        init = (jnp.zeros((B, H), jnp.float32), jnp.zeros((B, H), jnp.float32))
        _, seq = lax.scan(step, init, seq)
    return seq[-1] @ params["fc_w"].T + params["fc_b"][None, :]


# ----------------------------------------------------------------------------
if __name__ == "__main__":
    input_size, hidden_size, num_layers, num_classes = 16, 32, 2, 10
    batch, seq_len = 2, 8

    key = jax.random.PRNGKey(0)
    key, xkey = jax.random.split(key)
    x = jax.random.normal(xkey, (batch, seq_len, input_size), jnp.float32)
    params = init_params(key, input_size, hidden_size, num_layers, num_classes)

    ref = rnn_reference(x, params)

    # (a) f32 matmul operands: tight check of the kernel semantics
    #     (padding / gate reorder / chunked recurrence are exact at f32).
    packed_f32 = pack_params(params, input_size, hidden_size, num_classes,
                             matmul_dtype=jnp.float32)
    out_f32 = jax.block_until_ready(
        rnn_forward(x, packed_f32, num_classes=num_classes, time_block=4))
    assert out_f32.shape == (batch, num_classes)
    assert jnp.allclose(out_f32, ref, atol=2e-4, rtol=2e-4), (out_f32, ref)

    # (b) bf16 matmul operands (the production path): looser tolerance since
    #     bf16 rounding compounds through the recurrence.
    packed_bf16 = pack_params(params, input_size, hidden_size, num_classes,
                              matmul_dtype=jnp.bfloat16)
    out_bf16 = jax.block_until_ready(
        rnn_forward(x, packed_bf16, num_classes=num_classes, time_block=4))
    assert out_bf16.shape == (batch, num_classes)
    assert jnp.allclose(out_bf16, ref, atol=3e-2, rtol=3e-2), (out_bf16, ref)

    print("KERNEL_OK")
</pallas_src>

<mosaic_0001>
module attributes {stable_mosaic.version = 11 : i64} {
  func.func @kernel(%arg0: i32, %arg1: memref<32x128xf32, #tpu.memory_space<vmem>>, %arg2: memref<128x512xf32, #tpu.memory_space<vmem>>, %arg3: memref<128x512xf32, #tpu.memory_space<vmem>>, %arg4: memref<1x512xf32, #tpu.memory_space<vmem>>, %arg5: memref<128x512xf32, #tpu.memory_space<vmem>>, %arg6: memref<128x512xf32, #tpu.memory_space<vmem>>, %arg7: memref<1x512xf32, #tpu.memory_space<vmem>>, %arg8: memref<128x128xf32, #tpu.memory_space<vmem>>, %arg9: memref<1x128xf32, #tpu.memory_space<vmem>>, %arg10: memref<8x128xf32, #tpu.memory_space<vmem>>, %arg11: memref<2x8x128xf32, #tpu.memory_space<vmem>>, %arg12: memref<2x8x128xf32, #tpu.memory_space<vmem>>, %arg13: memref<32x128xf32, #tpu.memory_space<vmem>>, %arg14: memref<32x512xf32, #tpu.memory_space<vmem>>) attributes {dimension_semantics = [#tpu.dimension_semantics<arbitrary>], iteration_bounds = array<i64: 2>, scalar_prefetch = 0 : i64, scratch_operands = 4 : i64, tpu.core_type = #tpu.core_type<tc>, window_params = [{transform_indices = @transform_0, window_bounds = array<i64: 32, 128>}, {pipeline_mode = #tpu.pipeline_mode<synchronous>, transform_indices = @transform_1, window_bounds = array<i64: 128, 512>}, {pipeline_mode = #tpu.pipeline_mode<synchronous>, transform_indices = @transform_2, window_bounds = array<i64: 128, 512>}, {pipeline_mode = #tpu.pipeline_mode<synchronous>, transform_indices = @transform_3, window_bounds = array<i64: 1, 512>}, {pipeline_mode = #tpu.pipeline_mode<synchronous>, transform_indices = @transform_4, window_bounds = array<i64: 128, 512>}, {pipeline_mode = #tpu.pipeline_mode<synchronous>, transform_indices = @transform_5, window_bounds = array<i64: 128, 512>}, {pipeline_mode = #tpu.pipeline_mode<synchronous>, transform_indices = @transform_6, window_bounds = array<i64: 1, 512>}, {pipeline_mode = #tpu.pipeline_mode<synchronous>, transform_indices = @transform_7, window_bounds = array<i64: 128, 128>}, {pipeline_mode = #tpu.pipeline_mode<synchronous>, transform_indices = @transform_8, window_bounds = array<i64: 1, 128>}, {pipeline_mode = #tpu.pipeline_mode<synchronous>, transform_indices = @transform_9, window_bounds = array<i64: 8, 128>}]} {
    %c0_i32 = arith.constant 0 : i32
    %0 = arith.cmpi eq, %arg0, %c0_i32 : i32
    %1 = arith.extui %0 : i1 to i32
    %c0_i32_0 = arith.constant 0 : i32
    %2 = arith.cmpi ne, %1, %c0_i32_0 : i32
    scf.if %2 {
      %cst_99 = arith.constant 0.000000e+00 : f32
      %232 = vector.broadcast %cst_99 : f32 to vector<2x8x128xf32>
      %c0_100 = arith.constant 0 : index
      %c0_101 = arith.constant 0 : index
      %c0_102 = arith.constant 0 : index
      %233 = vector.load %arg11[%c0_100, %c0_101, %c0_102] : memref<2x8x128xf32, #tpu.memory_space<vmem>>, vector<2x8x128xf32>
      tpu.vector_store %arg11[%c0_100, %c0_101, %c0_102], %232 {strides = array<i32>} : memref<2x8x128xf32, #tpu.memory_space<vmem>>, vector<2x8x128xf32>,
      %cst_103 = arith.constant 0.000000e+00 : f32
      %234 = vector.broadcast %cst_103 : f32 to vector<2x8x128xf32>
      %c0_104 = arith.constant 0 : index
      %c0_105 = arith.constant 0 : index
      %c0_106 = arith.constant 0 : index
      %235 = vector.load %arg12[%c0_104, %c0_105, %c0_106] : memref<2x8x128xf32, #tpu.memory_space<vmem>>, vector<2x8x128xf32>
      tpu.vector_store %arg12[%c0_104, %c0_105, %c0_106], %234 {strides = array<i32>} : memref<2x8x128xf32, #tpu.memory_space<vmem>>, vector<2x8x128xf32>,
    } else {
    }
    %c0 = arith.constant 0 : index
    %c0_1 = arith.constant 0 : index
    %3 = vector.load %arg1[%c0, %c0_1] : memref<32x128xf32, #tpu.memory_space<vmem>>, vector<32x128xf32>
    %c0_2 = arith.constant 0 : index
    %c0_3 = arith.constant 0 : index
    %4 = vector.load %arg2[%c0_2, %c0_3] : memref<128x512xf32, #tpu.memory_space<vmem>>, vector<128x512xf32>
    %cst = arith.constant dense<0.000000e+00> : vector<32x512xf32>
    %5 = tpu.matmul %3, %4, %cst {dimension_numbers = #tpu.dot_dimension_numbers<[1], [0], [0], [1], [0, 0, 1, 1], [], []>} : vector<32x128xf32>, vector<128x512xf32>, vector<32x512xf32> -> vector<32x512xf32>
    %c0_4 = arith.constant 0 : index
    %c0_5 = arith.constant 0 : index
    %6 = vector.load %arg4[%c0_4, %c0_5] : memref<1x512xf32, #tpu.memory_space<vmem>>, vector<1x512xf32>
    %7 = vector.broadcast %6 : vector<1x512xf32> to vector<32x512xf32>
    %8 = arith.addf %5, %7 : vector<32x512xf32>
    %c0_6 = arith.constant 0 : index
    %c0_7 = arith.constant 0 : index
    %9 = vector.load %arg14[%c0_6, %c0_7] : memref<32x512xf32, #tpu.memory_space<vmem>>, vector<32x512xf32>
    tpu.vector_store %arg14[%c0_6, %c0_7], %8 {strides = array<i32>} : memref<32x512xf32, #tpu.memory_space<vmem>>, vector<32x512xf32>,
    %c0_8 = arith.constant 0 : index
    %c0_9 = arith.constant 0 : index
    %c0_10 = arith.constant 0 : index
    %10 = vector.load %arg11[%c0_8, %c0_9, %c0_10] : memref<2x8x128xf32, #tpu.memory_space<vmem>>, vector<1x8x128xf32>
    %11 = vector.shape_cast %10 : vector<1x8x128xf32> to vector<8x128xf32>
    %c0_11 = arith.constant 0 : index
    %c0_12 = arith.constant 0 : index
    %c0_13 = arith.constant 0 : index
    %12 = vector.load %arg12[%c0_11, %c0_12, %c0_13] : memref<2x8x128xf32, #tpu.memory_space<vmem>>, vector<1x8x128xf32>
    %13 = vector.shape_cast %12 : vector<1x8x128xf32> to vector<8x128xf32>
    %c0_i32_14 = arith.constant 0 : i32
    %c8_i32 = arith.constant 8 : i32
    %14 = arith.muli %c0_i32_14, %c8_i32 : i32
    %15 = tpu.assume_multiple %14, 8 : i32
    %16 = arith.index_cast %15 : i32 to index
    %c0_15 = arith.constant 0 : index
    %17 = vector.load %arg14[%16, %c0_15] : memref<32x512xf32, #tpu.memory_space<vmem>>, vector<8x512xf32>
    %c0_16 = arith.constant 0 : index
    %c0_17 = arith.constant 0 : index
    %18 = vector.load %arg3[%c0_16, %c0_17] : memref<128x512xf32, #tpu.memory_space<vmem>>, vector<128x512xf32>
    %cst_18 = arith.constant dense<0.000000e+00> : vector<8x512xf32>
    %19 = tpu.matmul %11, %18, %cst_18 {dimension_numbers = #tpu.dot_dimension_numbers<[1], [0], [0], [1], [0, 0, 1, 1], [], []>} : vector<8x128xf32>, vector<128x512xf32>, vector<8x512xf32> -> vector<8x512xf32>
    %20 = arith.addf %17, %19 : vector<8x512xf32>
    %21 = vector.extract_strided_slice %20 {offsets = [0, 0], sizes = [8, 384], strides = [1, 1]} : vector<8x512xf32> to vector<8x384xf32>
    %22 = arith.negf %21 : vector<8x384xf32>
    %23 = math.exp %22 : vector<8x384xf32>
    %cst_19 = arith.constant 1.000000e+00 : f32
    %24 = vector.broadcast %cst_19 : f32 to vector<8x384xf32>
    %25 = arith.addf %24, %23 : vector<8x384xf32>
    %26 = arith.divf %24, %25 : vector<8x384xf32>
    %27 = vector.extract_strided_slice %20 {offsets = [0, 384], sizes = [8, 128], strides = [1, 1]} : vector<8x512xf32> to vector<8x128xf32>
    %28 = math.tanh %27 : vector<8x128xf32>
    %29 = vector.extract_strided_slice %26 {offsets = [0, 0], sizes = [8, 128], strides = [1, 1]} : vector<8x384xf32> to vector<8x128xf32>
    %30 = vector.extract_strided_slice %26 {offsets = [0, 128], sizes = [8, 128], strides = [1, 1]} : vector<8x384xf32> to vector<8x128xf32>
    %31 = vector.extract_strided_slice %26 {offsets = [0, 256], sizes = [8, 128], strides = [1, 1]} : vector<8x384xf32> to vector<8x128xf32>
    %32 = arith.mulf %30, %13 : vector<8x128xf32>
    %33 = arith.mulf %29, %28 : vector<8x128xf32>
    %34 = arith.addf %32, %33 : vector<8x128xf32>
    %35 = math.tanh %34 : vector<8x128xf32>
    %36 = arith.mulf %31, %35 : vector<8x128xf32>
    %37 = arith.index_cast %15 : i32 to index
    %c0_20 = arith.constant 0 : index
    %38 = vector.load %arg13[%37, %c0_20] : memref<32x128xf32, #tpu.memory_space<vmem>>, vector<8x128xf32>
    tpu.vector_store %arg13[%37, %c0_20], %36 {strides = array<i32>} : memref<32x128xf32, #tpu.memory_space<vmem>>, vector<8x128xf32>,
    %c1_i32 = arith.constant 1 : i32
    %c8_i32_21 = arith.constant 8 : i32
    %39 = arith.muli %c1_i32, %c8_i32_21 : i32
    %40 = tpu.assume_multiple %39, 8 : i32
    %41 = arith.index_cast %40 : i32 to index
    %c0_22 = arith.constant 0 : index
    %42 = vector.load %arg14[%41, %c0_22] : memref<32x512xf32, #tpu.memory_space<vmem>>, vector<8x512xf32>
    %c0_23 = arith.constant 0 : index
    %c0_24 = arith.constant 0 : index
    %43 = vector.load %arg3[%c0_23, %c0_24] : memref<128x512xf32, #tpu.memory_space<vmem>>, vector<128x512xf32>
    %cst_25 = arith.constant dense<0.000000e+00> : vector<8x512xf32>
    %44 = tpu.matmul %36, %43, %cst_25 {dimension_numbers = #tpu.dot_dimension_numbers<[1], [0], [0], [1], [0, 0, 1, 1], [], []>} : vector<8x128xf32>, vector<128x512xf32>, vector<8x512xf32> -> vector<8x512xf32>
    %45 = arith.addf %42, %44 : vector<8x512xf32>
    %46 = vector.extract_strided_slice %45 {offsets = [0, 0], sizes = [8, 384], strides = [1, 1]} : vector<8x512xf32> to vector<8x384xf32>
    %47 = arith.negf %46 : vector<8x384xf32>
    %48 = math.exp %47 : vector<8x384xf32>
    %cst_26 = arith.constant 1.000000e+00 : f32
    %49 = vector.broadcast %cst_26 : f32 to vector<8x384xf32>
    %50 = arith.addf %49, %48 : vector<8x384xf32>
    %51 = arith.divf %49, %50 : vector<8x384xf32>
    %52 = vector.extract_strided_slice %45 {offsets = [0, 384], sizes = [8, 128], strides = [1, 1]} : vector<8x512xf32> to vector<8x128xf32>
    %53 = math.tanh %52 : vector<8x128xf32>
    %54 = vector.extract_strided_slice %51 {offsets = [0, 0], sizes = [8, 128], strides = [1, 1]} : vector<8x384xf32> to vector<8x128xf32>
    %55 = vector.extract_strided_slice %51 {offsets = [0, 128], sizes = [8, 128], strides = [1, 1]} : vector<8x384xf32> to vector<8x128xf32>
    %56 = vector.extract_strided_slice %51 {offsets = [0, 256], sizes = [8, 128], strides = [1, 1]} : vector<8x384xf32> to vector<8x128xf32>
    %57 = arith.mulf %55, %34 : vector<8x128xf32>
    %58 = arith.mulf %54, %53 : vector<8x128xf32>
    %59 = arith.addf %57, %58 : vector<8x128xf32>
    %60 = math.tanh %59 : vector<8x128xf32>
    %61 = arith.mulf %56, %60 : vector<8x128xf32>
    %62 = arith.index_cast %40 : i32 to index
    %c0_27 = arith.constant 0 : index
    %63 = vector.load %arg13[%62, %c0_27] : memref<32x128xf32, #tpu.memory_space<vmem>>, vector<8x128xf32>
    tpu.vector_store %arg13[%62, %c0_27], %61 {strides = array<i32>} : memref<32x128xf32, #tpu.memory_space<vmem>>, vector<8x128xf32>,
    %c2_i32 = arith.constant 2 : i32
    %c8_i32_28 = arith.constant 8 : i32
    %64 = arith.muli %c2_i32, %c8_i32_28 : i32
    %65 = tpu.assume_multiple %64, 8 : i32
    %66 = arith.index_cast %65 : i32 to index
    %c0_29 = arith.constant 0 : index
    %67 = vector.load %arg14[%66, %c0_29] : memref<32x512xf32, #tpu.memory_space<vmem>>, vector<8x512xf32>
    %c0_30 = arith.constant 0 : index
    %c0_31 = arith.constant 0 : index
    %68 = vector.load %arg3[%c0_30, %c0_31] : memref<128x512xf32, #tpu.memory_space<vmem>>, vector<128x512xf32>
    %cst_32 = arith.constant dense<0.000000e+00> : vector<8x512xf32>
    %69 = tpu.matmul %61, %68, %cst_32 {dimension_numbers = #tpu.dot_dimension_numbers<[1], [0], [0], [1], [0, 0, 1, 1], [], []>} : vector<8x128xf32>, vector<128x512xf32>, vector<8x512xf32> -> vector<8x512xf32>
    %70 = arith.addf %67, %69 : vector<8x512xf32>
    %71 = vector.extract_strided_slice %70 {offsets = [0, 0], sizes = [8, 384], strides = [1, 1]} : vector<8x512xf32> to vector<8x384xf32>
    %72 = arith.negf %71 : vector<8x384xf32>
    %73 = math.exp %72 : vector<8x384xf32>
    %cst_33 = arith.constant 1.000000e+00 : f32
    %74 = vector.broadcast %cst_33 : f32 to vector<8x384xf32>
    %75 = arith.addf %74, %73 : vector<8x384xf32>
    %76 = arith.divf %74, %75 : vector<8x384xf32>
    %77 = vector.extract_strided_slice %70 {offsets = [0, 384], sizes = [8, 128], strides = [1, 1]} : vector<8x512xf32> to vector<8x128xf32>
    %78 = math.tanh %77 : vector<8x128xf32>
    %79 = vector.extract_strided_slice %76 {offsets = [0, 0], sizes = [8, 128], strides = [1, 1]} : vector<8x384xf32> to vector<8x128xf32>
    %80 = vector.extract_strided_slice %76 {offsets = [0, 128], sizes = [8, 128], strides = [1, 1]} : vector<8x384xf32> to vector<8x128xf32>
    %81 = vector.extract_strided_slice %76 {offsets = [0, 256], sizes = [8, 128], strides = [1, 1]} : vector<8x384xf32> to vector<8x128xf32>
    %82 = arith.mulf %80, %59 : vector<8x128xf32>
    %83 = arith.mulf %79, %78 : vector<8x128xf32>
    %84 = arith.addf %82, %83 : vector<8x128xf32>
    %85 = math.tanh %84 : vector<8x128xf32>
    %86 = arith.mulf %81, %85 : vector<8x128xf32>
    %87 = arith.index_cast %65 : i32 to index
    %c0_34 = arith.constant 0 : index
    %88 = vector.load %arg13[%87, %c0_34] : memref<32x128xf32, #tpu.memory_space<vmem>>, vector<8x128xf32>
    tpu.vector_store %arg13[%87, %c0_34], %86 {strides = array<i32>} : memref<32x128xf32, #tpu.memory_space<vmem>>, vector<8x128xf32>,
    %c3_i32 = arith.constant 3 : i32
    %c8_i32_35 = arith.constant 8 : i32
    %89 = arith.muli %c3_i32, %c8_i32_35 : i32
    %90 = tpu.assume_multiple %89, 8 : i32
    %91 = arith.index_cast %90 : i32 to index
    %c0_36 = arith.constant 0 : index
    %92 = vector.load %arg14[%91, %c0_36] : memref<32x512xf32, #tpu.memory_space<vmem>>, vector<8x512xf32>
    %c0_37 = arith.constant 0 : index
    %c0_38 = arith.constant 0 : index
    %93 = vector.load %arg3[%c0_37, %c0_38] : memref<128x512xf32, #tpu.memory_space<vmem>>, vector<128x512xf32>
    %cst_39 = arith.constant dense<0.000000e+00> : vector<8x512xf32>
    %94 = tpu.matmul %86, %93, %cst_39 {dimension_numbers = #tpu.dot_dimension_numbers<[1], [0], [0], [1], [0, 0, 1, 1], [], []>} : vector<8x128xf32>, vector<128x512xf32>, vector<8x512xf32> -> vector<8x512xf32>
    %95 = arith.addf %92, %94 : vector<8x512xf32>
    %96 = vector.extract_strided_slice %95 {offsets = [0, 0], sizes = [8, 384], strides = [1, 1]} : vector<8x512xf32> to vector<8x384xf32>
    %97 = arith.negf %96 : vector<8x384xf32>
    %98 = math.exp %97 : vector<8x384xf32>
    %cst_40 = arith.constant 1.000000e+00 : f32
    %99 = vector.broadcast %cst_40 : f32 to vector<8x384xf32>
    %100 = arith.addf %99, %98 : vector<8x384xf32>
    %101 = arith.divf %99, %100 : vector<8x384xf32>
    %102 = vector.extract_strided_slice %95 {offsets = [0, 384], sizes = [8, 128], strides = [1, 1]} : vector<8x512xf32> to vector<8x128xf32>
    %103 = math.tanh %102 : vector<8x128xf32>
    %104 = vector.extract_strided_slice %101 {offsets = [0, 0], sizes = [8, 128], strides = [1, 1]} : vector<8x384xf32> to vector<8x128xf32>
    %105 = vector.extract_strided_slice %101 {offsets = [0, 128], sizes = [8, 128], strides = [1, 1]} : vector<8x384xf32> to vector<8x128xf32>
    %106 = vector.extract_strided_slice %101 {offsets = [0, 256], sizes = [8, 128], strides = [1, 1]} : vector<8x384xf32> to vector<8x128xf32>
    %107 = arith.mulf %105, %84 : vector<8x128xf32>
    %108 = arith.mulf %104, %103 : vector<8x128xf32>
    %109 = arith.addf %107, %108 : vector<8x128xf32>
    %110 = math.tanh %109 : vector<8x128xf32>
    %111 = arith.mulf %106, %110 : vector<8x128xf32>
    %112 = arith.index_cast %90 : i32 to index
    %c0_41 = arith.constant 0 : index
    %113 = vector.load %arg13[%112, %c0_41] : memref<32x128xf32, #tpu.memory_space<vmem>>, vector<8x128xf32>
    tpu.vector_store %arg13[%112, %c0_41], %111 {strides = array<i32>} : memref<32x128xf32, #tpu.memory_space<vmem>>, vector<8x128xf32>,
    %c4_i32 = arith.constant 4 : i32
    %c0_42 = arith.constant 0 : index
    %c0_43 = arith.constant 0 : index
    %c0_44 = arith.constant 0 : index
    %114 = vector.load %arg11[%c0_42, %c0_43, %c0_44] : memref<2x8x128xf32, #tpu.memory_space<vmem>>, vector<1x8x128xf32>
    %115 = vector.shape_cast %114 : vector<1x8x128xf32> to vector<8x128xf32>
    %116 = vector.shape_cast %111 : vector<8x128xf32> to vector<1x8x128xf32>
    tpu.vector_store %arg11[%c0_42, %c0_43, %c0_44], %116 {strides = array<i32>} : memref<2x8x128xf32, #tpu.memory_space<vmem>>, vector<1x8x128xf32>,
    %c0_45 = arith.constant 0 : index
    %c0_46 = arith.constant 0 : index
    %c0_47 = arith.constant 0 : index
    %117 = vector.load %arg12[%c0_45, %c0_46, %c0_47] : memref<2x8x128xf32, #tpu.memory_space<vmem>>, vector<1x8x128xf32>
    %118 = vector.shape_cast %117 : vector<1x8x128xf32> to vector<8x128xf32>
    %119 = vector.shape_cast %109 : vector<8x128xf32> to vector<1x8x128xf32>
    tpu.vector_store %arg12[%c0_45, %c0_46, %c0_47], %119 {strides = array<i32>} : memref<2x8x128xf32, #tpu.memory_space<vmem>>, vector<1x8x128xf32>,
    %c0_48 = arith.constant 0 : index
    %c0_49 = arith.constant 0 : index
    %120 = vector.load %arg13[%c0_48, %c0_49] : memref<32x128xf32, #tpu.memory_space<vmem>>, vector<32x128xf32>
    %c0_50 = arith.constant 0 : index
    %c0_51 = arith.constant 0 : index
    %121 = vector.load %arg5[%c0_50, %c0_51] : memref<128x512xf32, #tpu.memory_space<vmem>>, vector<128x512xf32>
    %cst_52 = arith.constant dense<0.000000e+00> : vector<32x512xf32>
    %122 = tpu.matmul %120, %121, %cst_52 {dimension_numbers = #tpu.dot_dimension_numbers<[1], [0], [0], [1], [0, 0, 1, 1], [], []>} : vector<32x128xf32>, vector<128x512xf32>, vector<32x512xf32> -> vector<32x512xf32>
    %c0_53 = arith.constant 0 : index
    %c0_54 = arith.constant 0 : index
    %123 = vector.load %arg7[%c0_53, %c0_54] : memref<1x512xf32, #tpu.memory_space<vmem>>, vector<1x512xf32>
    %124 = vector.broadcast %123 : vector<1x512xf32> to vector<32x512xf32>
    %125 = arith.addf %122, %124 : vector<32x512xf32>
    %c0_55 = arith.constant 0 : index
    %c0_56 = arith.constant 0 : index
    %126 = vector.load %arg14[%c0_55, %c0_56] : memref<32x512xf32, #tpu.memory_space<vmem>>, vector<32x512xf32>
    tpu.vector_store %arg14[%c0_55, %c0_56], %125 {strides = array<i32>} : memref<32x512xf32, #tpu.memory_space<vmem>>, vector<32x512xf32>,
    %c1 = arith.constant 1 : index
    %c0_57 = arith.constant 0 : index
    %c0_58 = arith.constant 0 : index
    %127 = vector.load %arg11[%c1, %c0_57, %c0_58] : memref<2x8x128xf32, #tpu.memory_space<vmem>>, vector<1x8x128xf32>
    %128 = vector.shape_cast %127 : vector<1x8x128xf32> to vector<8x128xf32>
    %c1_59 = arith.constant 1 : index
    %c0_60 = arith.constant 0 : index
    %c0_61 = arith.constant 0 : index
    %129 = vector.load %arg12[%c1_59, %c0_60, %c0_61] : memref<2x8x128xf32, #tpu.memory_space<vmem>>, vector<1x8x128xf32>
    %130 = vector.shape_cast %129 : vector<1x8x128xf32> to vector<8x128xf32>
    %c0_i32_62 = arith.constant 0 : i32
    %c8_i32_63 = arith.constant 8 : i32
    %131 = arith.muli %c0_i32_62, %c8_i32_63 : i32
    %132 = tpu.assume_multiple %131, 8 : i32
    %133 = arith.index_cast %132 : i32 to index
    %c0_64 = arith.constant 0 : index
    %134 = vector.load %arg14[%133, %c0_64] : memref<32x512xf32, #tpu.memory_space<vmem>>, vector<8x512xf32>
    %c0_65 = arith.constant 0 : index
    %c0_66 = arith.constant 0 : index
    %135 = vector.load %arg6[%c0_65, %c0_66] : memref<128x512xf32, #tpu.memory_space<vmem>>, vector<128x512xf32>
    %cst_67 = arith.constant dense<0.000000e+00> : vector<8x512xf32>
    %136 = tpu.matmul %128, %135, %cst_67 {dimension_numbers = #tpu.dot_dimension_numbers<[1], [0], [0], [1], [0, 0, 1, 1], [], []>} : vector<8x128xf32>, vector<128x512xf32>, vector<8x512xf32> -> vector<8x512xf32>
    %137 = arith.addf %134, %136 : vector<8x512xf32>
    %138 = vector.extract_strided_slice %137 {offsets = [0, 0], sizes = [8, 384], strides = [1, 1]} : vector<8x512xf32> to vector<8x384xf32>
    %139 = arith.negf %138 : vector<8x384xf32>
    %140 = math.exp %139 : vector<8x384xf32>
    %cst_68 = arith.constant 1.000000e+00 : f32
    %141 = vector.broadcast %cst_68 : f32 to vector<8x384xf32>
    %142 = arith.addf %141, %140 : vector<8x384xf32>
    %143 = arith.divf %141, %142 : vector<8x384xf32>
    %144 = vector.extract_strided_slice %137 {offsets = [0, 384], sizes = [8, 128], strides = [1, 1]} : vector<8x512xf32> to vector<8x128xf32>
    %145 = math.tanh %144 : vector<8x128xf32>
    %146 = vector.extract_strided_slice %143 {offsets = [0, 0], sizes = [8, 128], strides = [1, 1]} : vector<8x384xf32> to vector<8x128xf32>
    %147 = vector.extract_strided_slice %143 {offsets = [0, 128], sizes = [8, 128], strides = [1, 1]} : vector<8x384xf32> to vector<8x128xf32>
    %148 = vector.extract_strided_slice %143 {offsets = [0, 256], sizes = [8, 128], strides = [1, 1]} : vector<8x384xf32> to vector<8x128xf32>
    %149 = arith.mulf %147, %130 : vector<8x128xf32>
    %150 = arith.mulf %146, %145 : vector<8x128xf32>
    %151 = arith.addf %149, %150 : vector<8x128xf32>
    %152 = math.tanh %151 : vector<8x128xf32>
    %153 = arith.mulf %148, %152 : vector<8x128xf32>
    %c1_i32_69 = arith.constant 1 : i32
    %c8_i32_70 = arith.constant 8 : i32
    %154 = arith.muli %c1_i32_69, %c8_i32_70 : i32
    %155 = tpu.assume_multiple %154, 8 : i32
    %156 = arith.index_cast %155 : i32 to index
    %c0_71 = arith.constant 0 : index
    %157 = vector.load %arg14[%156, %c0_71] : memref<32x512xf32, #tpu.memory_space<vmem>>, vector<8x512xf32>
    %c0_72 = arith.constant 0 : index
    %c0_73 = arith.constant 0 : index
    %158 = vector.load %arg6[%c0_72, %c0_73] : memref<128x512xf32, #tpu.memory_space<vmem>>, vector<128x512xf32>
    %cst_74 = arith.constant dense<0.000000e+00> : vector<8x512xf32>
    %159 = tpu.matmul %153, %158, %cst_74 {dimension_numbers = #tpu.dot_dimension_numbers<[1], [0], [0], [1], [0, 0, 1, 1], [], []>} : vector<8x128xf32>, vector<128x512xf32>, vector<8x512xf32> -> vector<8x512xf32>
    %160 = arith.addf %157, %159 : vector<8x512xf32>
    %161 = vector.extract_strided_slice %160 {offsets = [0, 0], sizes = [8, 384], strides = [1, 1]} : vector<8x512xf32> to vector<8x384xf32>
    %162 = arith.negf %161 : vector<8x384xf32>
    %163 = math.exp %162 : vector<8x384xf32>
    %cst_75 = arith.constant 1.000000e+00 : f32
    %164 = vector.broadcast %cst_75 : f32 to vector<8x384xf32>
    %165 = arith.addf %164, %163 : vector<8x384xf32>
    %166 = arith.divf %164, %165 : vector<8x384xf32>
    %167 = vector.extract_strided_slice %160 {offsets = [0, 384], sizes = [8, 128], strides = [1, 1]} : vector<8x512xf32> to vector<8x128xf32>
    %168 = math.tanh %167 : vector<8x128xf32>
    %169 = vector.extract_strided_slice %166 {offsets = [0, 0], sizes = [8, 128], strides = [1, 1]} : vector<8x384xf32> to vector<8x128xf32>
    %170 = vector.extract_strided_slice %166 {offsets = [0, 128], sizes = [8, 128], strides = [1, 1]} : vector<8x384xf32> to vector<8x128xf32>
    %171 = vector.extract_strided_slice %166 {offsets = [0, 256], sizes = [8, 128], strides = [1, 1]} : vector<8x384xf32> to vector<8x128xf32>
    %172 = arith.mulf %170, %151 : vector<8x128xf32>
    %173 = arith.mulf %169, %168 : vector<8x128xf32>
    %174 = arith.addf %172, %173 : vector<8x128xf32>
    %175 = math.tanh %174 : vector<8x128xf32>
    %176 = arith.mulf %171, %175 : vector<8x128xf32>
    %c2_i32_76 = arith.constant 2 : i32
    %c8_i32_77 = arith.constant 8 : i32
    %177 = arith.muli %c2_i32_76, %c8_i32_77 : i32
    %178 = tpu.assume_multiple %177, 8 : i32
    %179 = arith.index_cast %178 : i32 to index
    %c0_78 = arith.constant 0 : index
    %180 = vector.load %arg14[%179, %c0_78] : memref<32x512xf32, #tpu.memory_space<vmem>>, vector<8x512xf32>
    %c0_79 = arith.constant 0 : index
    %c0_80 = arith.constant 0 : index
    %181 = vector.load %arg6[%c0_79, %c0_80] : memref<128x512xf32, #tpu.memory_space<vmem>>, vector<128x512xf32>
    %cst_81 = arith.constant dense<0.000000e+00> : vector<8x512xf32>
    %182 = tpu.matmul %176, %181, %cst_81 {dimension_numbers = #tpu.dot_dimension_numbers<[1], [0], [0], [1], [0, 0, 1, 1], [], []>} : vector<8x128xf32>, vector<128x512xf32>, vector<8x512xf32> -> vector<8x512xf32>
    %183 = arith.addf %180, %182 : vector<8x512xf32>
    %184 = vector.extract_strided_slice %183 {offsets = [0, 0], sizes = [8, 384], strides = [1, 1]} : vector<8x512xf32> to vector<8x384xf32>
    %185 = arith.negf %184 : vector<8x384xf32>
    %186 = math.exp %185 : vector<8x384xf32>
    %cst_82 = arith.constant 1.000000e+00 : f32
    %187 = vector.broadcast %cst_82 : f32 to vector<8x384xf32>
    %188 = arith.addf %187, %186 : vector<8x384xf32>
    %189 = arith.divf %187, %188 : vector<8x384xf32>
    %190 = vector.extract_strided_slice %183 {offsets = [0, 384], sizes = [8, 128], strides = [1, 1]} : vector<8x512xf32> to vector<8x128xf32>
    %191 = math.tanh %190 : vector<8x128xf32>
    %192 = vector.extract_strided_slice %189 {offsets = [0, 0], sizes = [8, 128], strides = [1, 1]} : vector<8x384xf32> to vector<8x128xf32>
    %193 = vector.extract_strided_slice %189 {offsets = [0, 128], sizes = [8, 128], strides = [1, 1]} : vector<8x384xf32> to vector<8x128xf32>
    %194 = vector.extract_strided_slice %189 {offsets = [0, 256], sizes = [8, 128], strides = [1, 1]} : vector<8x384xf32> to vector<8x128xf32>
    %195 = arith.mulf %193, %174 : vector<8x128xf32>
    %196 = arith.mulf %192, %191 : vector<8x128xf32>
    %197 = arith.addf %195, %196 : vector<8x128xf32>
    %198 = math.tanh %197 : vector<8x128xf32>
    %199 = arith.mulf %194, %198 : vector<8x128xf32>
    %c3_i32_83 = arith.constant 3 : i32
    %c8_i32_84 = arith.constant 8 : i32
    %200 = arith.muli %c3_i32_83, %c8_i32_84 : i32
    %201 = tpu.assume_multiple %200, 8 : i32
    %202 = arith.index_cast %201 : i32 to index
    %c0_85 = arith.constant 0 : index
    %203 = vector.load %arg14[%202, %c0_85] : memref<32x512xf32, #tpu.memory_space<vmem>>, vector<8x512xf32>
    %c0_86 = arith.constant 0 : index
    %c0_87 = arith.constant 0 : index
    %204 = vector.load %arg6[%c0_86, %c0_87] : memref<128x512xf32, #tpu.memory_space<vmem>>, vector<128x512xf32>
    %cst_88 = arith.constant dense<0.000000e+00> : vector<8x512xf32>
    %205 = tpu.matmul %199, %204, %cst_88 {dimension_numbers = #tpu.dot_dimension_numbers<[1], [0], [0], [1], [0, 0, 1, 1], [], []>} : vector<8x128xf32>, vector<128x512xf32>, vector<8x512xf32> -> vector<8x512xf32>
    %206 = arith.addf %203, %205 : vector<8x512xf32>
    %207 = vector.extract_strided_slice %206 {offsets = [0, 0], sizes = [8, 384], strides = [1, 1]} : vector<8x512xf32> to vector<8x384xf32>
    %208 = arith.negf %207 : vector<8x384xf32>
    %209 = math.exp %208 : vector<8x384xf32>
    %cst_89 = arith.constant 1.000000e+00 : f32
    %210 = vector.broadcast %cst_89 : f32 to vector<8x384xf32>
    %211 = arith.addf %210, %209 : vector<8x384xf32>
    %212 = arith.divf %210, %211 : vector<8x384xf32>
    %213 = vector.extract_strided_slice %206 {offsets = [0, 384], sizes = [8, 128], strides = [1, 1]} : vector<8x512xf32> to vector<8x128xf32>
    %214 = math.tanh %213 : vector<8x128xf32>
    %215 = vector.extract_strided_slice %212 {offsets = [0, 0], sizes = [8, 128], strides = [1, 1]} : vector<8x384xf32> to vector<8x128xf32>
    %216 = vector.extract_strided_slice %212 {offsets = [0, 128], sizes = [8, 128], strides = [1, 1]} : vector<8x384xf32> to vector<8x128xf32>
    %217 = vector.extract_strided_slice %212 {offsets = [0, 256], sizes = [8, 128], strides = [1, 1]} : vector<8x384xf32> to vector<8x128xf32>
    %218 = arith.mulf %216, %197 : vector<8x128xf32>
    %219 = arith.mulf %215, %214 : vector<8x128xf32>
    %220 = arith.addf %218, %219 : vector<8x128xf32>
    %221 = math.tanh %220 : vector<8x128xf32>
    %222 = arith.mulf %217, %221 : vector<8x128xf32>
    %c4_i32_90 = arith.constant 4 : i32
    %c1_91 = arith.constant 1 : index
    %c0_92 = arith.constant 0 : index
    %c0_93 = arith.constant 0 : index
    %223 = vector.load %arg11[%c1_91, %c0_92, %c0_93] : memref<2x8x128xf32, #tpu.memory_space<vmem>>, vector<1x8x128xf32>
    %224 = vector.shape_cast %223 : vector<1x8x128xf32> to vector<8x128xf32>
    %225 = vector.shape_cast %222 : vector<8x128xf32> to vector<1x8x128xf32>
    tpu.vector_store %arg11[%c1_91, %c0_92, %c0_93], %225 {strides = array<i32>} : memref<2x8x128xf32, #tpu.memory_space<vmem>>, vector<1x8x128xf32>,
    %c1_94 = arith.constant 1 : index
    %c0_95 = arith.constant 0 : index
    %c0_96 = arith.constant 0 : index
    %226 = vector.load %arg12[%c1_94, %c0_95, %c0_96] : memref<2x8x128xf32, #tpu.memory_space<vmem>>, vector<1x8x128xf32>
    %227 = vector.shape_cast %226 : vector<1x8x128xf32> to vector<8x128xf32>
    %228 = vector.shape_cast %220 : vector<8x128xf32> to vector<1x8x128xf32>
    tpu.vector_store %arg12[%c1_94, %c0_95, %c0_96], %228 {strides = array<i32>} : memref<2x8x128xf32, #tpu.memory_space<vmem>>, vector<1x8x128xf32>,
    %c1_i32_97 = arith.constant 1 : i32
    %229 = arith.cmpi eq, %arg0, %c1_i32_97 : i32
    %230 = arith.extui %229 : i1 to i32
    %c0_i32_98 = arith.constant 0 : i32
    %231 = arith.cmpi ne, %230, %c0_i32_98 : i32
    scf.if %231 {
      %c0_99 = arith.constant 0 : index
      %c0_100 = arith.constant 0 : index
      %232 = vector.load %arg8[%c0_99, %c0_100] : memref<128x128xf32, #tpu.memory_space<vmem>>, vector<128x128xf32>
      %cst_101 = arith.constant dense<0.000000e+00> : vector<8x128xf32>
      %233 = tpu.matmul %222, %232, %cst_101 {dimension_numbers = #tpu.dot_dimension_numbers<[1], [0], [0], [1], [0, 0, 1, 1], [], []>} : vector<8x128xf32>, vector<128x128xf32>, vector<8x128xf32> -> vector<8x128xf32>
      %c0_102 = arith.constant 0 : index
      %c0_103 = arith.constant 0 : index
      %234 = vector.load %arg9[%c0_102, %c0_103] : memref<1x128xf32, #tpu.memory_space<vmem>>, vector<1x128xf32>
      %235 = vector.broadcast %234 : vector<1x128xf32> to vector<8x128xf32>
      %236 = arith.addf %233, %235 : vector<8x128xf32>
      %c0_104 = arith.constant 0 : index
      %c0_105 = arith.constant 0 : index
      %237 = vector.load %arg10[%c0_104, %c0_105] : memref<8x128xf32, #tpu.memory_space<vmem>>, vector<8x128xf32>
      tpu.vector_store %arg10[%c0_104, %c0_105], %236 {strides = array<i32>} : memref<8x128xf32, #tpu.memory_space<vmem>>, vector<8x128xf32>,
    } else {
    }
    return
  }
  func.func @transform_0(%arg0: i32) -> (i32, i32) {
    %c0_i32 = arith.constant 0 : i32
    %c0_i32_0 = arith.constant 0 : i32
    return %arg0, %c0_i32 : i32, i32
  }
  func.func @transform_1(%arg0: i32) -> (i32, i32) {
    %c0_i32 = arith.constant 0 : i32
    %c0_i32_0 = arith.constant 0 : i32
    %c0_i32_1 = arith.constant 0 : i32
    return %c0_i32, %c0_i32_0 : i32, i32
  }
  func.func @transform_2(%arg0: i32) -> (i32, i32) {
    %c0_i32 = arith.constant 0 : i32
    %c0_i32_0 = arith.constant 0 : i32
    %c0_i32_1 = arith.constant 0 : i32
    return %c0_i32, %c0_i32_0 : i32, i32
  }
  func.func @transform_3(%arg0: i32) -> (i32, i32) {
    %c0_i32 = arith.constant 0 : i32
    %c0_i32_0 = arith.constant 0 : i32
    %c0_i32_1 = arith.constant 0 : i32
    return %c0_i32, %c0_i32_0 : i32, i32
  }
  func.func @transform_4(%arg0: i32) -> (i32, i32) {
    %c0_i32 = arith.constant 0 : i32
    %c0_i32_0 = arith.constant 0 : i32
    %c0_i32_1 = arith.constant 0 : i32
    return %c0_i32, %c0_i32_0 : i32, i32
  }
  func.func @transform_5(%arg0: i32) -> (i32, i32) {
    %c0_i32 = arith.constant 0 : i32
    %c0_i32_0 = arith.constant 0 : i32
    %c0_i32_1 = arith.constant 0 : i32
    return %c0_i32, %c0_i32_0 : i32, i32
  }
  func.func @transform_6(%arg0: i32) -> (i32, i32) {
    %c0_i32 = arith.constant 0 : i32
    %c0_i32_0 = arith.constant 0 : i32
    %c0_i32_1 = arith.constant 0 : i32
    return %c0_i32, %c0_i32_0 : i32, i32
  }
  func.func @transform_7(%arg0: i32) -> (i32, i32) {
    %c0_i32 = arith.constant 0 : i32
    %c0_i32_0 = arith.constant 0 : i32
    %c0_i32_1 = arith.constant 0 : i32
    return %c0_i32, %c0_i32_0 : i32, i32
  }
  func.func @transform_8(%arg0: i32) -> (i32, i32) {
    %c0_i32 = arith.constant 0 : i32
    %c0_i32_0 = arith.constant 0 : i32
    %c0_i32_1 = arith.constant 0 : i32
    return %c0_i32, %c0_i32_0 : i32, i32
  }
  func.func @transform_9(%arg0: i32) -> (i32, i32) {
    %c0_i32 = arith.constant 0 : i32
    %c0_i32_0 = arith.constant 0 : i32
    %c0_i32_1 = arith.constant 0 : i32
    return %c0_i32, %c0_i32_0 : i32, i32
  }
}

</mosaic_0001>

<llo_original>
// kernel: rnn_forward.1
$region0: #{rnn_forward.1}
  #allocation0 [shape = 'u32[]', space=smem, size = 0x4, offset = 0x4, fixed_abs, tag = 'smem constant byte address 0x4 - core index']
  #allocation1 [shape = 'u32[144,128]{1,0:T(1,128)}', space=vmem, size = 0x12000, scoped, tag = 'internal scratch']
  #allocation2 [shape = 'f32[2,8,128]{2,1,0:T(8,128)}', space=vmem, size = 0x2000, scoped, tag = 'scratch operand']
  #allocation3 [shape = 'f32[2,8,128]{2,1,0:T(8,128)}', space=vmem, size = 0x2000, scoped, tag = 'scratch operand']
  #allocation4 [shape = 'f32[32,128]{1,0:T(8,128)}', space=vmem, size = 0x4000, scoped, tag = 'scratch operand']
  #allocation5 [shape = 'f32[32,512]{1,0:T(8,128)}', space=vmem, size = 0x10000, scoped, tag = 'scratch operand']
  %s0 = inlined_call_operand.vmem [shape: f32[64,128], index: 0, kind: input, shape index: {}]
  %s1 = inlined_call_operand.hbm [shape: f32[128,512], index: 1, kind: input, shape index: {}]
  %s2 = inlined_call_operand.hbm [shape: f32[128,512], index: 2, kind: input, shape index: {}]
  %s3 = inlined_call_operand.vmem [shape: f32[1,512], index: 3, kind: input, shape index: {}]
  %s4 = inlined_call_operand.hbm [shape: f32[128,512], index: 4, kind: input, shape index: {}]
  %s5 = inlined_call_operand.hbm [shape: f32[128,512], index: 5, kind: input, shape index: {}]
  %s6 = inlined_call_operand.vmem [shape: f32[1,512], index: 6, kind: input, shape index: {}]
  %s7 = inlined_call_operand.hbm [shape: f32[128,128], index: 7, kind: input, shape index: {}]
  %s8 = inlined_call_operand.vmem [shape: f32[1,128], index: 8, kind: input, shape index: {}]
  %s9 = inlined_call_operand.vmem [shape: f32[8,128], index: 9, kind: output, shape index: {}]
  %s10 = sld [smem:[#allocation0]]
  $region97: #{rnn_forward.1} parent=0
    _
  %s12 = ssub.s32 1, %s10
  %s13 = scalar_select 0, %s12, %s10
  $region1: #{rnn_forward.1} parent=0
    #allocation6 [shape = 'u8[262144]{0}', space=vmem, size = 0x40000, scoped, tag = 'input window, operand 1, single buffered']
    #allocation7 [shape = 's32[2]{0}', space=sflag, size = 0x8, scoped, tag = 'scoped memory for rnn_forward.1']
    #allocation8 [shape = 'u8[262144]{0}', space=vmem, size = 0x40000, scoped, tag = 'input window, operand 2, single buffered']
    #allocation9 [shape = 's32[1]{0}', space=sflag, size = 0x4, scoped, tag = 'scoped memory for rnn_forward.1']
    #allocation10 [shape = 'u8[262144]{0}', space=vmem, size = 0x40000, scoped, tag = 'input window, operand 4, single buffered']
    #allocation11 [shape = 'u8[262144]{0}', space=vmem, size = 0x40000, scoped, tag = 'input window, operand 5, single buffered']
    #allocation12 [shape = 's32[1]{0}', space=sflag, size = 0x4, scoped, tag = 'scoped memory for rnn_forward.1']
    #allocation13 [shape = 'u8[65536]{0}', space=vmem, size = 0x10000, scoped, tag = 'input window, operand 7, single buffered']
    %14 = vsyncpa [#allocation7], 0
    %15 = vsyncpa [#allocation9], 0
    %16 = vsyncpa [#allocation12], 0
    loop: start=0, step=1, limit=4
    $region2: #{rnn_forward.1} parent=1 // loop_pre_header
      _
    $region3: #{rnn_forward.1} parent=1 // loop_header
      %s18 = sphi 0, %s22
      %p19 = scmp.ge.s32.totalorder %s18, 4
      %s28 = sphi 0, %s30
      %s31 = sphi 0, %s28
      %s32 = sphi 0, %s31
      %s48 = sphi 0, %s32
      %s52 = sphi 0, %s52
      %s54 = sphi 0, %s52
      %s55 = sphi 0, %s54
      %s69 = sphi 0, %s55
      %s73 = sphi 0, %s73
      %s75 = sphi 0, %s73
      %s76 = sphi 0, %s75
      %s90 = sphi 0, %s76
      %s94 = sphi 0, %s94
      %s96 = sphi 0, %s94
      %s97 = sphi 0, %s96
      %s111 = sphi 0, %s97
      %s115 = sphi 0, %s115
      %s117 = sphi 0, %s115
      %s118 = sphi 0, %s117
      %s132 = sphi 0, %s118
      %s136 = sphi 0, %s136
      %s138 = sphi 0, %s136
      %s139 = sphi 0, %s138
      %s153 = sphi 0, %s139
      %s157 = sphi 0, %s157
      %s159 = sphi 0, %s157
      %s160 = sphi 0, %s159
      %s174 = sphi 0, %s160
      %s178 = sphi 0, %s178
      %s180 = sphi 0, %s178
      %s181 = sphi 0, %s180
      %s195 = sphi 0, %s181
      %s199 = sphi 0, %s199
      %s201 = sphi 0, %s199
      %s202 = sphi 0, %s201
      %s216 = sphi 0, %s202
      %s220 = sphi 0, %s220
      %s222 = sphi 0, %s220
      %s223 = sphi 0, %s222
      %s237 = sphi 0, %s223
    $region4: #{rnn_forward.1} parent=1 // loop_header_branch
      %21 = sbr.rel (%p19) target = $region8
    $region5: #{rnn_forward.1} parent=1 // loop_body
      %s23 = ssub.s32 %s18, 1
      %s24 = ssub.s32 %s18, 2
      %s25 = sadd.s32 %s18, 1
      %s26 = ssub.s32 %s18, %s25
      %p27 = scmp.eq.s32.totalorder %s26, 0
      %s29 = sadd.s32 %s28, 1
      %s30 = scalar_select %p27, %s28, %s29
      %p33 = pneg %p27
      %p34 = scmp.eq.s32.totalorder %s18, 1
      %p35 = por %p33, %p34
      %p36 = scmp.ne.s32.totalorder %s28, %s31
      %p37 = scmp.eq.s32.totalorder %s18, 0
      %p38 = por %p36, %p37
      %p39 = scmp.ne.s32.totalorder %s28, %s31
      %p40 = scmp.eq.s32.totalorder %s23, 1
      %p41 = por %p39, %p40
      %p42 = scmp.ne.s32.totalorder %s31, %s32
      %p43 = scmp.eq.s32.totalorder %s23, 0
      %p44 = por %p42, %p43
      %p45 = scmp.ne.s32.totalorder %s31, %s32
      %p46 = scmp.eq.s32.totalorder %s24, 1
      %p47 = por %p45, %p46
      %p49 = scmp.ne.s32.totalorder %s32, %s48
      %p50 = scmp.eq.s32.totalorder %s24, 0
      %p51 = por %p49, %p50
      %s53 = sadd.s32 %s52, 1
      %p56 = scmp.eq.s32.totalorder %s18, 1
      %p57 = scmp.ne.s32.totalorder %s52, %s54
      %p58 = scmp.eq.s32.totalorder %s18, 0
      %p59 = por %p57, %p58
      %p60 = scmp.ne.s32.totalorder %s52, %s54
      %p61 = scmp.eq.s32.totalorder %s23, 1
      %p62 = por %p60, %p61
      %p63 = scmp.ne.s32.totalorder %s54, %s55
      %p64 = scmp.eq.s32.totalorder %s23, 0
      %p65 = por %p63, %p64
      %p66 = scmp.ne.s32.totalorder %s54, %s55
      %p67 = scmp.eq.s32.totalorder %s24, 1
      %p68 = por %p66, %p67
      %p70 = scmp.ne.s32.totalorder %s55, %s69
      %p71 = scmp.eq.s32.totalorder %s24, 0
      %p72 = por %p70, %p71
      %s74 = sadd.s32 %s73, 1
      %p77 = scmp.eq.s32.totalorder %s18, 1
      %p78 = scmp.ne.s32.totalorder %s73, %s75
      %p79 = scmp.eq.s32.totalorder %s18, 0
      %p80 = por %p78, %p79
      %p81 = scmp.ne.s32.totalorder %s73, %s75
      %p82 = scmp.eq.s32.totalorder %s23, 1
      %p83 = por %p81, %p82
      %p84 = scmp.ne.s32.totalorder %s75, %s76
      %p85 = scmp.eq.s32.totalorder %s23, 0
      %p86 = por %p84, %p85
      %p87 = scmp.ne.s32.totalorder %s75, %s76
      %p88 = scmp.eq.s32.totalorder %s24, 1
      %p89 = por %p87, %p88
      %p91 = scmp.ne.s32.totalorder %s76, %s90
      %p92 = scmp.eq.s32.totalorder %s24, 0
      %p93 = por %p91, %p92
      %s95 = sadd.s32 %s94, 1
      %p98 = scmp.eq.s32.totalorder %s18, 1
      %p99 = scmp.ne.s32.totalorder %s94, %s96
      %p100 = scmp.eq.s32.totalorder %s18, 0
      %p101 = por %p99, %p100
      %p102 = scmp.ne.s32.totalorder %s94, %s96
      %p103 = scmp.eq.s32.totalorder %s23, 1
      %p104 = por %p102, %p103
      %p105 = scmp.ne.s32.totalorder %s96, %s97
      %p106 = scmp.eq.s32.totalorder %s23, 0
      %p107 = por %p105, %p106
      %p108 = scmp.ne.s32.totalorder %s96, %s97
      %p109 = scmp.eq.s32.totalorder %s24, 1
      %p110 = por %p108, %p109
      %p112 = scmp.ne.s32.totalorder %s97, %s111
      %p113 = scmp.eq.s32.totalorder %s24, 0
      %p114 = por %p112, %p113
      %s116 = sadd.s32 %s115, 1
      %p119 = scmp.eq.s32.totalorder %s18, 1
      %p120 = scmp.ne.s32.totalorder %s115, %s117
      %p121 = scmp.eq.s32.totalorder %s18, 0
      %p122 = por %p120, %p121
      %p123 = scmp.ne.s32.totalorder %s115, %s117
      %p124 = scmp.eq.s32.totalorder %s23, 1
      %p125 = por %p123, %p124
      %p126 = scmp.ne.s32.totalorder %s117, %s118
      %p127 = scmp.eq.s32.totalorder %s23, 0
      %p128 = por %p126, %p127
      %p129 = scmp.ne.s32.totalorder %s117, %s118
      %p130 = scmp.eq.s32.totalorder %s24, 1
      %p131 = por %p129, %p130
      %p133 = scmp.ne.s32.totalorder %s118, %s132
      %p134 = scmp.eq.s32.totalorder %s24, 0
      %p135 = por %p133, %p134
      %s137 = sadd.s32 %s136, 1
      %p140 = scmp.eq.s32.totalorder %s18, 1
      %p141 = scmp.ne.s32.totalorder %s136, %s138
      %p142 = scmp.eq.s32.totalorder %s18, 0
      %p143 = por %p141, %p142
      %p144 = scmp.ne.s32.totalorder %s136, %s138
      %p145 = scmp.eq.s32.totalorder %s23, 1
      %p146 = por %p144, %p145
      %p147 = scmp.ne.s32.totalorder %s138, %s139
      %p148 = scmp.eq.s32.totalorder %s23, 0
      %p149 = por %p147, %p148
      %p150 = scmp.ne.s32.totalorder %s138, %s139
      %p151 = scmp.eq.s32.totalorder %s24, 1
      %p152 = por %p150, %p151
      %p154 = scmp.ne.s32.totalorder %s139, %s153
      %p155 = scmp.eq.s32.totalorder %s24, 0
      %p156 = por %p154, %p155
      %s158 = sadd.s32 %s157, 1
      %p161 = scmp.eq.s32.totalorder %s18, 1
      %p162 = scmp.ne.s32.totalorder %s157, %s159
      %p163 = scmp.eq.s32.totalorder %s18, 0
      %p164 = por %p162, %p163
      %p165 = scmp.ne.s32.totalorder %s157, %s159
      %p166 = scmp.eq.s32.totalorder %s23, 1
      %p167 = por %p165, %p166
      %p168 = scmp.ne.s32.totalorder %s159, %s160
      %p169 = scmp.eq.s32.totalorder %s23, 0
      %p170 = por %p168, %p169
      %p171 = scmp.ne.s32.totalorder %s159, %s160
      %p172 = scmp.eq.s32.totalorder %s24, 1
      %p173 = por %p171, %p172
      %p175 = scmp.ne.s32.totalorder %s160, %s174
      %p176 = scmp.eq.s32.totalorder %s24, 0
      %p177 = por %p175, %p176
      %s179 = sadd.s32 %s178, 1
      %p182 = scmp.eq.s32.totalorder %s18, 1
      %p183 = scmp.ne.s32.totalorder %s178, %s180
      %p184 = scmp.eq.s32.totalorder %s18, 0
      %p185 = por %p183, %p184
      %p186 = scmp.ne.s32.totalorder %s178, %s180
      %p187 = scmp.eq.s32.totalorder %s23, 1
      %p188 = por %p186, %p187
      %p189 = scmp.ne.s32.totalorder %s180, %s181
      %p190 = scmp.eq.s32.totalorder %s23, 0
      %p191 = por %p189, %p190
      %p192 = scmp.ne.s32.totalorder %s180, %s181
      %p193 = scmp.eq.s32.totalorder %s24, 1
      %p194 = por %p192, %p193
      %p196 = scmp.ne.s32.totalorder %s181, %s195
      %p197 = scmp.eq.s32.totalorder %s24, 0
      %p198 = por %p196, %p197
      %s200 = sadd.s32 %s199, 1
      %p203 = scmp.eq.s32.totalorder %s18, 1
      %p204 = scmp.ne.s32.totalorder %s199, %s201
      %p205 = scmp.eq.s32.totalorder %s18, 0
      %p206 = por %p204, %p205
      %p207 = scmp.ne.s32.totalorder %s199, %s201
      %p208 = scmp.eq.s32.totalorder %s23, 1
      %p209 = por %p207, %p208
      %p210 = scmp.ne.s32.totalorder %s201, %s202
      %p211 = scmp.eq.s32.totalorder %s23, 0
      %p212 = por %p210, %p211
      %p213 = scmp.ne.s32.totalorder %s201, %s202
      %p214 = scmp.eq.s32.totalorder %s24, 1
      %p215 = por %p213, %p214
      %p217 = scmp.ne.s32.totalorder %s202, %s216
      %p218 = scmp.eq.s32.totalorder %s24, 0
      %p219 = por %p217, %p218
      %s221 = sadd.s32 %s220, 1
      %p224 = scmp.eq.s32.totalorder %s18, 1
      %p225 = scmp.ne.s32.totalorder %s220, %s222
      %p226 = scmp.eq.s32.totalorder %s18, 0
      %p227 = por %p225, %p226
      %p228 = scmp.ne.s32.totalorder %s220, %s222
      %p229 = scmp.eq.s32.totalorder %s23, 1
      %p230 = por %p228, %p229
      %p231 = scmp.ne.s32.totalorder %s222, %s223
      %p232 = scmp.eq.s32.totalorder %s23, 0
      %p233 = por %p231, %p232
      %p234 = scmp.ne.s32.totalorder %s222, %s223
      %p235 = scmp.eq.s32.totalorder %s24, 1
      %p236 = por %p234, %p235
      %p238 = scmp.ne.s32.totalorder %s223, %s237
      %p239 = scmp.eq.s32.totalorder %s24, 0
      %p240 = por %p238, %p239
      %p241 = scmp.le.s32.totalorder 1, %s18
      %p242 = scmp.lt.s32.totalorder %s18, 3
      %p243 = pnand %p241, %p242
      %p244 = pneg %p243
      // Predicated region
      $region9: #{rnn_forward.1} parent=5 // pred_check
        _
      $region10: #{rnn_forward.1} parent=5 // pred_check_branch
        %246 = sbr.rel (%p243) target = $region12
      $region11: #{rnn_forward.1} parent=5 // pred_region
        %s247 = ssub.s32 %s18, 1
        // Predicated region
        $region13: #{rnn_forward.1} parent=11 // pred_check
          %p248 = pneg %p65
        $region14: #{rnn_forward.1} parent=11 // pred_check_branch
          %250 = sbr.rel (%p248) target = $region16
        $region15: #{rnn_forward.1} parent=11 // pred_region
          %s252 = ssub.s32 8192, 8192
          %253 = vsyncadd [#allocation7], %s252
          %s254 = sshll.u32 [#allocation6], 4
          %s255 = int_to_ptr.vmem [resolvable:$true] %s254
          %260 = dma.hbm_to_vmem [thread:$0]  %s1, 8192, %s255, [#allocation7], 512, 512, 32
        $region16: #{rnn_forward.1} parent=11 // pred_fallthru
          _
        // Predicated region
        $region17: #{rnn_forward.1} parent=11 // pred_check
          %p261 = pneg %p86
        $region18: #{rnn_forward.1} parent=11 // pred_check_branch
          %263 = sbr.rel (%p261) target = $region20
        $region19: #{rnn_forward.1} parent=11 // pred_region
          %s265 = ssub.s32 8192, 8192
          %266 = vsyncadd [#allocation9], %s265
          %s267 = sshll.u32 [#allocation8], 4
          %s268 = int_to_ptr.vmem [resolvable:$true] %s267
          %273 = dma.hbm_to_vmem [thread:$0]  %s2, 8192, %s268, [#allocation9], 512, 512, 32
        $region20: #{rnn_forward.1} parent=11 // pred_fallthru
          _
        // Predicated region
        $region21: #{rnn_forward.1} parent=11 // pred_check
          %p274 = pneg %p107
        $region22: #{rnn_forward.1} parent=11 // pred_check_branch
          %276 = sbr.rel (%p274) target = $region24
        $region23: #{rnn_forward.1} parent=11 // pred_region
          _
        $region24: #{rnn_forward.1} parent=11 // pred_fallthru
          _
        // Predicated region
        $region25: #{rnn_forward.1} parent=11 // pred_check
          %p277 = pneg %p128
        $region26: #{rnn_forward.1} parent=11 // pred_check_branch
          %279 = sbr.rel (%p277) target = $region28
        $region27: #{rnn_forward.1} parent=11 // pred_region
          %s281 = ssub.s32 8192, 8192
          %282 = vsyncadd [#allocation9], %s281
          %s283 = sshll.u32 [#allocation10], 4
          %s284 = int_to_ptr.vmem [resolvable:$true] %s283
          %289 = dma.hbm_to_vmem [thread:$0]  %s4, 8192, %s284, [#allocation9], 512, 512, 32
        $region28: #{rnn_forward.1} parent=11 // pred_fallthru
          _
        // Predicated region
        $region29: #{rnn_forward.1} parent=11 // pred_check
          %p290 = pneg %p149
        $region30: #{rnn_forward.1} parent=11 // pred_check_branch
          %292 = sbr.rel (%p290) target = $region32
        $region31: #{rnn_forward.1} parent=11 // pred_region
          %s294 = ssub.s32 8192, 8192
          %295 = vsyncadd [#allocation12], %s294
          %s296 = sshll.u32 [#allocation11], 4
          %s297 = int_to_ptr.vmem [resolvable:$true] %s296
          %302 = dma.hbm_to_vmem [thread:$0]  %s5, 8192, %s297, [#allocation12], 512, 512, 32
        $region32: #{rnn_forward.1} parent=11 // pred_fallthru
          _
        // Predicated region
        $region33: #{rnn_forward.1} parent=11 // pred_check
          %p303 = pneg %p170
        $region34: #{rnn_forward.1} parent=11 // pred_check_branch
          %305 = sbr.rel (%p303) target = $region36
        $region35: #{rnn_forward.1} parent=11 // pred_region
          _
        $region36: #{rnn_forward.1} parent=11 // pred_fallthru
          _
        // Predicated region
        $region37: #{rnn_forward.1} parent=11 // pred_check
          %p306 = pneg %p191
        $region38: #{rnn_forward.1} parent=11 // pred_check_branch
          %308 = sbr.rel (%p306) target = $region40
        $region39: #{rnn_forward.1} parent=11 // pred_region
          %s310 = ssub.s32 2048, 2048
          %311 = vsyncadd [#allocation12], %s310
          %s312 = sshll.u32 [#allocation13], 4
          %s313 = int_to_ptr.vmem [resolvable:$true] %s312
          %318 = dma.hbm_to_vmem [thread:$0]  %s7, 2048, %s313, [#allocation12], 128, 128, 8
        $region40: #{rnn_forward.1} parent=11 // pred_fallthru
          _
        // Predicated region
        $region41: #{rnn_forward.1} parent=11 // pred_check
          %p319 = pneg %p212
        $region42: #{rnn_forward.1} parent=11 // pred_check_branch
          %321 = sbr.rel (%p319) target = $region44
        $region43: #{rnn_forward.1} parent=11 // pred_region
          _
        $region44: #{rnn_forward.1} parent=11 // pred_fallthru
          _
      $region12: #{rnn_forward.1} parent=5 // pred_fallthru
        _
      %p322 = scmp.lt.s32.totalorder %s18, 2
      // Predicated region
      $region45: #{rnn_forward.1} parent=5 // pred_check
        %p323 = pneg %p322
      $region46: #{rnn_forward.1} parent=5 // pred_check_branch
        %325 = sbr.rel (%p323) target = $region48
      $region47: #{rnn_forward.1} parent=5 // pred_region
        // Predicated region
        $region49: #{rnn_forward.1} parent=47 // pred_check
          %p326 = pneg %p38
        $region50: #{rnn_forward.1} parent=47 // pred_check_branch
          %328 = sbr.rel (%p326) target = $region52
        $region51: #{rnn_forward.1} parent=47 // pred_region
          %s329 = smul.u32 4, %s18
          %p330 = scmp.lt.s32.totalorder %s329, 7
          %s331 = scalar_select %p330, %s329, 7
          %s332 = smul.addr %s331, 8
          %s333 = scalar_lea.vmem %s0, %s332
          %s334 = smul.u32 4, %s18
        $region52: #{rnn_forward.1} parent=47 // pred_fallthru
          _
      $region48: #{rnn_forward.1} parent=5 // pred_fallthru
        _
      %p335 = scmp.le.s32.totalorder 1, %s18
      %p336 = scmp.lt.s32.totalorder %s18, 3
      %p337 = pnand %p335, %p336
      %p338 = pneg %p337
      // Predicated region
      $region53: #{rnn_forward.1} parent=5 // pred_check
        _
      $region54: #{rnn_forward.1} parent=5 // pred_check_branch
        %340 = sbr.rel (%p337) target = $region56
      $region55: #{rnn_forward.1} parent=5 // pred_region
        %s341 = ssub.s32 %s18, 1
        // Predicated region
        $region57: #{rnn_forward.1} parent=55 // pred_check
          %p342 = pneg %p65
        $region58: #{rnn_forward.1} parent=55 // pred_check_branch
          %344 = sbr.rel (%p342) target = $region60
        $region59: #{rnn_forward.1} parent=55 // pred_region
          %345 = dma.done [#allocation7], 8192
        $region60: #{rnn_forward.1} parent=55 // pred_fallthru
          _
        // Predicated region
        $region61: #{rnn_forward.1} parent=55 // pred_check
          %p346 = pneg %p86
        $region62: #{rnn_forward.1} parent=55 // pred_check_branch
          %348 = sbr.rel (%p346) target = $region64
        $region63: #{rnn_forward.1} parent=55 // pred_region
          %349 = dma.done [#allocation9], 8192
        $region64: #{rnn_forward.1} parent=55 // pred_fallthru
          _
        // Predicated region
        $region65: #{rnn_forward.1} parent=55 // pred_check
          %p350 = pneg %p128
        $region66: #{rnn_forward.1} parent=55 // pred_check_branch
          %352 = sbr.rel (%p350) target = $region68
        $region67: #{rnn_forward.1} parent=55 // pred_region
          %353 = dma.done [#allocation9], 8192
        $region68: #{rnn_forward.1} parent=55 // pred_fallthru
          _
        // Predicated region
        $region69: #{rnn_forward.1} parent=55 // pred_check
          %p354 = pneg %p149
        $region70: #{rnn_forward.1} parent=55 // pred_check_branch
          %356 = sbr.rel (%p354) target = $region72
        $region71: #{rnn_forward.1} parent=55 // pred_region
          %357 = dma.done [#allocation12], 8192
        $region72: #{rnn_forward.1} parent=55 // pred_fallthru
          _
        // Predicated region
        $region73: #{rnn_forward.1} parent=55 // pred_check
          %p358 = pneg %p191
        $region74: #{rnn_forward.1} parent=55 // pred_check_branch
          %360 = sbr.rel (%p358) target = $region76
        $region75: #{rnn_forward.1} parent=55 // pred_region
          %361 = dma.done [#allocation12], 2048
        $region76: #{rnn_forward.1} parent=55 // pred_fallthru
          _
        %s362 = smul.u32 4, %s23
        %p363 = scmp.lt.s32.totalorder %s362, 7
        %s364 = scalar_select %p363, %s362, 7
        %s365 = smul.addr %s364, 8
        %s366 = scalar_lea.vmem %s0, %s365
        %p367 = pneg %p44
        %p368 = pneg %p41
        %p369 = pneg %p65
        %p370 = pneg %p62
        %p371 = pneg %p86
        %p372 = pneg %p83
        %p373 = pneg %p107
        %p374 = pneg %p104
        %p375 = pneg %p128
        %p376 = pneg %p125
        %p377 = pneg %p149
        %p378 = pneg %p146
        %p379 = pneg %p170
        %p380 = pneg %p167
        %p381 = pneg %p191
        %p382 = pneg %p188
        %p383 = pneg %p212
        %p384 = pneg %p209
        %p385 = pneg %p233
        %p386 = pneg %p230
        %s387 = smul.u32 4, %s23
        %p388 = scmp.lt.s32.totalorder %s387, 7
        %s389 = scalar_select %p388, %s387, 7
        %s390 = smul.addr %s389, 8
        %s391 = scalar_lea.vmem %s0, %s390
        %s392 = smul.u32 4, %s23
        %p393 = scmp.eq.s32.totalorder %s23, 0
        // Predicated region
        $region77: #{rnn_forward.1} parent=55 // pred_check
          %p394 = pneg %p393
        $region78: #{rnn_forward.1} parent=55 // pred_check_branch
          %396 = sbr.rel (%p394) target = $region80
        $region79: #{rnn_forward.1} parent=55 // pred_region
          %397 = vst [vmem:[#allocation2] sm:$0xff] 0.0
          %398 = vst [vmem:[#allocation2 + $0x8] sm:$0xff] 0.0
          %399 = vst [vmem:[#allocation3] sm:$0xff] 0.0
          %400 = vst [vmem:[#allocation3 + $0x8] sm:$0xff] 0.0
        $region80: #{rnn_forward.1} parent=55 // pred_fallthru
          _
        %v401 = vld [vmem:[%s391] sm:$0xff]
        %v402 = vld [vmem:[%s391 + $0x8] sm:$0xff]
        %v403 = vld [vmem:[%s391 + $0x10] sm:$0xff]
        %v404 = vld [vmem:[%s391 + $0x18] sm:$0xff]
        %v405 = vld [vmem:[#allocation6] sm:$0xff]
        %v406 = vld [vmem:[#allocation6 + $0x8] sm:$0xff]
        %v407 = vld [vmem:[#allocation6 + $0x10] sm:$0xff]
        %v408 = vld [vmem:[#allocation6 + $0x18] sm:$0xff]
        %v409 = vld [vmem:[#allocation6 + $0x20] sm:$0xff]
        %v410 = vld [vmem:[#allocation6 + $0x28] sm:$0xff]
        %v411 = vld [vmem:[#allocation6 + $0x30] sm:$0xff]
        %v412 = vld [vmem:[#allocation6 + $0x38] sm:$0xff]
        %v413 = vld [vmem:[#allocation6 + $0x40] sm:$0xff]
        %v414 = vld [vmem:[#allocation6 + $0x48] sm:$0xff]
        %v415 = vld [vmem:[#allocation6 + $0x50] sm:$0xff]
        %v416 = vld [vmem:[#allocation6 + $0x58] sm:$0xff]
        %v417 = vld [vmem:[#allocation6 + $0x60] sm:$0xff]
        %v418 = vld [vmem:[#allocation6 + $0x68] sm:$0xff]
        %v419 = vld [vmem:[#allocation6 + $0x70] sm:$0xff]
        %v420 = vld [vmem:[#allocation6 + $0x78] sm:$0xff]
        %v421 = vld [vmem:[#allocation6 + $0x80] sm:$0xff]
        %v422 = vld [vmem:[#allocation6 + $0x88] sm:$0xff]
        %v423 = vld [vmem:[#allocation6 + $0x90] sm:$0xff]
        %v424 = vld [vmem:[#allocation6 + $0x98] sm:$0xff]
        %v425 = vld [vmem:[#allocation6 + $0xa0] sm:$0xff]
        %v426 = vld [vmem:[#allocation6 + $0xa8] sm:$0xff]
        %v427 = vld [vmem:[#allocation6 + $0xb0] sm:$0xff]
        %v428 = vld [vmem:[#allocation6 + $0xb8] sm:$0xff]
        %v429 = vld [vmem:[#allocation6 + $0xc0] sm:$0xff]
        %v430 = vld [vmem:[#allocation6 + $0xc8] sm:$0xff]
        %v431 = vld [vmem:[#allocation6 + $0xd0] sm:$0xff]
        %v432 = vld [vmem:[#allocation6 + $0xd8] sm:$0xff]
        %v433 = vld [vmem:[#allocation6 + $0xe0] sm:$0xff]
        %v434 = vld [vmem:[#allocation6 + $0xe8] sm:$0xff]
        %v435 = vld [vmem:[#allocation6 + $0xf0] sm:$0xff]
        %v436 = vld [vmem:[#allocation6 + $0xf8] sm:$0xff]
        %v437 = vld [vmem:[#allocation6 + $0x100] sm:$0xff]
        %v438 = vld [vmem:[#allocation6 + $0x108] sm:$0xff]
        %v439 = vld [vmem:[#allocation6 + $0x110] sm:$0xff]
        %v440 = vld [vmem:[#allocation6 + $0x118] sm:$0xff]
        %v441 = vld [vmem:[#allocation6 + $0x120] sm:$0xff]
        %v442 = vld [vmem:[#allocation6 + $0x128] sm:$0xff]
        %v443 = vld [vmem:[#allocation6 + $0x130] sm:$0xff]
        %v444 = vld [vmem:[#allocation6 + $0x138] sm:$0xff]
        %v445 = vld [vmem:[#allocation6 + $0x140] sm:$0xff]
        %v446 = vld [vmem:[#allocation6 + $0x148] sm:$0xff]
        %v447 = vld [vmem:[#allocation6 + $0x150] sm:$0xff]
        %v448 = vld [vmem:[#allocation6 + $0x158] sm:$0xff]
        %v449 = vld [vmem:[#allocation6 + $0x160] sm:$0xff]
        %v450 = vld [vmem:[#allocation6 + $0x168] sm:$0xff]
        %v451 = vld [vmem:[#allocation6 + $0x170] sm:$0xff]
        %v452 = vld [vmem:[#allocation6 + $0x178] sm:$0xff]
        %v453 = vld [vmem:[#allocation6 + $0x180] sm:$0xff]
        %v454 = vld [vmem:[#allocation6 + $0x188] sm:$0xff]
        %v455 = vld [vmem:[#allocation6 + $0x190] sm:$0xff]
        %v456 = vld [vmem:[#allocation6 + $0x198] sm:$0xff]
        %v457 = vld [vmem:[#allocation6 + $0x1a0] sm:$0xff]
        %v458 = vld [vmem:[#allocation6 + $0x1a8] sm:$0xff]
        %v459 = vld [vmem:[#allocation6 + $0x1b0] sm:$0xff]
        %v460 = vld [vmem:[#allocation6 + $0x1b8] sm:$0xff]
        %v461 = vld [vmem:[#allocation6 + $0x1c0] sm:$0xff]
        %v462 = vld [vmem:[#allocation6 + $0x1c8] sm:$0xff]
        %v463 = vld [vmem:[#allocation6 + $0x1d0] sm:$0xff]
        %v464 = vld [vmem:[#allocation6 + $0x1d8] sm:$0xff]
        %v465 = vld [vmem:[#allocation6 + $0x1e0] sm:$0xff]
        %v466 = vld [vmem:[#allocation6 + $0x1e8] sm:$0xff]
        %v467 = vld [vmem:[#allocation6 + $0x1f0] sm:$0xff]
        %v468 = vld [vmem:[#allocation6 + $0x1f8] sm:$0xff]
        %v469 = vld [vmem:[%s3] sm:$0xf]
        %v471 = vlaneseq
        %v472 = vshrl.u32 %v471, 7
        %v473 = vsub.s32 0, %v472
        %v474 = vrot.slane %v469, %v473
        %v475 = vlaneseq
        %v476 = vshrl.u32 %v475, 7
        %v477 = vsub.s32 1, %v476
        %v478 = vrot.slane %v469, %v477
        %v479 = vlaneseq
        %v480 = vshrl.u32 %v479, 7
        %v481 = vsub.s32 2, %v480
        %v482 = vrot.slane %v469, %v481
        %v483 = vlaneseq
        %v484 = vshrl.u32 %v483, 7
        %v485 = vsub.s32 3, %v484
        %v486 = vrot.slane %v469, %v485
        %491 = vmatprep.subr.mxu0 %v466
        %492 = vmatpush1.msra.mxu0 %v465
        %493 = vmatprep.subr.mxu0 %v462
        %494 = vmatpush1.msra.mxu0 %v461
        %495 = vmatprep.subr.mxu0 %v458
        %496 = vmatpush1.msra.mxu0 %v457
        %497 = vmatprep.subr.mxu0 %v454
        %498 = vmatpush1.msra.mxu0 %v453
        %499 = vmatprep.subr.mxu0 %v450
        %500 = vmatpush1.msra.mxu0 %v449
        %501 = vmatprep.subr.mxu0 %v446
        %502 = vmatpush1.msra.mxu0 %v445
        %503 = vmatprep.subr.mxu0 %v442
        %504 = vmatpush1.msra.mxu0 %v441
        %505 = vmatprep.subr.mxu0 %v438
        %506 = vmatpush1.msra.mxu0 %v437
        %507 = vmatprep.subr.mxu0 %v434
        %508 = vmatpush1.msra.mxu0 %v433
        %509 = vmatprep.subr.mxu0 %v430
        %510 = vmatpush1.msra.mxu0 %v429
        %511 = vmatprep.subr.mxu0 %v426
        %512 = vmatpush1.msra.mxu0 %v425
        %513 = vmatprep.subr.mxu0 %v422
        %514 = vmatpush1.msra.mxu0 %v421
        %515 = vmatprep.subr.mxu0 %v418
        %516 = vmatpush1.msra.mxu0 %v417
        %517 = vmatprep.subr.mxu0 %v414
        %518 = vmatpush1.msra.mxu0 %v413
        %519 = vmatprep.subr.mxu0 %v410
        %520 = vmatpush1.msra.mxu0 %v409
        %521 = vmatprep.subr.mxu0 %v406
        %522 = vmatpush1.msra.mxu0 %v405
        %523 = vmatprep.subr.mxu0 0.0
        %524 = vmatpush2.msra.mxu0 0.0
        %525 = vmatprep.subr.mxu0 0.0
        %526 = vmatpush2.msra.mxu0 0.0
        %527 = vmatprep.subr.mxu0 0.0
        %528 = vmatpush2.msra.mxu0 0.0
        %529 = vmatprep.subr.mxu0 0.0
        %530 = vmatpush2.msra.mxu0 0.0
        %531 = vmatprep.subr.mxu0 0.0
        %532 = vmatpush2.msra.mxu0 0.0
        %533 = vmatprep.subr.mxu0 0.0
        %534 = vmatpush2.msra.mxu0 0.0
        %535 = vmatprep.subr.mxu0 0.0
        %536 = vmatpush2.msra.mxu0 0.0
        %537 = vmatprep.subr.mxu0 0.0
        %538 = vmatpush2.msra.mxu0 0.0
        %539 = vmatprep.subr.mxu0 0.0
        %540 = vmatpush2.msra.mxu0 0.0
        %541 = vmatprep.subr.mxu0 0.0
        %542 = vmatpush2.msra.mxu0 0.0
        %543 = vmatprep.subr.mxu0 0.0
        %544 = vmatpush2.msra.mxu0 0.0
        %545 = vmatprep.subr.mxu0 0.0
        %546 = vmatpush2.msra.mxu0 0.0
        %547 = vmatprep.subr.mxu0 0.0
        %548 = vmatpush2.msra.mxu0 0.0
        %549 = vmatprep.subr.mxu0 0.0
        %550 = vmatpush2.msra.mxu0 0.0
        %551 = vmatprep.subr.mxu0 0.0
        %552 = vmatpush2.msra.mxu0 0.0
        %553 = vmatprep.subr.mxu0 0.0
        %554 = vmatpush2.msra.mxu0 0.0
        %555 = vmatprep.mubr.f32.mxu0 0.0
        %556 = vmatmul.mubr.f32.gmra.mxu0 %v401
        %v557 = vpop.f32.mrf.mxu0
        %v558 = vadd.f32 %v474, %v557
        %v559 = vpop.f32.mrf.mxu0
        %v560 = vadd.f32 %v478, %v559
        %561 = vmatprep.mubr.f32.mxu0 0.0
        %562 = vmatmul.mubr.f32.gmra.mxu0 %v402
        %v563 = vpop.f32.mrf.mxu0
        %v564 = vadd.f32 %v474, %v563
        %v565 = vpop.f32.mrf.mxu0
        %v566 = vadd.f32 %v478, %v565
        %567 = vmatprep.mubr.f32.mxu0 0.0
        %568 = vmatmul.mubr.f32.gmra.mxu0 %v403
        %v569 = vpop.f32.mrf.mxu0
        %v570 = vadd.f32 %v474, %v569
        %v571 = vpop.f32.mrf.mxu0
        %v572 = vadd.f32 %v478, %v571
        %573 = vmatprep.mubr.f32.mxu0 0.0
        %574 = vmatmul.mubr.f32.gmra.mxu0 %v404
        %v575 = vpop.f32.mrf.mxu0
        %v576 = vadd.f32 %v474, %v575
        %v577 = vpop.f32.mrf.mxu0
        %v578 = vadd.f32 %v478, %v577
        %579 = vdwg.mxu0
        %580 = vmatprep.subr.mxu0 %v468
        %581 = vmatpush1.msra.mxu0 %v467
        %582 = vmatprep.subr.mxu0 %v464
        %583 = vmatpush1.msra.mxu0 %v463
        %584 = vmatprep.subr.mxu0 %v460
        %585 = vmatpush1.msra.mxu0 %v459
        %586 = vmatprep.subr.mxu0 %v456
        %587 = vmatpush1.msra.mxu0 %v455
        %588 = vmatprep.subr.mxu0 %v452
        %589 = vmatpush1.msra.mxu0 %v451
        %590 = vmatprep.subr.mxu0 %v448
        %591 = vmatpush1.msra.mxu0 %v447
        %592 = vmatprep.subr.mxu0 %v444
        %593 = vmatpush1.msra.mxu0 %v443
        %594 = vmatprep.subr.mxu0 %v440
        %595 = vmatpush1.msra.mxu0 %v439
        %596 = vmatprep.subr.mxu0 %v436
        %597 = vmatpush1.msra.mxu0 %v435
        %598 = vmatprep.subr.mxu0 %v432
        %599 = vmatpush1.msra.mxu0 %v431
        %600 = vmatprep.subr.mxu0 %v428
        %601 = vmatpush1.msra.mxu0 %v427
        %602 = vmatprep.subr.mxu0 %v424
        %603 = vmatpush1.msra.mxu0 %v423
        %604 = vmatprep.subr.mxu0 %v420
        %605 = vmatpush1.msra.mxu0 %v419
        %606 = vmatprep.subr.mxu0 %v416
        %607 = vmatpush1.msra.mxu0 %v415
        %608 = vmatprep.subr.mxu0 %v412
        %609 = vmatpush1.msra.mxu0 %v411
        %610 = vmatprep.subr.mxu0 %v408
        %611 = vmatpush1.msra.mxu0 %v407
        %612 = vmatprep.subr.mxu0 0.0
        %613 = vmatpush2.msra.mxu0 0.0
        %614 = vmatprep.subr.mxu0 0.0
        %615 = vmatpush2.msra.mxu0 0.0
        %616 = vmatprep.subr.mxu0 0.0
        %617 = vmatpush2.msra.mxu0 0.0
        %618 = vmatprep.subr.mxu0 0.0
        %619 = vmatpush2.msra.mxu0 0.0
        %620 = vmatprep.subr.mxu0 0.0
        %621 = vmatpush2.msra.mxu0 0.0
        %622 = vmatprep.subr.mxu0 0.0
        %623 = vmatpush2.msra.mxu0 0.0
        %624 = vmatprep.subr.mxu0 0.0
        %625 = vmatpush2.msra.mxu0 0.0
        %626 = vmatprep.subr.mxu0 0.0
        %627 = vmatpush2.msra.mxu0 0.0
        %628 = vmatprep.subr.mxu0 0.0
        %629 = vmatpush2.msra.mxu0 0.0
        %630 = vmatprep.subr.mxu0 0.0
        %631 = vmatpush2.msra.mxu0 0.0
        %632 = vmatprep.subr.mxu0 0.0
        %633 = vmatpush2.msra.mxu0 0.0
        %634 = vmatprep.subr.mxu0 0.0
        %635 = vmatpush2.msra.mxu0 0.0
        %636 = vmatprep.subr.mxu0 0.0
        %637 = vmatpush2.msra.mxu0 0.0
        %638 = vmatprep.subr.mxu0 0.0
        %639 = vmatpush2.msra.mxu0 0.0
        %640 = vmatprep.subr.mxu0 0.0
        %641 = vmatpush2.msra.mxu0 0.0
        %642 = vmatprep.subr.mxu0 0.0
        %643 = vmatpush2.msra.mxu0 0.0
        %644 = vmatprep.mubr.f32.mxu0 0.0
        %645 = vmatmul.mubr.f32.gmra.mxu0 %v401
        %v646 = vpop.f32.mrf.mxu0
        %v647 = vadd.f32 %v482, %v646
        %v648 = vpop.f32.mrf.mxu0
        %v649 = vadd.f32 %v486, %v648
        %650 = vmatprep.mubr.f32.mxu0 0.0
        %651 = vmatmul.mubr.f32.gmra.mxu0 %v402
        %v652 = vpop.f32.mrf.mxu0
        %v653 = vadd.f32 %v482, %v652
        %v654 = vpop.f32.mrf.mxu0
        %v655 = vadd.f32 %v486, %v654
        %656 = vmatprep.mubr.f32.mxu0 0.0
        %657 = vmatmul.mubr.f32.gmra.mxu0 %v403
        %v658 = vpop.f32.mrf.mxu0
        %v659 = vadd.f32 %v482, %v658
        %v660 = vpop.f32.mrf.mxu0
        %v661 = vadd.f32 %v486, %v660
        %662 = vmatprep.mubr.f32.mxu0 0.0
        %663 = vmatmul.mubr.f32.gmra.mxu0 %v404
        %v664 = vpop.f32.mrf.mxu0
        %v665 = vadd.f32 %v482, %v664
        %v666 = vpop.f32.mrf.mxu0
        %v667 = vadd.f32 %v486, %v666
        %668 = vdwg.mxu0
        %669 = vst [vmem:[#allocation5] sm:$0xff] %v558
        %670 = vst [vmem:[#allocation5 + $0x8] sm:$0xff] %v560
        %671 = vst [vmem:[#allocation5 + $0x10] sm:$0xff] %v647
        %672 = vst [vmem:[#allocation5 + $0x18] sm:$0xff] %v649
        %673 = vst [vmem:[#allocation5 + $0x20] sm:$0xff] %v564
        %674 = vst [vmem:[#allocation5 + $0x28] sm:$0xff] %v566
        %675 = vst [vmem:[#allocation5 + $0x30] sm:$0xff] %v653
        %676 = vst [vmem:[#allocation5 + $0x38] sm:$0xff] %v655
        %677 = vst [vmem:[#allocation5 + $0x40] sm:$0xff] %v570
        %678 = vst [vmem:[#allocation5 + $0x48] sm:$0xff] %v572
        %679 = vst [vmem:[#allocation5 + $0x50] sm:$0xff] %v659
        %680 = vst [vmem:[#allocation5 + $0x58] sm:$0xff] %v661
        %681 = vst [vmem:[#allocation5 + $0x60] sm:$0xff] %v576
        %682 = vst [vmem:[#allocation5 + $0x68] sm:$0xff] %v578
        %683 = vst [vmem:[#allocation5 + $0x70] sm:$0xff] %v665
        %684 = vst [vmem:[#allocation5 + $0x78] sm:$0xff] %v667
        %v685 = vld [vmem:[#allocation2] sm:$0xff]
        %v686 = vld [vmem:[#allocation3] sm:$0xff]
        %s687 = smul.u32 0, 4
        %s688 = smul.addr %s687, 8
        %s689 = scalar_lea.vmem [#allocation5], %s688
        %v690 = vld [vmem:[%s689] sm:$0xff]
        %v691 = vld [vmem:[%s689 + $0x8] sm:$0xff]
        %v692 = vld [vmem:[%s689 + $0x10] sm:$0xff]
        %v693 = vld [vmem:[%s689 + $0x18] sm:$0xff]
        %v694 = vld [vmem:[#allocation8] sm:$0xff]
        %v695 = vld [vmem:[#allocation8 + $0x8] sm:$0xff]
        %v696 = vld [vmem:[#allocation8 + $0x10] sm:$0xff]
        %v697 = vld [vmem:[#allocation8 + $0x18] sm:$0xff]
        %v698 = vld [vmem:[#allocation8 + $0x20] sm:$0xff]
        %v699 = vld [vmem:[#allocation8 + $0x28] sm:$0xff]
        %v700 = vld [vmem:[#allocation8 + $0x30] sm:$0xff]
        %v701 = vld [vmem:[#allocation8 + $0x38] sm:$0xff]
        %v702 = vld [vmem:[#allocation8 + $0x40] sm:$0xff]
        %v703 = vld [vmem:[#allocation8 + $0x48] sm:$0xff]
        %v704 = vld [vmem:[#allocation8 + $0x50] sm:$0xff]
        %v705 = vld [vmem:[#allocation8 + $0x58] sm:$0xff]
        %v706 = vld [vmem:[#allocation8 + $0x60] sm:$0xff]
        %v707 = vld [vmem:[#allocation8 + $0x68] sm:$0xff]
        %v708 = vld [vmem:[#allocation8 + $0x70] sm:$0xff]
        %v709 = vld [vmem:[#allocation8 + $0x78] sm:$0xff]
        %v710 = vld [vmem:[#allocation8 + $0x80] sm:$0xff]
        %v711 = vld [vmem:[#allocation8 + $0x88] sm:$0xff]
        %v712 = vld [vmem:[#allocation8 + $0x90] sm:$0xff]
        %v713 = vld [vmem:[#allocation8 + $0x98] sm:$0xff]
        %v714 = vld [vmem:[#allocation8 + $0xa0] sm:$0xff]
        %v715 = vld [vmem:[#allocation8 + $0xa8] sm:$0xff]
        %v716 = vld [vmem:[#allocation8 + $0xb0] sm:$0xff]
        %v717 = vld [vmem:[#allocation8 + $0xb8] sm:$0xff]
        %v718 = vld [vmem:[#allocation8 + $0xc0] sm:$0xff]
        %v719 = vld [vmem:[#allocation8 + $0xc8] sm:$0xff]
        %v720 = vld [vmem:[#allocation8 + $0xd0] sm:$0xff]
        %v721 = vld [vmem:[#allocation8 + $0xd8] sm:$0xff]
        %v722 = vld [vmem:[#allocation8 + $0xe0] sm:$0xff]
        %v723 = vld [vmem:[#allocation8 + $0xe8] sm:$0xff]
        %v724 = vld [vmem:[#allocation8 + $0xf0] sm:$0xff]
        %v725 = vld [vmem:[#allocation8 + $0xf8] sm:$0xff]
        %v726 = vld [vmem:[#allocation8 + $0x100] sm:$0xff]
        %v727 = vld [vmem:[#allocation8 + $0x108] sm:$0xff]
        %v728 = vld [vmem:[#allocation8 + $0x110] sm:$0xff]
        %v729 = vld [vmem:[#allocation8 + $0x118] sm:$0xff]
        %v730 = vld [vmem:[#allocation8 + $0x120] sm:$0xff]
        %v731 = vld [vmem:[#allocation8 + $0x128] sm:$0xff]
        %v732 = vld [vmem:[#allocation8 + $0x130] sm:$0xff]
        %v733 = vld [vmem:[#allocation8 + $0x138] sm:$0xff]
        %v734 = vld [vmem:[#allocation8 + $0x140] sm:$0xff]
        %v735 = vld [vmem:[#allocation8 + $0x148] sm:$0xff]
        %v736 = vld [vmem:[#allocation8 + $0x150] sm:$0xff]
        %v737 = vld [vmem:[#allocation8 + $0x158] sm:$0xff]
        %v738 = vld [vmem:[#allocation8 + $0x160] sm:$0xff]
        %v739 = vld [vmem:[#allocation8 + $0x168] sm:$0xff]
        %v740 = vld [vmem:[#allocation8 + $0x170] sm:$0xff]
        %v741 = vld [vmem:[#allocation8 + $0x178] sm:$0xff]
        %v742 = vld [vmem:[#allocation8 + $0x180] sm:$0xff]
        %v743 = vld [vmem:[#allocation8 + $0x188] sm:$0xff]
        %v744 = vld [vmem:[#allocation8 + $0x190] sm:$0xff]
        %v745 = vld [vmem:[#allocation8 + $0x198] sm:$0xff]
        %v746 = vld [vmem:[#allocation8 + $0x1a0] sm:$0xff]
        %v747 = vld [vmem:[#allocation8 + $0x1a8] sm:$0xff]
        %v748 = vld [vmem:[#allocation8 + $0x1b0] sm:$0xff]
        %v749 = vld [vmem:[#allocation8 + $0x1b8] sm:$0xff]
        %v750 = vld [vmem:[#allocation8 + $0x1c0] sm:$0xff]
        %v751 = vld [vmem:[#allocation8 + $0x1c8] sm:$0xff]
        %v752 = vld [vmem:[#allocation8 + $0x1d0] sm:$0xff]
        %v753 = vld [vmem:[#allocation8 + $0x1d8] sm:$0xff]
        %v754 = vld [vmem:[#allocation8 + $0x1e0] sm:$0xff]
        %v755 = vld [vmem:[#allocation8 + $0x1e8] sm:$0xff]
        %v756 = vld [vmem:[#allocation8 + $0x1f0] sm:$0xff]
        %v757 = vld [vmem:[#allocation8 + $0x1f8] sm:$0xff]
        %758 = vmatprep.subr.mxu0 %v755
        %759 = vmatpush1.msra.mxu0 %v754
        %760 = vmatprep.subr.mxu0 %v751
        %761 = vmatpush1.msra.mxu0 %v750
        %762 = vmatprep.subr.mxu0 %v747
        %763 = vmatpush1.msra.mxu0 %v746
        %764 = vmatprep.subr.mxu0 %v743
        %765 = vmatpush1.msra.mxu0 %v742
        %766 = vmatprep.subr.mxu0 %v739
        %767 = vmatpush1.msra.mxu0 %v738
        %768 = vmatprep.subr.mxu0 %v735
        %769 = vmatpush1.msra.mxu0 %v734
        %770 = vmatprep.subr.mxu0 %v731
        %771 = vmatpush1.msra.mxu0 %v730
        %772 = vmatprep.subr.mxu0 %v727
        %773 = vmatpush1.msra.mxu0 %v726
        %774 = vmatprep.subr.mxu0 %v723
        %775 = vmatpush1.msra.mxu0 %v722
        %776 = vmatprep.subr.mxu0 %v719
        %777 = vmatpush1.msra.mxu0 %v718
        %778 = vmatprep.subr.mxu0 %v715
        %779 = vmatpush1.msra.mxu0 %v714
        %780 = vmatprep.subr.mxu0 %v711
        %781 = vmatpush1.msra.mxu0 %v710
        %782 = vmatprep.subr.mxu0 %v707
        %783 = vmatpush1.msra.mxu0 %v706
        %784 = vmatprep.subr.mxu0 %v703
        %785 = vmatpush1.msra.mxu0 %v702
        %786 = vmatprep.subr.mxu0 %v699
        %787 = vmatpush1.msra.mxu0 %v698
        %788 = vmatprep.subr.mxu0 %v695
        %789 = vmatpush1.msra.mxu0 %v694
        %790 = vmatprep.subr.mxu0 0.0
        %791 = vmatpush2.msra.mxu0 0.0
        %792 = vmatprep.subr.mxu0 0.0
        %793 = vmatpush2.msra.mxu0 0.0
        %794 = vmatprep.subr.mxu0 0.0
        %795 = vmatpush2.msra.mxu0 0.0
        %796 = vmatprep.subr.mxu0 0.0
        %797 = vmatpush2.msra.mxu0 0.0
        %798 = vmatprep.subr.mxu0 0.0
        %799 = vmatpush2.msra.mxu0 0.0
        %800 = vmatprep.subr.mxu0 0.0
        %801 = vmatpush2.msra.mxu0 0.0
        %802 = vmatprep.subr.mxu0 0.0
        %803 = vmatpush2.msra.mxu0 0.0
        %804 = vmatprep.subr.mxu0 0.0
        %805 = vmatpush2.msra.mxu0 0.0
        %806 = vmatprep.subr.mxu0 0.0
        %807 = vmatpush2.msra.mxu0 0.0
        %808 = vmatprep.subr.mxu0 0.0
        %809 = vmatpush2.msra.mxu0 0.0
        %810 = vmatprep.subr.mxu0 0.0
        %811 = vmatpush2.msra.mxu0 0.0
        %812 = vmatprep.subr.mxu0 0.0
        %813 = vmatpush2.msra.mxu0 0.0
        %814 = vmatprep.subr.mxu0 0.0
        %815 = vmatpush2.msra.mxu0 0.0
        %816 = vmatprep.subr.mxu0 0.0
        %817 = vmatpush2.msra.mxu0 0.0
        %818 = vmatprep.subr.mxu0 0.0
        %819 = vmatpush2.msra.mxu0 0.0
        %820 = vmatprep.subr.mxu0 0.0
        %821 = vmatpush2.msra.mxu0 0.0
        %822 = vmatprep.mubr.f32.mxu0 0.0
        %823 = vmatmul.mubr.f32.gmra.mxu0 %v685
        %v824 = vpop.f32.mrf.mxu0
        %v825 = vadd.f32 0.0, %v824
        %v826 = vpop.f32.mrf.mxu0
        %v827 = vadd.f32 0.0, %v826
        %828 = vdwg.mxu0
        %829 = vmatprep.subr.mxu0 %v757
        %830 = vmatpush1.msra.mxu0 %v756
        %831 = vmatprep.subr.mxu0 %v753
        %832 = vmatpush1.msra.mxu0 %v752
        %833 = vmatprep.subr.mxu0 %v749
        %834 = vmatpush1.msra.mxu0 %v748
        %835 = vmatprep.subr.mxu0 %v745
        %836 = vmatpush1.msra.mxu0 %v744
        %837 = vmatprep.subr.mxu0 %v741
        %838 = vmatpush1.msra.mxu0 %v740
        %839 = vmatprep.subr.mxu0 %v737
        %840 = vmatpush1.msra.mxu0 %v736
        %841 = vmatprep.subr.mxu0 %v733
        %842 = vmatpush1.msra.mxu0 %v732
        %843 = vmatprep.subr.mxu0 %v729
        %844 = vmatpush1.msra.mxu0 %v728
        %845 = vmatprep.subr.mxu0 %v725
        %846 = vmatpush1.msra.mxu0 %v724
        %847 = vmatprep.subr.mxu0 %v721
        %848 = vmatpush1.msra.mxu0 %v720
        %849 = vmatprep.subr.mxu0 %v717
        %850 = vmatpush1.msra.mxu0 %v716
        %851 = vmatprep.subr.mxu0 %v713
        %852 = vmatpush1.msra.mxu0 %v712
        %853 = vmatprep.subr.mxu0 %v709
        %854 = vmatpush1.msra.mxu0 %v708
        %855 = vmatprep.subr.mxu0 %v705
        %856 = vmatpush1.msra.mxu0 %v704
        %857 = vmatprep.subr.mxu0 %v701
        %858 = vmatpush1.msra.mxu0 %v700
        %859 = vmatprep.subr.mxu0 %v697
        %860 = vmatpush1.msra.mxu0 %v696
        %861 = vmatprep.subr.mxu0 0.0
        %862 = vmatpush2.msra.mxu0 0.0
        %863 = vmatprep.subr.mxu0 0.0
        %864 = vmatpush2.msra.mxu0 0.0
        %865 = vmatprep.subr.mxu0 0.0
        %866 = vmatpush2.msra.mxu0 0.0
        %867 = vmatprep.subr.mxu0 0.0
        %868 = vmatpush2.msra.mxu0 0.0
        %869 = vmatprep.subr.mxu0 0.0
        %870 = vmatpush2.msra.mxu0 0.0
        %871 = vmatprep.subr.mxu0 0.0
        %872 = vmatpush2.msra.mxu0 0.0
        %873 = vmatprep.subr.mxu0 0.0
        %874 = vmatpush2.msra.mxu0 0.0
        %875 = vmatprep.subr.mxu0 0.0
        %876 = vmatpush2.msra.mxu0 0.0
        %877 = vmatprep.subr.mxu0 0.0
        %878 = vmatpush2.msra.mxu0 0.0
        %879 = vmatprep.subr.mxu0 0.0
        %880 = vmatpush2.msra.mxu0 0.0
        %881 = vmatprep.subr.mxu0 0.0
        %882 = vmatpush2.msra.mxu0 0.0
        %883 = vmatprep.subr.mxu0 0.0
        %884 = vmatpush2.msra.mxu0 0.0
        %885 = vmatprep.subr.mxu0 0.0
        %886 = vmatpush2.msra.mxu0 0.0
        %887 = vmatprep.subr.mxu0 0.0
        %888 = vmatpush2.msra.mxu0 0.0
        %889 = vmatprep.subr.mxu0 0.0
        %890 = vmatpush2.msra.mxu0 0.0
        %891 = vmatprep.subr.mxu0 0.0
        %892 = vmatpush2.msra.mxu0 0.0
        %893 = vmatprep.mubr.f32.mxu0 0.0
        %894 = vmatmul.mubr.f32.gmra.mxu0 %v685
        %v895 = vpop.f32.mrf.mxu0
        %v896 = vadd.f32 0.0, %v895
        %v897 = vpop.f32.mrf.mxu0
        %v898 = vadd.f32 0.0, %v897
        %899 = vdwg.mxu0
        %v900 = vadd.f32 %v690, %v825
        %v901 = vadd.f32 %v691, %v827
        %v902 = vadd.f32 %v692, %v896
        %v903 = vadd.f32 %v693, %v898
        %v904 = vxor.u32 %v900, 2147483648
        %v905 = vxor.u32 %v901, 2147483648
        %v906 = vxor.u32 %v902, 2147483648
        %v907 = vmul.f32 %v904, 1.442695
        %v908 = vpow.pop %v907
        %v909 = vmul.f32 %v905, 1.442695
        %v910 = vpow.pop %v909
        %v911 = vmul.f32 %v906, 1.442695
        %v912 = vpow.pop %v911
        %v913 = vadd.f32 %v908, 1.0
        %v914 = vadd.f32 %v910, 1.0
        %v915 = vadd.f32 %v912, 1.0
        %v916 = vrcp.pop %v913
        %v917 = vmul.f32 1.0, %v916
        %v918 = vrcp.pop %v914
        %v919 = vmul.f32 1.0, %v918
        %v920 = vrcp.pop %v915
        %v921 = vmul.f32 1.0, %v920
        %v922 = vtanh.pop %v903
        %v923 = vmul.f32 %v919, %v686
        %v924 = vmul.f32 %v917, %v922
        %v925 = vadd.f32 %v923, %v924
        %v926 = vtanh.pop %v925
        %v927 = vmul.f32 %v921, %v926
        %928 = vst [vmem:[#allocation4] sm:$0xff] %v927
        %s929 = smul.u32 1, 4
        %s930 = smul.addr %s929, 8
        %s931 = scalar_lea.vmem [#allocation5], %s930
        %v932 = vld [vmem:[%s931] sm:$0xff]
        %v933 = vld [vmem:[%s931 + $0x8] sm:$0xff]
        %v934 = vld [vmem:[%s931 + $0x10] sm:$0xff]
        %v935 = vld [vmem:[%s931 + $0x18] sm:$0xff]
        %v936 = vld [vmem:[#allocation8] sm:$0xff]
        %v937 = vld [vmem:[#allocation8 + $0x8] sm:$0xff]
        %v938 = vld [vmem:[#allocation8 + $0x10] sm:$0xff]
        %v939 = vld [vmem:[#allocation8 + $0x18] sm:$0xff]
        %v940 = vld [vmem:[#allocation8 + $0x20] sm:$0xff]
        %v941 = vld [vmem:[#allocation8 + $0x28] sm:$0xff]
        %v942 = vld [vmem:[#allocation8 + $0x30] sm:$0xff]
        %v943 = vld [vmem:[#allocation8 + $0x38] sm:$0xff]
        %v944 = vld [vmem:[#allocation8 + $0x40] sm:$0xff]
        %v945 = vld [vmem:[#allocation8 + $0x48] sm:$0xff]
        %v946 = vld [vmem:[#allocation8 + $0x50] sm:$0xff]
        %v947 = vld [vmem:[#allocation8 + $0x58] sm:$0xff]
        %v948 = vld [vmem:[#allocation8 + $0x60] sm:$0xff]
        %v949 = vld [vmem:[#allocation8 + $0x68] sm:$0xff]
        %v950 = vld [vmem:[#allocation8 + $0x70] sm:$0xff]
        %v951 = vld [vmem:[#allocation8 + $0x78] sm:$0xff]
        %v952 = vld [vmem:[#allocation8 + $0x80] sm:$0xff]
        %v953 = vld [vmem:[#allocation8 + $0x88] sm:$0xff]
        %v954 = vld [vmem:[#allocation8 + $0x90] sm:$0xff]
        %v955 = vld [vmem:[#allocation8 + $0x98] sm:$0xff]
        %v956 = vld [vmem:[#allocation8 + $0xa0] sm:$0xff]
        %v957 = vld [vmem:[#allocation8 + $0xa8] sm:$0xff]
        %v958 = vld [vmem:[#allocation8 + $0xb0] sm:$0xff]
        %v959 = vld [vmem:[#allocation8 + $0xb8] sm:$0xff]
        %v960 = vld [vmem:[#allocation8 + $0xc0] sm:$0xff]
        %v961 = vld [vmem:[#allocation8 + $0xc8] sm:$0xff]
        %v962 = vld [vmem:[#allocation8 + $0xd0] sm:$0xff]
        %v963 = vld [vmem:[#allocation8 + $0xd8] sm:$0xff]
        %v964 = vld [vmem:[#allocation8 + $0xe0] sm:$0xff]
        %v965 = vld [vmem:[#allocation8 + $0xe8] sm:$0xff]
        %v966 = vld [vmem:[#allocation8 + $0xf0] sm:$0xff]
        %v967 = vld [vmem:[#allocation8 + $0xf8] sm:$0xff]
        %v968 = vld [vmem:[#allocation8 + $0x100] sm:$0xff]
        %v969 = vld [vmem:[#allocation8 + $0x108] sm:$0xff]
        %v970 = vld [vmem:[#allocation8 + $0x110] sm:$0xff]
        %v971 = vld [vmem:[#allocation8 + $0x118] sm:$0xff]
        %v972 = vld [vmem:[#allocation8 + $0x120] sm:$0xff]
        %v973 = vld [vmem:[#allocation8 + $0x128] sm:$0xff]
        %v974 = vld [vmem:[#allocation8 + $0x130] sm:$0xff]
        %v975 = vld [vmem:[#allocation8 + $0x138] sm:$0xff]
        %v976 = vld [vmem:[#allocation8 + $0x140] sm:$0xff]
        %v977 = vld [vmem:[#allocation8 + $0x148] sm:$0xff]
        %v978 = vld [vmem:[#allocation8 + $0x150] sm:$0xff]
        %v979 = vld [vmem:[#allocation8 + $0x158] sm:$0xff]
        %v980 = vld [vmem:[#allocation8 + $0x160] sm:$0xff]
        %v981 = vld [vmem:[#allocation8 + $0x168] sm:$0xff]
        %v982 = vld [vmem:[#allocation8 + $0x170] sm:$0xff]
        %v983 = vld [vmem:[#allocation8 + $0x178] sm:$0xff]
        %v984 = vld [vmem:[#allocation8 + $0x180] sm:$0xff]
        %v985 = vld [vmem:[#allocation8 + $0x188] sm:$0xff]
        %v986 = vld [vmem:[#allocation8 + $0x190] sm:$0xff]
        %v987 = vld [vmem:[#allocation8 + $0x198] sm:$0xff]
        %v988 = vld [vmem:[#allocation8 + $0x1a0] sm:$0xff]
        %v989 = vld [vmem:[#allocation8 + $0x1a8] sm:$0xff]
        %v990 = vld [vmem:[#allocation8 + $0x1b0] sm:$0xff]
        %v991 = vld [vmem:[#allocation8 + $0x1b8] sm:$0xff]
        %v992 = vld [vmem:[#allocation8 + $0x1c0] sm:$0xff]
        %v993 = vld [vmem:[#allocation8 + $0x1c8] sm:$0xff]
        %v994 = vld [vmem:[#allocation8 + $0x1d0] sm:$0xff]
        %v995 = vld [vmem:[#allocation8 + $0x1d8] sm:$0xff]
        %v996 = vld [vmem:[#allocation8 + $0x1e0] sm:$0xff]
        %v997 = vld [vmem:[#allocation8 + $0x1e8] sm:$0xff]
        %v998 = vld [vmem:[#allocation8 + $0x1f0] sm:$0xff]
        %v999 = vld [vmem:[#allocation8 + $0x1f8] sm:$0xff]
        %1000 = vmatprep.subr.mxu0 %v997
        %1001 = vmatpush1.msra.mxu0 %v996
        %1002 = vmatprep.subr.mxu0 %v993
        %1003 = vmatpush1.msra.mxu0 %v992
        %1004 = vmatprep.subr.mxu0 %v989
        %1005 = vmatpush1.msra.mxu0 %v988
        %1006 = vmatprep.subr.mxu0 %v985
        %1007 = vmatpush1.msra.mxu0 %v984
        %1008 = vmatprep.subr.mxu0 %v981
        %1009 = vmatpush1.msra.mxu0 %v980
        %1010 = vmatprep.subr.mxu0 %v977
        %1011 = vmatpush1.msra.mxu0 %v976
        %1012 = vmatprep.subr.mxu0 %v973
        %1013 = vmatpush1.msra.mxu0 %v972
        %1014 = vmatprep.subr.mxu0 %v969
        %1015 = vmatpush1.msra.mxu0 %v968
        %1016 = vmatprep.subr.mxu0 %v965
        %1017 = vmatpush1.msra.mxu0 %v964
        %1018 = vmatprep.subr.mxu0 %v961
        %1019 = vmatpush1.msra.mxu0 %v960
        %1020 = vmatprep.subr.mxu0 %v957
        %1021 = vmatpush1.msra.mxu0 %v956
        %1022 = vmatprep.subr.mxu0 %v953
        %1023 = vmatpush1.msra.mxu0 %v952
        %1024 = vmatprep.subr.mxu0 %v949
        %1025 = vmatpush1.msra.mxu0 %v948
        %1026 = vmatprep.subr.mxu0 %v945
        %1027 = vmatpush1.msra.mxu0 %v944
        %1028 = vmatprep.subr.mxu0 %v941
        %1029 = vmatpush1.msra.mxu0 %v940
        %1030 = vmatprep.subr.mxu0 %v937
        %1031 = vmatpush1.msra.mxu0 %v936
        %1032 = vmatprep.subr.mxu0 0.0
        %1033 = vmatpush2.msra.mxu0 0.0
        %1034 = vmatprep.subr.mxu0 0.0
        %1035 = vmatpush2.msra.mxu0 0.0
        %1036 = vmatprep.subr.mxu0 0.0
        %1037 = vmatpush2.msra.mxu0 0.0
        %1038 = vmatprep.subr.mxu0 0.0
        %1039 = vmatpush2.msra.mxu0 0.0
        %1040 = vmatprep.subr.mxu0 0.0
        %1041 = vmatpush2.msra.mxu0 0.0
        %1042 = vmatprep.subr.mxu0 0.0
        %1043 = vmatpush2.msra.mxu0 0.0
        %1044 = vmatprep.subr.mxu0 0.0
        %1045 = vmatpush2.msra.mxu0 0.0
        %1046 = vmatprep.subr.mxu0 0.0
        %1047 = vmatpush2.msra.mxu0 0.0
        %1048 = vmatprep.subr.mxu0 0.0
        %1049 = vmatpush2.msra.mxu0 0.0
        %1050 = vmatprep.subr.mxu0 0.0
        %1051 = vmatpush2.msra.mxu0 0.0
        %1052 = vmatprep.subr.mxu0 0.0
        %1053 = vmatpush2.msra.mxu0 0.0
        %1054 = vmatprep.subr.mxu0 0.0
        %1055 = vmatpush2.msra.mxu0 0.0
        %1056 = vmatprep.subr.mxu0 0.0
        %1057 = vmatpush2.msra.mxu0 0.0
        %1058 = vmatprep.subr.mxu0 0.0
        %1059 = vmatpush2.msra.mxu0 0.0
        %1060 = vmatprep.subr.mxu0 0.0
        %1061 = vmatpush2.msra.mxu0 0.0
        %1062 = vmatprep.subr.mxu0 0.0
        %1063 = vmatpush2.msra.mxu0 0.0
        %1064 = vmatprep.mubr.f32.mxu0 0.0
        %1065 = vmatmul.mubr.f32.gmra.mxu0 %v927
        %v1066 = vpop.f32.mrf.mxu0
        %v1067 = vadd.f32 0.0, %v1066
        %v1068 = vpop.f32.mrf.mxu0
        %v1069 = vadd.f32 0.0, %v1068
        %1070 = vdwg.mxu0
        %1071 = vmatprep.subr.mxu0 %v999
        %1072 = vmatpush1.msra.mxu0 %v998
        %1073 = vmatprep.subr.mxu0 %v995
        %1074 = vmatpush1.msra.mxu0 %v994
        %1075 = vmatprep.subr.mxu0 %v991
        %1076 = vmatpush1.msra.mxu0 %v990
        %1077 = vmatprep.subr.mxu0 %v987
        %1078 = vmatpush1.msra.mxu0 %v986
        %1079 = vmatprep.subr.mxu0 %v983
        %1080 = vmatpush1.msra.mxu0 %v982
        %1081 = vmatprep.subr.mxu0 %v979
        %1082 = vmatpush1.msra.mxu0 %v978
        %1083 = vmatprep.subr.mxu0 %v975
        %1084 = vmatpush1.msra.mxu0 %v974
        %1085 = vmatprep.subr.mxu0 %v971
        %1086 = vmatpush1.msra.mxu0 %v970
        %1087 = vmatprep.subr.mxu0 %v967
        %1088 = vmatpush1.msra.mxu0 %v966
        %1089 = vmatprep.subr.mxu0 %v963
        %1090 = vmatpush1.msra.mxu0 %v962
        %1091 = vmatprep.subr.mxu0 %v959
        %1092 = vmatpush1.msra.mxu0 %v958
        %1093 = vmatprep.subr.mxu0 %v955
        %1094 = vmatpush1.msra.mxu0 %v954
        %1095 = vmatprep.subr.mxu0 %v951
        %1096 = vmatpush1.msra.mxu0 %v950
        %1097 = vmatprep.subr.mxu0 %v947
        %1098 = vmatpush1.msra.mxu0 %v946
        %1099 = vmatprep.subr.mxu0 %v943
        %1100 = vmatpush1.msra.mxu0 %v942
        %1101 = vmatprep.subr.mxu0 %v939
        %1102 = vmatpush1.msra.mxu0 %v938
        %1103 = vmatprep.subr.mxu0 0.0
        %1104 = vmatpush2.msra.mxu0 0.0
        %1105 = vmatprep.subr.mxu0 0.0
        %1106 = vmatpush2.msra.mxu0 0.0
        %1107 = vmatprep.subr.mxu0 0.0
        %1108 = vmatpush2.msra.mxu0 0.0
        %1109 = vmatprep.subr.mxu0 0.0
        %1110 = vmatpush2.msra.mxu0 0.0
        %1111 = vmatprep.subr.mxu0 0.0
        %1112 = vmatpush2.msra.mxu0 0.0
        %1113 = vmatprep.subr.mxu0 0.0
        %1114 = vmatpush2.msra.mxu0 0.0
        %1115 = vmatprep.subr.mxu0 0.0
        %1116 = vmatpush2.msra.mxu0 0.0
        %1117 = vmatprep.subr.mxu0 0.0
        %1118 = vmatpush2.msra.mxu0 0.0
        %1119 = vmatprep.subr.mxu0 0.0
        %1120 = vmatpush2.msra.mxu0 0.0
        %1121 = vmatprep.subr.mxu0 0.0
        %1122 = vmatpush2.msra.mxu0 0.0
        %1123 = vmatprep.subr.mxu0 0.0
        %1124 = vmatpush2.msra.mxu0 0.0
        %1125 = vmatprep.subr.mxu0 0.0
        %1126 = vmatpush2.msra.mxu0 0.0
        %1127 = vmatprep.subr.mxu0 0.0
        %1128 = vmatpush2.msra.mxu0 0.0
        %1129 = vmatprep.subr.mxu0 0.0
        %1130 = vmatpush2.msra.mxu0 0.0
        %1131 = vmatprep.subr.mxu0 0.0
        %1132 = vmatpush2.msra.mxu0 0.0
        %1133 = vmatprep.subr.mxu0 0.0
        %1134 = vmatpush2.msra.mxu0 0.0
        %1135 = vmatprep.mubr.f32.mxu0 0.0
        %1136 = vmatmul.mubr.f32.gmra.mxu0 %v927
        %v1137 = vpop.f32.mrf.mxu0
        %v1138 = vadd.f32 0.0, %v1137
        %v1139 = vpop.f32.mrf.mxu0
        %v1140 = vadd.f32 0.0, %v1139
        %1141 = vdwg.mxu0
        %v1142 = vadd.f32 %v932, %v1067
        %v1143 = vadd.f32 %v933, %v1069
        %v1144 = vadd.f32 %v934, %v1138
        %v1145 = vadd.f32 %v935, %v1140
        %v1146 = vxor.u32 %v1142, 2147483648
        %v1147 = vxor.u32 %v1143, 2147483648
        %v1148 = vxor.u32 %v1144, 2147483648
        %v1149 = vmul.f32 %v1146, 1.442695
        %v1150 = vpow.pop %v1149
        %v1151 = vmul.f32 %v1147, 1.442695
        %v1152 = vpow.pop %v1151
        %v1153 = vmul.f32 %v1148, 1.442695
        %v1154 = vpow.pop %v1153
        %v1155 = vadd.f32 %v1150, 1.0
        %v1156 = vadd.f32 %v1152, 1.0
        %v1157 = vadd.f32 %v1154, 1.0
        %v1158 = vrcp.pop %v1155
        %v1159 = vmul.f32 1.0, %v1158
        %v1160 = vrcp.pop %v1156
        %v1161 = vmul.f32 1.0, %v1160
        %v1162 = vrcp.pop %v1157
        %v1163 = vmul.f32 1.0, %v1162
        %v1164 = vtanh.pop %v1145
        %v1165 = vmul.f32 %v1161, %v925
        %v1166 = vmul.f32 %v1159, %v1164
        %v1167 = vadd.f32 %v1165, %v1166
        %v1168 = vtanh.pop %v1167
        %v1169 = vmul.f32 %v1163, %v1168
        %s1170 = scalar_lea.vmem [#allocation4], 8
        %1171 = vst [vmem:[%s1170] sm:$0xff] %v1169
        %s1172 = smul.u32 2, 4
        %s1173 = smul.addr %s1172, 8
        %s1174 = scalar_lea.vmem [#allocation5], %s1173
        %v1175 = vld [vmem:[%s1174] sm:$0xff]
        %v1176 = vld [vmem:[%s1174 + $0x8] sm:$0xff]
        %v1177 = vld [vmem:[%s1174 + $0x10] sm:$0xff]
        %v1178 = vld [vmem:[%s1174 + $0x18] sm:$0xff]
        %v1179 = vld [vmem:[#allocation8] sm:$0xff]
        %v1180 = vld [vmem:[#allocation8 + $0x8] sm:$0xff]
        %v1181 = vld [vmem:[#allocation8 + $0x10] sm:$0xff]
        %v1182 = vld [vmem:[#allocation8 + $0x18] sm:$0xff]
        %v1183 = vld [vmem:[#allocation8 + $0x20] sm:$0xff]
        %v1184 = vld [vmem:[#allocation8 + $0x28] sm:$0xff]
        %v1185 = vld [vmem:[#allocation8 + $0x30] sm:$0xff]
        %v1186 = vld [vmem:[#allocation8 + $0x38] sm:$0xff]
        %v1187 = vld [vmem:[#allocation8 + $0x40] sm:$0xff]
        %v1188 = vld [vmem:[#allocation8 + $0x48] sm:$0xff]
        %v1189 = vld [vmem:[#allocation8 + $0x50] sm:$0xff]
        %v1190 = vld [vmem:[#allocation8 + $0x58] sm:$0xff]
        %v1191 = vld [vmem:[#allocation8 + $0x60] sm:$0xff]
        %v1192 = vld [vmem:[#allocation8 + $0x68] sm:$0xff]
        %v1193 = vld [vmem:[#allocation8 + $0x70] sm:$0xff]
        %v1194 = vld [vmem:[#allocation8 + $0x78] sm:$0xff]
        %v1195 = vld [vmem:[#allocation8 + $0x80] sm:$0xff]
        %v1196 = vld [vmem:[#allocation8 + $0x88] sm:$0xff]
        %v1197 = vld [vmem:[#allocation8 + $0x90] sm:$0xff]
        %v1198 = vld [vmem:[#allocation8 + $0x98] sm:$0xff]
        %v1199 = vld [vmem:[#allocation8 + $0xa0] sm:$0xff]
        %v1200 = vld [vmem:[#allocation8 + $0xa8] sm:$0xff]
        %v1201 = vld [vmem:[#allocation8 + $0xb0] sm:$0xff]
        %v1202 = vld [vmem:[#allocation8 + $0xb8] sm:$0xff]
        %v1203 = vld [vmem:[#allocation8 + $0xc0] sm:$0xff]
        %v1204 = vld [vmem:[#allocation8 + $0xc8] sm:$0xff]
        %v1205 = vld [vmem:[#allocation8 + $0xd0] sm:$0xff]
        %v1206 = vld [vmem:[#allocation8 + $0xd8] sm:$0xff]
        %v1207 = vld [vmem:[#allocation8 + $0xe0] sm:$0xff]
        %v1208 = vld [vmem:[#allocation8 + $0xe8] sm:$0xff]
        %v1209 = vld [vmem:[#allocation8 + $0xf0] sm:$0xff]
        %v1210 = vld [vmem:[#allocation8 + $0xf8] sm:$0xff]
        %v1211 = vld [vmem:[#allocation8 + $0x100] sm:$0xff]
        %v1212 = vld [vmem:[#allocation8 + $0x108] sm:$0xff]
        %v1213 = vld [vmem:[#allocation8 + $0x110] sm:$0xff]
        %v1214 = vld [vmem:[#allocation8 + $0x118] sm:$0xff]
        %v1215 = vld [vmem:[#allocation8 + $0x120] sm:$0xff]
        %v1216 = vld [vmem:[#allocation8 + $0x128] sm:$0xff]
        %v1217 = vld [vmem:[#allocation8 + $0x130] sm:$0xff]
        %v1218 = vld [vmem:[#allocation8 + $0x138] sm:$0xff]
        %v1219 = vld [vmem:[#allocation8 + $0x140] sm:$0xff]
        %v1220 = vld [vmem:[#allocation8 + $0x148] sm:$0xff]
        %v1221 = vld [vmem:[#allocation8 + $0x150] sm:$0xff]
        %v1222 = vld [vmem:[#allocation8 + $0x158] sm:$0xff]
        %v1223 = vld [vmem:[#allocation8 + $0x160] sm:$0xff]
        %v1224 = vld [vmem:[#allocation8 + $0x168] sm:$0xff]
        %v1225 = vld [vmem:[#allocation8 + $0x170] sm:$0xff]
        %v1226 = vld [vmem:[#allocation8 + $0x178] sm:$0xff]
        %v1227 = vld [vmem:[#allocation8 + $0x180] sm:$0xff]
        %v1228 = vld [vmem:[#allocation8 + $0x188] sm:$0xff]
        %v1229 = vld [vmem:[#allocation8 + $0x190] sm:$0xff]
        %v1230 = vld [vmem:[#allocation8 + $0x198] sm:$0xff]
        %v1231 = vld [vmem:[#allocation8 + $0x1a0] sm:$0xff]
        %v1232 = vld [vmem:[#allocation8 + $0x1a8] sm:$0xff]
        %v1233 = vld [vmem:[#allocation8 + $0x1b0] sm:$0xff]
        %v1234 = vld [vmem:[#allocation8 + $0x1b8] sm:$0xff]
        %v1235 = vld [vmem:[#allocation8 + $0x1c0] sm:$0xff]
        %v1236 = vld [vmem:[#allocation8 + $0x1c8] sm:$0xff]
        %v1237 = vld [vmem:[#allocation8 + $0x1d0] sm:$0xff]
        %v1238 = vld [vmem:[#allocation8 + $0x1d8] sm:$0xff]
        %v1239 = vld [vmem:[#allocation8 + $0x1e0] sm:$0xff]
        %v1240 = vld [vmem:[#allocation8 + $0x1e8] sm:$0xff]
        %v1241 = vld [vmem:[#allocation8 + $0x1f0] sm:$0xff]
        %v1242 = vld [vmem:[#allocation8 + $0x1f8] sm:$0xff]
        %1243 = vmatprep.subr.mxu0 %v1240
        %1244 = vmatpush1.msra.mxu0 %v1239
        %1245 = vmatprep.subr.mxu0 %v1236
        %1246 = vmatpush1.msra.mxu0 %v1235
        %1247 = vmatprep.subr.mxu0 %v1232
        %1248 = vmatpush1.msra.mxu0 %v1231
        %1249 = vmatprep.subr.mxu0 %v1228
        %1250 = vmatpush1.msra.mxu0 %v1227
        %1251 = vmatprep.subr.mxu0 %v1224
        %1252 = vmatpush1.msra.mxu0 %v1223
        %1253 = vmatprep.subr.mxu0 %v1220
        %1254 = vmatpush1.msra.mxu0 %v1219
        %1255 = vmatprep.subr.mxu0 %v1216
        %1256 = vmatpush1.msra.mxu0 %v1215
        %1257 = vmatprep.subr.mxu0 %v1212
        %1258 = vmatpush1.msra.mxu0 %v1211
        %1259 = vmatprep.subr.mxu0 %v1208
        %1260 = vmatpush1.msra.mxu0 %v1207
        %1261 = vmatprep.subr.mxu0 %v1204
        %1262 = vmatpush1.msra.mxu0 %v1203
        %1263 = vmatprep.subr.mxu0 %v1200
        %1264 = vmatpush1.msra.mxu0 %v1199
        %1265 = vmatprep.subr.mxu0 %v1196
        %1266 = vmatpush1.msra.mxu0 %v1195
        %1267 = vmatprep.subr.mxu0 %v1192
        %1268 = vmatpush1.msra.mxu0 %v1191
        %1269 = vmatprep.subr.mxu0 %v1188
        %1270 = vmatpush1.msra.mxu0 %v1187
        %1271 = vmatprep.subr.mxu0 %v1184
        %1272 = vmatpush1.msra.mxu0 %v1183
        %1273 = vmatprep.subr.mxu0 %v1180
        %1274 = vmatpush1.msra.mxu0 %v1179
        %1275 = vmatprep.subr.mxu0 0.0
        %1276 = vmatpush2.msra.mxu0 0.0
        %1277 = vmatprep.subr.mxu0 0.0
        %1278 = vmatpush2.msra.mxu0 0.0
        %1279 = vmatprep.subr.mxu0 0.0
        %1280 = vmatpush2.msra.mxu0 0.0
        %1281 = vmatprep.subr.mxu0 0.0
        %1282 = vmatpush2.msra.mxu0 0.0
        %1283 = vmatprep.subr.mxu0 0.0
        %1284 = vmatpush2.msra.mxu0 0.0
        %1285 = vmatprep.subr.mxu0 0.0
        %1286 = vmatpush2.msra.mxu0 0.0
        %1287 = vmatprep.subr.mxu0 0.0
        %1288 = vmatpush2.msra.mxu0 0.0
        %1289 = vmatprep.subr.mxu0 0.0
        %1290 = vmatpush2.msra.mxu0 0.0
        %1291 = vmatprep.subr.mxu0 0.0
        %1292 = vmatpush2.msra.mxu0 0.0
        %1293 = vmatprep.subr.mxu0 0.0
        %1294 = vmatpush2.msra.mxu0 0.0
        %1295 = vmatprep.subr.mxu0 0.0
        %1296 = vmatpush2.msra.mxu0 0.0
        %1297 = vmatprep.subr.mxu0 0.0
        %1298 = vmatpush2.msra.mxu0 0.0
        %1299 = vmatprep.subr.mxu0 0.0
        %1300 = vmatpush2.msra.mxu0 0.0
        %1301 = vmatprep.subr.mxu0 0.0
        %1302 = vmatpush2.msra.mxu0 0.0
        %1303 = vmatprep.subr.mxu0 0.0
        %1304 = vmatpush2.msra.mxu0 0.0
        %1305 = vmatprep.subr.mxu0 0.0
        %1306 = vmatpush2.msra.mxu0 0.0
        %1307 = vmatprep.mubr.f32.mxu0 0.0
        %1308 = vmatmul.mubr.f32.gmra.mxu0 %v1169
        %v1309 = vpop.f32.mrf.mxu0
        %v1310 = vadd.f32 0.0, %v1309
        %v1311 = vpop.f32.mrf.mxu0
        %v1312 = vadd.f32 0.0, %v1311
        %1313 = vdwg.mxu0
        %1314 = vmatprep.subr.mxu0 %v1242
        %1315 = vmatpush1.msra.mxu0 %v1241
        %1316 = vmatprep.subr.mxu0 %v1238
        %1317 = vmatpush1.msra.mxu0 %v1237
        %1318 = vmatprep.subr.mxu0 %v1234
        %1319 = vmatpush1.msra.mxu0 %v1233
        %1320 = vmatprep.subr.mxu0 %v1230
        %1321 = vmatpush1.msra.mxu0 %v1229
        %1322 = vmatprep.subr.mxu0 %v1226
        %1323 = vmatpush1.msra.mxu0 %v1225
        %1324 = vmatprep.subr.mxu0 %v1222
        %1325 = vmatpush1.msra.mxu0 %v1221
        %1326 = vmatprep.subr.mxu0 %v1218
        %1327 = vmatpush1.msra.mxu0 %v1217
        %1328 = vmatprep.subr.mxu0 %v1214
        %1329 = vmatpush1.msra.mxu0 %v1213
        %1330 = vmatprep.subr.mxu0 %v1210
        %1331 = vmatpush1.msra.mxu0 %v1209
        %1332 = vmatprep.subr.mxu0 %v1206
        %1333 = vmatpush1.msra.mxu0 %v1205
        %1334 = vmatprep.subr.mxu0 %v1202
        %1335 = vmatpush1.msra.mxu0 %v1201
        %1336 = vmatprep.subr.mxu0 %v1198
        %1337 = vmatpush1.msra.mxu0 %v1197
        %1338 = vmatprep.subr.mxu0 %v1194
        %1339 = vmatpush1.msra.mxu0 %v1193
        %1340 = vmatprep.subr.mxu0 %v1190
        %1341 = vmatpush1.msra.mxu0 %v1189
        %1342 = vmatprep.subr.mxu0 %v1186
        %1343 = vmatpush1.msra.mxu0 %v1185
        %1344 = vmatprep.subr.mxu0 %v1182
        %1345 = vmatpush1.msra.mxu0 %v1181
        %1346 = vmatprep.subr.mxu0 0.0
        %1347 = vmatpush2.msra.mxu0 0.0
        %1348 = vmatprep.subr.mxu0 0.0
        %1349 = vmatpush2.msra.mxu0 0.0
        %1350 = vmatprep.subr.mxu0 0.0
        %1351 = vmatpush2.msra.mxu0 0.0
        %1352 = vmatprep.subr.mxu0 0.0
        %1353 = vmatpush2.msra.mxu0 0.0
        %1354 = vmatprep.subr.mxu0 0.0
        %1355 = vmatpush2.msra.mxu0 0.0
        %1356 = vmatprep.subr.mxu0 0.0
        %1357 = vmatpush2.msra.mxu0 0.0
        %1358 = vmatprep.subr.mxu0 0.0
        %1359 = vmatpush2.msra.mxu0 0.0
        %1360 = vmatprep.subr.mxu0 0.0
        %1361 = vmatpush2.msra.mxu0 0.0
        %1362 = vmatprep.subr.mxu0 0.0
        %1363 = vmatpush2.msra.mxu0 0.0
        %1364 = vmatprep.subr.mxu0 0.0
        %1365 = vmatpush2.msra.mxu0 0.0
        %1366 = vmatprep.subr.mxu0 0.0
        %1367 = vmatpush2.msra.mxu0 0.0
        %1368 = vmatprep.subr.mxu0 0.0
        %1369 = vmatpush2.msra.mxu0 0.0
        %1370 = vmatprep.subr.mxu0 0.0
        %1371 = vmatpush2.msra.mxu0 0.0
        %1372 = vmatprep.subr.mxu0 0.0
        %1373 = vmatpush2.msra.mxu0 0.0
        %1374 = vmatprep.subr.mxu0 0.0
        %1375 = vmatpush2.msra.mxu0 0.0
        %1376 = vmatprep.subr.mxu0 0.0
        %1377 = vmatpush2.msra.mxu0 0.0
        %1378 = vmatprep.mubr.f32.mxu0 0.0
        %1379 = vmatmul.mubr.f32.gmra.mxu0 %v1169
        %v1380 = vpop.f32.mrf.mxu0
        %v1381 = vadd.f32 0.0, %v1380
        %v1382 = vpop.f32.mrf.mxu0
        %v1383 = vadd.f32 0.0, %v1382
        %1384 = vdwg.mxu0
        %v1385 = vadd.f32 %v1175, %v1310
        %v1386 = vadd.f32 %v1176, %v1312
        %v1387 = vadd.f32 %v1177, %v1381
        %v1388 = vadd.f32 %v1178, %v1383
        %v1389 = vxor.u32 %v1385, 2147483648
        %v1390 = vxor.u32 %v1386, 2147483648
        %v1391 = vxor.u32 %v1387, 2147483648
        %v1392 = vmul.f32 %v1389, 1.442695
        %v1393 = vpow.pop %v1392
        %v1394 = vmul.f32 %v1390, 1.442695
        %v1395 = vpow.pop %v1394
        %v1396 = vmul.f32 %v1391, 1.442695
        %v1397 = vpow.pop %v1396
        %v1398 = vadd.f32 %v1393, 1.0
        %v1399 = vadd.f32 %v1395, 1.0
        %v1400 = vadd.f32 %v1397, 1.0
        %v1401 = vrcp.pop %v1398
        %v1402 = vmul.f32 1.0, %v1401
        %v1403 = vrcp.pop %v1399
        %v1404 = vmul.f32 1.0, %v1403
        %v1405 = vrcp.pop %v1400
        %v1406 = vmul.f32 1.0, %v1405
        %v1407 = vtanh.pop %v1388
        %v1408 = vmul.f32 %v1404, %v1167
        %v1409 = vmul.f32 %v1402, %v1407
        %v1410 = vadd.f32 %v1408, %v1409
        %v1411 = vtanh.pop %v1410
        %v1412 = vmul.f32 %v1406, %v1411
        %s1413 = scalar_lea.vmem [#allocation4], 16
        %1414 = vst [vmem:[%s1413] sm:$0xff] %v1412
        %s1415 = smul.u32 3, 4
        %s1416 = smul.addr %s1415, 8
        %s1417 = scalar_lea.vmem [#allocation5], %s1416
        %v1418 = vld [vmem:[%s1417] sm:$0xff]
        %v1419 = vld [vmem:[%s1417 + $0x8] sm:$0xff]
        %v1420 = vld [vmem:[%s1417 + $0x10] sm:$0xff]
        %v1421 = vld [vmem:[%s1417 + $0x18] sm:$0xff]
        %v1422 = vld [vmem:[#allocation8] sm:$0xff]
        %v1423 = vld [vmem:[#allocation8 + $0x8] sm:$0xff]
        %v1424 = vld [vmem:[#allocation8 + $0x10] sm:$0xff]
        %v1425 = vld [vmem:[#allocation8 + $0x18] sm:$0xff]
        %v1426 = vld [vmem:[#allocation8 + $0x20] sm:$0xff]
        %v1427 = vld [vmem:[#allocation8 + $0x28] sm:$0xff]
        %v1428 = vld [vmem:[#allocation8 + $0x30] sm:$0xff]
        %v1429 = vld [vmem:[#allocation8 + $0x38] sm:$0xff]
        %v1430 = vld [vmem:[#allocation8 + $0x40] sm:$0xff]
        %v1431 = vld [vmem:[#allocation8 + $0x48] sm:$0xff]
        %v1432 = vld [vmem:[#allocation8 + $0x50] sm:$0xff]
        %v1433 = vld [vmem:[#allocation8 + $0x58] sm:$0xff]
        %v1434 = vld [vmem:[#allocation8 + $0x60] sm:$0xff]
        %v1435 = vld [vmem:[#allocation8 + $0x68] sm:$0xff]
        %v1436 = vld [vmem:[#allocation8 + $0x70] sm:$0xff]
        %v1437 = vld [vmem:[#allocation8 + $0x78] sm:$0xff]
        %v1438 = vld [vmem:[#allocation8 + $0x80] sm:$0xff]
        %v1439 = vld [vmem:[#allocation8 + $0x88] sm:$0xff]
        %v1440 = vld [vmem:[#allocation8 + $0x90] sm:$0xff]
        %v1441 = vld [vmem:[#allocation8 + $0x98] sm:$0xff]
        %v1442 = vld [vmem:[#allocation8 + $0xa0] sm:$0xff]
        %v1443 = vld [vmem:[#allocation8 + $0xa8] sm:$0xff]
        %v1444 = vld [vmem:[#allocation8 + $0xb0] sm:$0xff]
        %v1445 = vld [vmem:[#allocation8 + $0xb8] sm:$0xff]
        %v1446 = vld [vmem:[#allocation8 + $0xc0] sm:$0xff]
        %v1447 = vld [vmem:[#allocation8 + $0xc8] sm:$0xff]
        %v1448 = vld [vmem:[#allocation8 + $0xd0] sm:$0xff]
        %v1449 = vld [vmem:[#allocation8 + $0xd8] sm:$0xff]
        %v1450 = vld [vmem:[#allocation8 + $0xe0] sm:$0xff]
        %v1451 = vld [vmem:[#allocation8 + $0xe8] sm:$0xff]
        %v1452 = vld [vmem:[#allocation8 + $0xf0] sm:$0xff]
        %v1453 = vld [vmem:[#allocation8 + $0xf8] sm:$0xff]
        %v1454 = vld [vmem:[#allocation8 + $0x100] sm:$0xff]
        %v1455 = vld [vmem:[#allocation8 + $0x108] sm:$0xff]
        %v1456 = vld [vmem:[#allocation8 + $0x110] sm:$0xff]
        %v1457 = vld [vmem:[#allocation8 + $0x118] sm:$0xff]
        %v1458 = vld [vmem:[#allocation8 + $0x120] sm:$0xff]
        %v1459 = vld [vmem:[#allocation8 + $0x128] sm:$0xff]
        %v1460 = vld [vmem:[#allocation8 + $0x130] sm:$0xff]
        %v1461 = vld [vmem:[#allocation8 + $0x138] sm:$0xff]
        %v1462 = vld [vmem:[#allocation8 + $0x140] sm:$0xff]
        %v1463 = vld [vmem:[#allocation8 + $0x148] sm:$0xff]
        %v1464 = vld [vmem:[#allocation8 + $0x150] sm:$0xff]
        %v1465 = vld [vmem:[#allocation8 + $0x158] sm:$0xff]
        %v1466 = vld [vmem:[#allocation8 + $0x160] sm:$0xff]
        %v1467 = vld [vmem:[#allocation8 + $0x168] sm:$0xff]
        %v1468 = vld [vmem:[#allocation8 + $0x170] sm:$0xff]
        %v1469 = vld [vmem:[#allocation8 + $0x178] sm:$0xff]
        %v1470 = vld [vmem:[#allocation8 + $0x180] sm:$0xff]
        %v1471 = vld [vmem:[#allocation8 + $0x188] sm:$0xff]
        %v1472 = vld [vmem:[#allocation8 + $0x190] sm:$0xff]
        %v1473 = vld [vmem:[#allocation8 + $0x198] sm:$0xff]
        %v1474 = vld [vmem:[#allocation8 + $0x1a0] sm:$0xff]
        %v1475 = vld [vmem:[#allocation8 + $0x1a8] sm:$0xff]
        %v1476 = vld [vmem:[#allocation8 + $0x1b0] sm:$0xff]
        %v1477 = vld [vmem:[#allocation8 + $0x1b8] sm:$0xff]
        %v1478 = vld [vmem:[#allocation8 + $0x1c0] sm:$0xff]
        %v1479 = vld [vmem:[#allocation8 + $0x1c8] sm:$0xff]
        %v1480 = vld [vmem:[#allocation8 + $0x1d0] sm:$0xff]
        %v1481 = vld [vmem:[#allocation8 + $0x1d8] sm:$0xff]
        %v1482 = vld [vmem:[#allocation8 + $0x1e0] sm:$0xff]
        %v1483 = vld [vmem:[#allocation8 + $0x1e8] sm:$0xff]
        %v1484 = vld [vmem:[#allocation8 + $0x1f0] sm:$0xff]
        %v1485 = vld [vmem:[#allocation8 + $0x1f8] sm:$0xff]
        %1486 = vmatprep.subr.mxu0 %v1483
        %1487 = vmatpush1.msra.mxu0 %v1482
        %1488 = vmatprep.subr.mxu0 %v1479
        %1489 = vmatpush1.msra.mxu0 %v1478
        %1490 = vmatprep.subr.mxu0 %v1475
        %1491 = vmatpush1.msra.mxu0 %v1474
        %1492 = vmatprep.subr.mxu0 %v1471
        %1493 = vmatpush1.msra.mxu0 %v1470
        %1494 = vmatprep.subr.mxu0 %v1467
        %1495 = vmatpush1.msra.mxu0 %v1466
        %1496 = vmatprep.subr.mxu0 %v1463
        %1497 = vmatpush1.msra.mxu0 %v1462
        %1498 = vmatprep.subr.mxu0 %v1459
        %1499 = vmatpush1.msra.mxu0 %v1458
        %1500 = vmatprep.subr.mxu0 %v1455
        %1501 = vmatpush1.msra.mxu0 %v1454
        %1502 = vmatprep.subr.mxu0 %v1451
        %1503 = vmatpush1.msra.mxu0 %v1450
        %1504 = vmatprep.subr.mxu0 %v1447
        %1505 = vmatpush1.msra.mxu0 %v1446
        %1506 = vmatprep.subr.mxu0 %v1443
        %1507 = vmatpush1.msra.mxu0 %v1442
        %1508 = vmatprep.subr.mxu0 %v1439
        %1509 = vmatpush1.msra.mxu0 %v1438
        %1510 = vmatprep.subr.mxu0 %v1435
        %1511 = vmatpush1.msra.mxu0 %v1434
        %1512 = vmatprep.subr.mxu0 %v1431
        %1513 = vmatpush1.msra.mxu0 %v1430
        %1514 = vmatprep.subr.mxu0 %v1427
        %1515 = vmatpush1.msra.mxu0 %v1426
        %1516 = vmatprep.subr.mxu0 %v1423
        %1517 = vmatpush1.msra.mxu0 %v1422
        %1518 = vmatprep.subr.mxu0 0.0
        %1519 = vmatpush2.msra.mxu0 0.0
        %1520 = vmatprep.subr.mxu0 0.0
        %1521 = vmatpush2.msra.mxu0 0.0
        %1522 = vmatprep.subr.mxu0 0.0
        %1523 = vmatpush2.msra.mxu0 0.0
        %1524 = vmatprep.subr.mxu0 0.0
        %1525 = vmatpush2.msra.mxu0 0.0
        %1526 = vmatprep.subr.mxu0 0.0
        %1527 = vmatpush2.msra.mxu0 0.0
        %1528 = vmatprep.subr.mxu0 0.0
        %1529 = vmatpush2.msra.mxu0 0.0
        %1530 = vmatprep.subr.mxu0 0.0
        %1531 = vmatpush2.msra.mxu0 0.0
        %1532 = vmatprep.subr.mxu0 0.0
        %1533 = vmatpush2.msra.mxu0 0.0
        %1534 = vmatprep.subr.mxu0 0.0
        %1535 = vmatpush2.msra.mxu0 0.0
        %1536 = vmatprep.subr.mxu0 0.0
        %1537 = vmatpush2.msra.mxu0 0.0
        %1538 = vmatprep.subr.mxu0 0.0
        %1539 = vmatpush2.msra.mxu0 0.0
        %1540 = vmatprep.subr.mxu0 0.0
        %1541 = vmatpush2.msra.mxu0 0.0
        %1542 = vmatprep.subr.mxu0 0.0
        %1543 = vmatpush2.msra.mxu0 0.0
        %1544 = vmatprep.subr.mxu0 0.0
        %1545 = vmatpush2.msra.mxu0 0.0
        %1546 = vmatprep.subr.mxu0 0.0
        %1547 = vmatpush2.msra.mxu0 0.0
        %1548 = vmatprep.subr.mxu0 0.0
        %1549 = vmatpush2.msra.mxu0 0.0
        %1550 = vmatprep.mubr.f32.mxu0 0.0
        %1551 = vmatmul.mubr.f32.gmra.mxu0 %v1412
        %v1552 = vpop.f32.mrf.mxu0
        %v1553 = vadd.f32 0.0, %v1552
        %v1554 = vpop.f32.mrf.mxu0
        %v1555 = vadd.f32 0.0, %v1554
        %1556 = vdwg.mxu0
        %1557 = vmatprep.subr.mxu0 %v1485
        %1558 = vmatpush1.msra.mxu0 %v1484
        %1559 = vmatprep.subr.mxu0 %v1481
        %1560 = vmatpush1.msra.mxu0 %v1480
        %1561 = vmatprep.subr.mxu0 %v1477
        %1562 = vmatpush1.msra.mxu0 %v1476
        %1563 = vmatprep.subr.mxu0 %v1473
        %1564 = vmatpush1.msra.mxu0 %v1472
        %1565 = vmatprep.subr.mxu0 %v1469
        %1566 = vmatpush1.msra.mxu0 %v1468
        %1567 = vmatprep.subr.mxu0 %v1465
        %1568 = vmatpush1.msra.mxu0 %v1464
        %1569 = vmatprep.subr.mxu0 %v1461
        %1570 = vmatpush1.msra.mxu0 %v1460
        %1571 = vmatprep.subr.mxu0 %v1457
        %1572 = vmatpush1.msra.mxu0 %v1456
        %1573 = vmatprep.subr.mxu0 %v1453
        %1574 = vmatpush1.msra.mxu0 %v1452
        %1575 = vmatprep.subr.mxu0 %v1449
        %1576 = vmatpush1.msra.mxu0 %v1448
        %1577 = vmatprep.subr.mxu0 %v1445
        %1578 = vmatpush1.msra.mxu0 %v1444
        %1579 = vmatprep.subr.mxu0 %v1441
        %1580 = vmatpush1.msra.mxu0 %v1440
        %1581 = vmatprep.subr.mxu0 %v1437
        %1582 = vmatpush1.msra.mxu0 %v1436
        %1583 = vmatprep.subr.mxu0 %v1433
        %1584 = vmatpush1.msra.mxu0 %v1432
        %1585 = vmatprep.subr.mxu0 %v1429
        %1586 = vmatpush1.msra.mxu0 %v1428
        %1587 = vmatprep.subr.mxu0 %v1425
        %1588 = vmatpush1.msra.mxu0 %v1424
        %1589 = vmatprep.subr.mxu0 0.0
        %1590 = vmatpush2.msra.mxu0 0.0
        %1591 = vmatprep.subr.mxu0 0.0
        %1592 = vmatpush2.msra.mxu0 0.0
        %1593 = vmatprep.subr.mxu0 0.0
        %1594 = vmatpush2.msra.mxu0 0.0
        %1595 = vmatprep.subr.mxu0 0.0
        %1596 = vmatpush2.msra.mxu0 0.0
        %1597 = vmatprep.subr.mxu0 0.0
        %1598 = vmatpush2.msra.mxu0 0.0
        %1599 = vmatprep.subr.mxu0 0.0
        %1600 = vmatpush2.msra.mxu0 0.0
        %1601 = vmatprep.subr.mxu0 0.0
        %1602 = vmatpush2.msra.mxu0 0.0
        %1603 = vmatprep.subr.mxu0 0.0
        %1604 = vmatpush2.msra.mxu0 0.0
        %1605 = vmatprep.subr.mxu0 0.0
        %1606 = vmatpush2.msra.mxu0 0.0
        %1607 = vmatprep.subr.mxu0 0.0
        %1608 = vmatpush2.msra.mxu0 0.0
        %1609 = vmatprep.subr.mxu0 0.0
        %1610 = vmatpush2.msra.mxu0 0.0
        %1611 = vmatprep.subr.mxu0 0.0
        %1612 = vmatpush2.msra.mxu0 0.0
        %1613 = vmatprep.subr.mxu0 0.0
        %1614 = vmatpush2.msra.mxu0 0.0
        %1615 = vmatprep.subr.mxu0 0.0
        %1616 = vmatpush2.msra.mxu0 0.0
        %1617 = vmatprep.subr.mxu0 0.0
        %1618 = vmatpush2.msra.mxu0 0.0
        %1619 = vmatprep.subr.mxu0 0.0
        %1620 = vmatpush2.msra.mxu0 0.0
        %1621 = vmatprep.mubr.f32.mxu0 0.0
        %1622 = vmatmul.mubr.f32.gmra.mxu0 %v1412
        %v1623 = vpop.f32.mrf.mxu0
        %v1624 = vadd.f32 0.0, %v1623
        %v1625 = vpop.f32.mrf.mxu0
        %v1626 = vadd.f32 0.0, %v1625
        %1627 = vdwg.mxu0
        %v1628 = vadd.f32 %v1418, %v1553
        %v1629 = vadd.f32 %v1419, %v1555
        %v1630 = vadd.f32 %v1420, %v1624
        %v1631 = vadd.f32 %v1421, %v1626
        %v1632 = vxor.u32 %v1628, 2147483648
        %v1633 = vxor.u32 %v1629, 2147483648
        %v1634 = vxor.u32 %v1630, 2147483648
        %v1635 = vmul.f32 %v1632, 1.442695
        %v1636 = vpow.pop %v1635
        %v1637 = vmul.f32 %v1633, 1.442695
        %v1638 = vpow.pop %v1637
        %v1639 = vmul.f32 %v1634, 1.442695
        %v1640 = vpow.pop %v1639
        %v1641 = vadd.f32 %v1636, 1.0
        %v1642 = vadd.f32 %v1638, 1.0
        %v1643 = vadd.f32 %v1640, 1.0
        %v1644 = vrcp.pop %v1641
        %v1645 = vmul.f32 1.0, %v1644
        %v1646 = vrcp.pop %v1642
        %v1647 = vmul.f32 1.0, %v1646
        %v1648 = vrcp.pop %v1643
        %v1649 = vmul.f32 1.0, %v1648
        %v1650 = vtanh.pop %v1631
        %v1651 = vmul.f32 %v1647, %v1410
        %v1652 = vmul.f32 %v1645, %v1650
        %v1653 = vadd.f32 %v1651, %v1652
        %v1654 = vtanh.pop %v1653
        %v1655 = vmul.f32 %v1649, %v1654
        %s1656 = scalar_lea.vmem [#allocation4], 24
        %1657 = vst [vmem:[%s1656] sm:$0xff] %v1655
        %1658 = vst [vmem:[#allocation2] sm:$0xff] %v1655
        %1659 = vst [vmem:[#allocation3] sm:$0xff] %v1653
        %v1660 = vld [vmem:[#allocation4] sm:$0xff]
        %v1661 = vld [vmem:[#allocation4 + $0x8] sm:$0xff]
        %v1662 = vld [vmem:[#allocation4 + $0x10] sm:$0xff]
        %v1663 = vld [vmem:[#allocation4 + $0x18] sm:$0xff]
        %v1664 = vld [vmem:[#allocation10] sm:$0xff]
        %v1665 = vld [vmem:[#allocation10 + $0x8] sm:$0xff]
        %v1666 = vld [vmem:[#allocation10 + $0x10] sm:$0xff]
        %v1667 = vld [vmem:[#allocation10 + $0x18] sm:$0xff]
        %v1668 = vld [vmem:[#allocation10 + $0x20] sm:$0xff]
        %v1669 = vld [vmem:[#allocation10 + $0x28] sm:$0xff]
        %v1670 = vld [vmem:[#allocation10 + $0x30] sm:$0xff]
        %v1671 = vld [vmem:[#allocation10 + $0x38] sm:$0xff]
        %v1672 = vld [vmem:[#allocation10 + $0x40] sm:$0xff]
        %v1673 = vld [vmem:[#allocation10 + $0x48] sm:$0xff]
        %v1674 = vld [vmem:[#allocation10 + $0x50] sm:$0xff]
        %v1675 = vld [vmem:[#allocation10 + $0x58] sm:$0xff]
        %v1676 = vld [vmem:[#allocation10 + $0x60] sm:$0xff]
        %v1677 = vld [vmem:[#allocation10 + $0x68] sm:$0xff]
        %v1678 = vld [vmem:[#allocation10 + $0x70] sm:$0xff]
        %v1679 = vld [vmem:[#allocation10 + $0x78] sm:$0xff]
        %v1680 = vld [vmem:[#allocation10 + $0x80] sm:$0xff]
        %v1681 = vld [vmem:[#allocation10 + $0x88] sm:$0xff]
        %v1682 = vld [vmem:[#allocation10 + $0x90] sm:$0xff]
        %v1683 = vld [vmem:[#allocation10 + $0x98] sm:$0xff]
        %v1684 = vld [vmem:[#allocation10 + $0xa0] sm:$0xff]
        %v1685 = vld [vmem:[#allocation10 + $0xa8] sm:$0xff]
        %v1686 = vld [vmem:[#allocation10 + $0xb0] sm:$0xff]
        %v1687 = vld [vmem:[#allocation10 + $0xb8] sm:$0xff]
        %v1688 = vld [vmem:[#allocation10 + $0xc0] sm:$0xff]
        %v1689 = vld [vmem:[#allocation10 + $0xc8] sm:$0xff]
        %v1690 = vld [vmem:[#allocation10 + $0xd0] sm:$0xff]
        %v1691 = vld [vmem:[#allocation10 + $0xd8] sm:$0xff]
        %v1692 = vld [vmem:[#allocation10 + $0xe0] sm:$0xff]
        %v1693 = vld [vmem:[#allocation10 + $0xe8] sm:$0xff]
        %v1694 = vld [vmem:[#allocation10 + $0xf0] sm:$0xff]
        %v1695 = vld [vmem:[#allocation10 + $0xf8] sm:$0xff]
        %v1696 = vld [vmem:[#allocation10 + $0x100] sm:$0xff]
        %v1697 = vld [vmem:[#allocation10 + $0x108] sm:$0xff]
        %v1698 = vld [vmem:[#allocation10 + $0x110] sm:$0xff]
        %v1699 = vld [vmem:[#allocation10 + $0x118] sm:$0xff]
        %v1700 = vld [vmem:[#allocation10 + $0x120] sm:$0xff]
        %v1701 = vld [vmem:[#allocation10 + $0x128] sm:$0xff]
        %v1702 = vld [vmem:[#allocation10 + $0x130] sm:$0xff]
        %v1703 = vld [vmem:[#allocation10 + $0x138] sm:$0xff]
        %v1704 = vld [vmem:[#allocation10 + $0x140] sm:$0xff]
        %v1705 = vld [vmem:[#allocation10 + $0x148] sm:$0xff]
        %v1706 = vld [vmem:[#allocation10 + $0x150] sm:$0xff]
        %v1707 = vld [vmem:[#allocation10 + $0x158] sm:$0xff]
        %v1708 = vld [vmem:[#allocation10 + $0x160] sm:$0xff]
        %v1709 = vld [vmem:[#allocation10 + $0x168] sm:$0xff]
        %v1710 = vld [vmem:[#allocation10 + $0x170] sm:$0xff]
        %v1711 = vld [vmem:[#allocation10 + $0x178] sm:$0xff]
        %v1712 = vld [vmem:[#allocation10 + $0x180] sm:$0xff]
        %v1713 = vld [vmem:[#allocation10 + $0x188] sm:$0xff]
        %v1714 = vld [vmem:[#allocation10 + $0x190] sm:$0xff]
        %v1715 = vld [vmem:[#allocation10 + $0x198] sm:$0xff]
        %v1716 = vld [vmem:[#allocation10 + $0x1a0] sm:$0xff]
        %v1717 = vld [vmem:[#allocation10 + $0x1a8] sm:$0xff]
        %v1718 = vld [vmem:[#allocation10 + $0x1b0] sm:$0xff]
        %v1719 = vld [vmem:[#allocation10 + $0x1b8] sm:$0xff]
        %v1720 = vld [vmem:[#allocation10 + $0x1c0] sm:$0xff]
        %v1721 = vld [vmem:[#allocation10 + $0x1c8] sm:$0xff]
        %v1722 = vld [vmem:[#allocation10 + $0x1d0] sm:$0xff]
        %v1723 = vld [vmem:[#allocation10 + $0x1d8] sm:$0xff]
        %v1724 = vld [vmem:[#allocation10 + $0x1e0] sm:$0xff]
        %v1725 = vld [vmem:[#allocation10 + $0x1e8] sm:$0xff]
        %v1726 = vld [vmem:[#allocation10 + $0x1f0] sm:$0xff]
        %v1727 = vld [vmem:[#allocation10 + $0x1f8] sm:$0xff]
        %v1728 = vld [vmem:[%s6] sm:$0xf]
        %v1730 = vlaneseq
        %v1731 = vshrl.u32 %v1730, 7
        %v1732 = vsub.s32 0, %v1731
        %v1733 = vrot.slane %v1728, %v1732
        %v1734 = vlaneseq
        %v1735 = vshrl.u32 %v1734, 7
        %v1736 = vsub.s32 1, %v1735
        %v1737 = vrot.slane %v1728, %v1736
        %v1738 = vlaneseq
        %v1739 = vshrl.u32 %v1738, 7
        %v1740 = vsub.s32 2, %v1739
        %v1741 = vrot.slane %v1728, %v1740
        %v1742 = vlaneseq
        %v1743 = vshrl.u32 %v1742, 7
        %v1744 = vsub.s32 3, %v1743
        %v1745 = vrot.slane %v1728, %v1744
        %1750 = vmatprep.subr.mxu0 %v1725
        %1751 = vmatpush1.msra.mxu0 %v1724
        %1752 = vmatprep.subr.mxu0 %v1721
        %1753 = vmatpush1.msra.mxu0 %v1720
        %1754 = vmatprep.subr.mxu0 %v1717
        %1755 = vmatpush1.msra.mxu0 %v1716
        %1756 = vmatprep.subr.mxu0 %v1713
        %1757 = vmatpush1.msra.mxu0 %v1712
        %1758 = vmatprep.subr.mxu0 %v1709
        %1759 = vmatpush1.msra.mxu0 %v1708
        %1760 = vmatprep.subr.mxu0 %v1705
        %1761 = vmatpush1.msra.mxu0 %v1704
        %1762 = vmatprep.subr.mxu0 %v1701
        %1763 = vmatpush1.msra.mxu0 %v1700
        %1764 = vmatprep.subr.mxu0 %v1697
        %1765 = vmatpush1.msra.mxu0 %v1696
        %1766 = vmatprep.subr.mxu0 %v1693
        %1767 = vmatpush1.msra.mxu0 %v1692
        %1768 = vmatprep.subr.mxu0 %v1689
        %1769 = vmatpush1.msra.mxu0 %v1688
        %1770 = vmatprep.subr.mxu0 %v1685
        %1771 = vmatpush1.msra.mxu0 %v1684
        %1772 = vmatprep.subr.mxu0 %v1681
        %1773 = vmatpush1.msra.mxu0 %v1680
        %1774 = vmatprep.subr.mxu0 %v1677
        %1775 = vmatpush1.msra.mxu0 %v1676
        %1776 = vmatprep.subr.mxu0 %v1673
        %1777 = vmatpush1.msra.mxu0 %v1672
        %1778 = vmatprep.subr.mxu0 %v1669
        %1779 = vmatpush1.msra.mxu0 %v1668
        %1780 = vmatprep.subr.mxu0 %v1665
        %1781 = vmatpush1.msra.mxu0 %v1664
        %1782 = vmatprep.subr.mxu0 0.0
        %1783 = vmatpush2.msra.mxu0 0.0
        %1784 = vmatprep.subr.mxu0 0.0
        %1785 = vmatpush2.msra.mxu0 0.0
        %1786 = vmatprep.subr.mxu0 0.0
        %1787 = vmatpush2.msra.mxu0 0.0
        %1788 = vmatprep.subr.mxu0 0.0
        %1789 = vmatpush2.msra.mxu0 0.0
        %1790 = vmatprep.subr.mxu0 0.0
        %1791 = vmatpush2.msra.mxu0 0.0
        %1792 = vmatprep.subr.mxu0 0.0
        %1793 = vmatpush2.msra.mxu0 0.0
        %1794 = vmatprep.subr.mxu0 0.0
        %1795 = vmatpush2.msra.mxu0 0.0
        %1796 = vmatprep.subr.mxu0 0.0
        %1797 = vmatpush2.msra.mxu0 0.0
        %1798 = vmatprep.subr.mxu0 0.0
        %1799 = vmatpush2.msra.mxu0 0.0
        %1800 = vmatprep.subr.mxu0 0.0
        %1801 = vmatpush2.msra.mxu0 0.0
        %1802 = vmatprep.subr.mxu0 0.0
        %1803 = vmatpush2.msra.mxu0 0.0
        %1804 = vmatprep.subr.mxu0 0.0
        %1805 = vmatpush2.msra.mxu0 0.0
        %1806 = vmatprep.subr.mxu0 0.0
        %1807 = vmatpush2.msra.mxu0 0.0
        %1808 = vmatprep.subr.mxu0 0.0
        %1809 = vmatpush2.msra.mxu0 0.0
        %1810 = vmatprep.subr.mxu0 0.0
        %1811 = vmatpush2.msra.mxu0 0.0
        %1812 = vmatprep.subr.mxu0 0.0
        %1813 = vmatpush2.msra.mxu0 0.0
        %1814 = vmatprep.mubr.f32.mxu0 0.0
        %1815 = vmatmul.mubr.f32.gmra.mxu0 %v1660
        %v1816 = vpop.f32.mrf.mxu0
        %v1817 = vadd.f32 %v1733, %v1816
        %v1818 = vpop.f32.mrf.mxu0
        %v1819 = vadd.f32 %v1737, %v1818
        %1820 = vmatprep.mubr.f32.mxu0 0.0
        %1821 = vmatmul.mubr.f32.gmra.mxu0 %v1661
        %v1822 = vpop.f32.mrf.mxu0
        %v1823 = vadd.f32 %v1733, %v1822
        %v1824 = vpop.f32.mrf.mxu0
        %v1825 = vadd.f32 %v1737, %v1824
        %1826 = vmatprep.mubr.f32.mxu0 0.0
        %1827 = vmatmul.mubr.f32.gmra.mxu0 %v1662
        %v1828 = vpop.f32.mrf.mxu0
        %v1829 = vadd.f32 %v1733, %v1828
        %v1830 = vpop.f32.mrf.mxu0
        %v1831 = vadd.f32 %v1737, %v1830
        %1832 = vmatprep.mubr.f32.mxu0 0.0
        %1833 = vmatmul.mubr.f32.gmra.mxu0 %v1663
        %v1834 = vpop.f32.mrf.mxu0
        %v1835 = vadd.f32 %v1733, %v1834
        %v1836 = vpop.f32.mrf.mxu0
        %v1837 = vadd.f32 %v1737, %v1836
        %1838 = vdwg.mxu0
        %1839 = vmatprep.subr.mxu0 %v1727
        %1840 = vmatpush1.msra.mxu0 %v1726
        %1841 = vmatprep.subr.mxu0 %v1723
        %1842 = vmatpush1.msra.mxu0 %v1722
        %1843 = vmatprep.subr.mxu0 %v1719
        %1844 = vmatpush1.msra.mxu0 %v1718
        %1845 = vmatprep.subr.mxu0 %v1715
        %1846 = vmatpush1.msra.mxu0 %v1714
        %1847 = vmatprep.subr.mxu0 %v1711
        %1848 = vmatpush1.msra.mxu0 %v1710
        %1849 = vmatprep.subr.mxu0 %v1707
        %1850 = vmatpush1.msra.mxu0 %v1706
        %1851 = vmatprep.subr.mxu0 %v1703
        %1852 = vmatpush1.msra.mxu0 %v1702
        %1853 = vmatprep.subr.mxu0 %v1699
        %1854 = vmatpush1.msra.mxu0 %v1698
        %1855 = vmatprep.subr.mxu0 %v1695
        %1856 = vmatpush1.msra.mxu0 %v1694
        %1857 = vmatprep.subr.mxu0 %v1691
        %1858 = vmatpush1.msra.mxu0 %v1690
        %1859 = vmatprep.subr.mxu0 %v1687
        %1860 = vmatpush1.msra.mxu0 %v1686
        %1861 = vmatprep.subr.mxu0 %v1683
        %1862 = vmatpush1.msra.mxu0 %v1682
        %1863 = vmatprep.subr.mxu0 %v1679
        %1864 = vmatpush1.msra.mxu0 %v1678
        %1865 = vmatprep.subr.mxu0 %v1675
        %1866 = vmatpush1.msra.mxu0 %v1674
        %1867 = vmatprep.subr.mxu0 %v1671
        %1868 = vmatpush1.msra.mxu0 %v1670
        %1869 = vmatprep.subr.mxu0 %v1667
        %1870 = vmatpush1.msra.mxu0 %v1666
        %1871 = vmatprep.subr.mxu0 0.0
        %1872 = vmatpush2.msra.mxu0 0.0
        %1873 = vmatprep.subr.mxu0 0.0
        %1874 = vmatpush2.msra.mxu0 0.0
        %1875 = vmatprep.subr.mxu0 0.0
        %1876 = vmatpush2.msra.mxu0 0.0
        %1877 = vmatprep.subr.mxu0 0.0
        %1878 = vmatpush2.msra.mxu0 0.0
        %1879 = vmatprep.subr.mxu0 0.0
        %1880 = vmatpush2.msra.mxu0 0.0
        %1881 = vmatprep.subr.mxu0 0.0
        %1882 = vmatpush2.msra.mxu0 0.0
        %1883 = vmatprep.subr.mxu0 0.0
        %1884 = vmatpush2.msra.mxu0 0.0
        %1885 = vmatprep.subr.mxu0 0.0
        %1886 = vmatpush2.msra.mxu0 0.0
        %1887 = vmatprep.subr.mxu0 0.0
        %1888 = vmatpush2.msra.mxu0 0.0
        %1889 = vmatprep.subr.mxu0 0.0
        %1890 = vmatpush2.msra.mxu0 0.0
        %1891 = vmatprep.subr.mxu0 0.0
        %1892 = vmatpush2.msra.mxu0 0.0
        %1893 = vmatprep.subr.mxu0 0.0
        %1894 = vmatpush2.msra.mxu0 0.0
        %1895 = vmatprep.subr.mxu0 0.0
        %1896 = vmatpush2.msra.mxu0 0.0
        %1897 = vmatprep.subr.mxu0 0.0
        %1898 = vmatpush2.msra.mxu0 0.0
        %1899 = vmatprep.subr.mxu0 0.0
        %1900 = vmatpush2.msra.mxu0 0.0
        %1901 = vmatprep.subr.mxu0 0.0
        %1902 = vmatpush2.msra.mxu0 0.0
        %1903 = vmatprep.mubr.f32.mxu0 0.0
        %1904 = vmatmul.mubr.f32.gmra.mxu0 %v1660
        %v1905 = vpop.f32.mrf.mxu0
        %v1906 = vadd.f32 %v1741, %v1905
        %v1907 = vpop.f32.mrf.mxu0
        %v1908 = vadd.f32 %v1745, %v1907
        %1909 = vmatprep.mubr.f32.mxu0 0.0
        %1910 = vmatmul.mubr.f32.gmra.mxu0 %v1661
        %v1911 = vpop.f32.mrf.mxu0
        %v1912 = vadd.f32 %v1741, %v1911
        %v1913 = vpop.f32.mrf.mxu0
        %v1914 = vadd.f32 %v1745, %v1913
        %1915 = vmatprep.mubr.f32.mxu0 0.0
        %1916 = vmatmul.mubr.f32.gmra.mxu0 %v1662
        %v1917 = vpop.f32.mrf.mxu0
        %v1918 = vadd.f32 %v1741, %v1917
        %v1919 = vpop.f32.mrf.mxu0
        %v1920 = vadd.f32 %v1745, %v1919
        %1921 = vmatprep.mubr.f32.mxu0 0.0
        %1922 = vmatmul.mubr.f32.gmra.mxu0 %v1663
        %v1923 = vpop.f32.mrf.mxu0
        %v1924 = vadd.f32 %v1741, %v1923
        %v1925 = vpop.f32.mrf.mxu0
        %v1926 = vadd.f32 %v1745, %v1925
        %1927 = vdwg.mxu0
        %1928 = vst [vmem:[#allocation5] sm:$0xff] %v1817
        %1929 = vst [vmem:[#allocation5 + $0x8] sm:$0xff] %v1819
        %1930 = vst [vmem:[#allocation5 + $0x10] sm:$0xff] %v1906
        %1931 = vst [vmem:[#allocation5 + $0x18] sm:$0xff] %v1908
        %1932 = vst [vmem:[#allocation5 + $0x20] sm:$0xff] %v1823
        %1933 = vst [vmem:[#allocation5 + $0x28] sm:$0xff] %v1825
        %1934 = vst [vmem:[#allocation5 + $0x30] sm:$0xff] %v1912
        %1935 = vst [vmem:[#allocation5 + $0x38] sm:$0xff] %v1914
        %1936 = vst [vmem:[#allocation5 + $0x40] sm:$0xff] %v1829
        %1937 = vst [vmem:[#allocation5 + $0x48] sm:$0xff] %v1831
        %1938 = vst [vmem:[#allocation5 + $0x50] sm:$0xff] %v1918
        %1939 = vst [vmem:[#allocation5 + $0x58] sm:$0xff] %v1920
        %1940 = vst [vmem:[#allocation5 + $0x60] sm:$0xff] %v1835
        %1941 = vst [vmem:[#allocation5 + $0x68] sm:$0xff] %v1837
        %1942 = vst [vmem:[#allocation5 + $0x70] sm:$0xff] %v1924
        %1943 = vst [vmem:[#allocation5 + $0x78] sm:$0xff] %v1926
        %s1944 = scalar_lea.vmem [#allocation2], 8
        %v1945 = vld [vmem:[%s1944] sm:$0xff]
        %s1946 = scalar_lea.vmem [#allocation3], 8
        %v1947 = vld [vmem:[%s1946] sm:$0xff]
        %v1948 = vld [vmem:[%s689] sm:$0xff]
        %v1949 = vld [vmem:[%s689 + $0x8] sm:$0xff]
        %v1950 = vld [vmem:[%s689 + $0x10] sm:$0xff]
        %v1951 = vld [vmem:[%s689 + $0x18] sm:$0xff]
        %v1952 = vld [vmem:[#allocation11] sm:$0xff]
        %v1953 = vld [vmem:[#allocation11 + $0x8] sm:$0xff]
        %v1954 = vld [vmem:[#allocation11 + $0x10] sm:$0xff]
        %v1955 = vld [vmem:[#allocation11 + $0x18] sm:$0xff]
        %v1956 = vld [vmem:[#allocation11 + $0x20] sm:$0xff]
        %v1957 = vld [vmem:[#allocation11 + $0x28] sm:$0xff]
        %v1958 = vld [vmem:[#allocation11 + $0x30] sm:$0xff]
        %v1959 = vld [vmem:[#allocation11 + $0x38] sm:$0xff]
        %v1960 = vld [vmem:[#allocation11 + $0x40] sm:$0xff]
        %v1961 = vld [vmem:[#allocation11 + $0x48] sm:$0xff]
        %v1962 = vld [vmem:[#allocation11 + $0x50] sm:$0xff]
        %v1963 = vld [vmem:[#allocation11 + $0x58] sm:$0xff]
        %v1964 = vld [vmem:[#allocation11 + $0x60] sm:$0xff]
        %v1965 = vld [vmem:[#allocation11 + $0x68] sm:$0xff]
        %v1966 = vld [vmem:[#allocation11 + $0x70] sm:$0xff]
        %v1967 = vld [vmem:[#allocation11 + $0x78] sm:$0xff]
        %v1968 = vld [vmem:[#allocation11 + $0x80] sm:$0xff]
        %v1969 = vld [vmem:[#allocation11 + $0x88] sm:$0xff]
        %v1970 = vld [vmem:[#allocation11 + $0x90] sm:$0xff]
        %v1971 = vld [vmem:[#allocation11 + $0x98] sm:$0xff]
        %v1972 = vld [vmem:[#allocation11 + $0xa0] sm:$0xff]
        %v1973 = vld [vmem:[#allocation11 + $0xa8] sm:$0xff]
        %v1974 = vld [vmem:[#allocation11 + $0xb0] sm:$0xff]
        %v1975 = vld [vmem:[#allocation11 + $0xb8] sm:$0xff]
        %v1976 = vld [vmem:[#allocation11 + $0xc0] sm:$0xff]
        %v1977 = vld [vmem:[#allocation11 + $0xc8] sm:$0xff]
        %v1978 = vld [vmem:[#allocation11 + $0xd0] sm:$0xff]
        %v1979 = vld [vmem:[#allocation11 + $0xd8] sm:$0xff]
        %v1980 = vld [vmem:[#allocation11 + $0xe0] sm:$0xff]
        %v1981 = vld [vmem:[#allocation11 + $0xe8] sm:$0xff]
        %v1982 = vld [vmem:[#allocation11 + $0xf0] sm:$0xff]
        %v1983 = vld [vmem:[#allocation11 + $0xf8] sm:$0xff]
        %v1984 = vld [vmem:[#allocation11 + $0x100] sm:$0xff]
        %v1985 = vld [vmem:[#allocation11 + $0x108] sm:$0xff]
        %v1986 = vld [vmem:[#allocation11 + $0x110] sm:$0xff]
        %v1987 = vld [vmem:[#allocation11 + $0x118] sm:$0xff]
        %v1988 = vld [vmem:[#allocation11 + $0x120] sm:$0xff]
        %v1989 = vld [vmem:[#allocation11 + $0x128] sm:$0xff]
        %v1990 = vld [vmem:[#allocation11 + $0x130] sm:$0xff]
        %v1991 = vld [vmem:[#allocation11 + $0x138] sm:$0xff]
        %v1992 = vld [vmem:[#allocation11 + $0x140] sm:$0xff]
        %v1993 = vld [vmem:[#allocation11 + $0x148] sm:$0xff]
        %v1994 = vld [vmem:[#allocation11 + $0x150] sm:$0xff]
        %v1995 = vld [vmem:[#allocation11 + $0x158] sm:$0xff]
        %v1996 = vld [vmem:[#allocation11 + $0x160] sm:$0xff]
        %v1997 = vld [vmem:[#allocation11 + $0x168] sm:$0xff]
        %v1998 = vld [vmem:[#allocation11 + $0x170] sm:$0xff]
        %v1999 = vld [vmem:[#allocation11 + $0x178] sm:$0xff]
        %v2000 = vld [vmem:[#allocation11 + $0x180] sm:$0xff]
        %v2001 = vld [vmem:[#allocation11 + $0x188] sm:$0xff]
        %v2002 = vld [vmem:[#allocation11 + $0x190] sm:$0xff]
        %v2003 = vld [vmem:[#allocation11 + $0x198] sm:$0xff]
        %v2004 = vld [vmem:[#allocation11 + $0x1a0] sm:$0xff]
        %v2005 = vld [vmem:[#allocation11 + $0x1a8] sm:$0xff]
        %v2006 = vld [vmem:[#allocation11 + $0x1b0] sm:$0xff]
        %v2007 = vld [vmem:[#allocation11 + $0x1b8] sm:$0xff]
        %v2008 = vld [vmem:[#allocation11 + $0x1c0] sm:$0xff]
        %v2009 = vld [vmem:[#allocation11 + $0x1c8] sm:$0xff]
        %v2010 = vld [vmem:[#allocation11 + $0x1d0] sm:$0xff]
        %v2011 = vld [vmem:[#allocation11 + $0x1d8] sm:$0xff]
        %v2012 = vld [vmem:[#allocation11 + $0x1e0] sm:$0xff]
        %v2013 = vld [vmem:[#allocation11 + $0x1e8] sm:$0xff]
        %v2014 = vld [vmem:[#allocation11 + $0x1f0] sm:$0xff]
        %v2015 = vld [vmem:[#allocation11 + $0x1f8] sm:$0xff]
        %2016 = vmatprep.subr.mxu0 %v2013
        %2017 = vmatpush1.msra.mxu0 %v2012
        %2018 = vmatprep.subr.mxu0 %v2009
        %2019 = vmatpush1.msra.mxu0 %v2008
        %2020 = vmatprep.subr.mxu0 %v2005
        %2021 = vmatpush1.msra.mxu0 %v2004
        %2022 = vmatprep.subr.mxu0 %v2001
        %2023 = vmatpush1.msra.mxu0 %v2000
        %2024 = vmatprep.subr.mxu0 %v1997
        %2025 = vmatpush1.msra.mxu0 %v1996
        %2026 = vmatprep.subr.mxu0 %v1993
        %2027 = vmatpush1.msra.mxu0 %v1992
        %2028 = vmatprep.subr.mxu0 %v1989
        %2029 = vmatpush1.msra.mxu0 %v1988
        %2030 = vmatprep.subr.mxu0 %v1985
        %2031 = vmatpush1.msra.mxu0 %v1984
        %2032 = vmatprep.subr.mxu0 %v1981
        %2033 = vmatpush1.msra.mxu0 %v1980
        %2034 = vmatprep.subr.mxu0 %v1977
        %2035 = vmatpush1.msra.mxu0 %v1976
        %2036 = vmatprep.subr.mxu0 %v1973
        %2037 = vmatpush1.msra.mxu0 %v1972
        %2038 = vmatprep.subr.mxu0 %v1969
        %2039 = vmatpush1.msra.mxu0 %v1968
        %2040 = vmatprep.subr.mxu0 %v1965
        %2041 = vmatpush1.msra.mxu0 %v1964
        %2042 = vmatprep.subr.mxu0 %v1961
        %2043 = vmatpush1.msra.mxu0 %v1960
        %2044 = vmatprep.subr.mxu0 %v1957
        %2045 = vmatpush1.msra.mxu0 %v1956
        %2046 = vmatprep.subr.mxu0 %v1953
        %2047 = vmatpush1.msra.mxu0 %v1952
        %2048 = vmatprep.subr.mxu0 0.0
        %2049 = vmatpush2.msra.mxu0 0.0
        %2050 = vmatprep.subr.mxu0 0.0
        %2051 = vmatpush2.msra.mxu0 0.0
        %2052 = vmatprep.subr.mxu0 0.0
        %2053 = vmatpush2.msra.mxu0 0.0
        %2054 = vmatprep.subr.mxu0 0.0
        %2055 = vmatpush2.msra.mxu0 0.0
        %2056 = vmatprep.subr.mxu0 0.0
        %2057 = vmatpush2.msra.mxu0 0.0
        %2058 = vmatprep.subr.mxu0 0.0
        %2059 = vmatpush2.msra.mxu0 0.0
        %2060 = vmatprep.subr.mxu0 0.0
        %2061 = vmatpush2.msra.mxu0 0.0
        %2062 = vmatprep.subr.mxu0 0.0
        %2063 = vmatpush2.msra.mxu0 0.0
        %2064 = vmatprep.subr.mxu0 0.0
        %2065 = vmatpush2.msra.mxu0 0.0
        %2066 = vmatprep.subr.mxu0 0.0
        %2067 = vmatpush2.msra.mxu0 0.0
        %2068 = vmatprep.subr.mxu0 0.0
        %2069 = vmatpush2.msra.mxu0 0.0
        %2070 = vmatprep.subr.mxu0 0.0
        %2071 = vmatpush2.msra.mxu0 0.0
        %2072 = vmatprep.subr.mxu0 0.0
        %2073 = vmatpush2.msra.mxu0 0.0
        %2074 = vmatprep.subr.mxu0 0.0
        %2075 = vmatpush2.msra.mxu0 0.0
        %2076 = vmatprep.subr.mxu0 0.0
        %2077 = vmatpush2.msra.mxu0 0.0
        %2078 = vmatprep.subr.mxu0 0.0
        %2079 = vmatpush2.msra.mxu0 0.0
        %2080 = vmatprep.mubr.f32.mxu0 0.0
        %2081 = vmatmul.mubr.f32.gmra.mxu0 %v1945
        %v2082 = vpop.f32.mrf.mxu0
        %v2083 = vadd.f32 0.0, %v2082
        %v2084 = vpop.f32.mrf.mxu0
        %v2085 = vadd.f32 0.0, %v2084
        %2086 = vdwg.mxu0
        %2087 = vmatprep.subr.mxu0 %v2015
        %2088 = vmatpush1.msra.mxu0 %v2014
        %2089 = vmatprep.subr.mxu0 %v2011
        %2090 = vmatpush1.msra.mxu0 %v2010
        %2091 = vmatprep.subr.mxu0 %v2007
        %2092 = vmatpush1.msra.mxu0 %v2006
        %2093 = vmatprep.subr.mxu0 %v2003
        %2094 = vmatpush1.msra.mxu0 %v2002
        %2095 = vmatprep.subr.mxu0 %v1999
        %2096 = vmatpush1.msra.mxu0 %v1998
        %2097 = vmatprep.subr.mxu0 %v1995
        %2098 = vmatpush1.msra.mxu0 %v1994
        %2099 = vmatprep.subr.mxu0 %v1991
        %2100 = vmatpush1.msra.mxu0 %v1990
        %2101 = vmatprep.subr.mxu0 %v1987
        %2102 = vmatpush1.msra.mxu0 %v1986
        %2103 = vmatprep.subr.mxu0 %v1983
        %2104 = vmatpush1.msra.mxu0 %v1982
        %2105 = vmatprep.subr.mxu0 %v1979
        %2106 = vmatpush1.msra.mxu0 %v1978
        %2107 = vmatprep.subr.mxu0 %v1975
        %2108 = vmatpush1.msra.mxu0 %v1974
        %2109 = vmatprep.subr.mxu0 %v1971
        %2110 = vmatpush1.msra.mxu0 %v1970
        %2111 = vmatprep.subr.mxu0 %v1967
        %2112 = vmatpush1.msra.mxu0 %v1966
        %2113 = vmatprep.subr.mxu0 %v1963
        %2114 = vmatpush1.msra.mxu0 %v1962
        %2115 = vmatprep.subr.mxu0 %v1959
        %2116 = vmatpush1.msra.mxu0 %v1958
        %2117 = vmatprep.subr.mxu0 %v1955
        %2118 = vmatpush1.msra.mxu0 %v1954
        %2119 = vmatprep.subr.mxu0 0.0
        %2120 = vmatpush2.msra.mxu0 0.0
        %2121 = vmatprep.subr.mxu0 0.0
        %2122 = vmatpush2.msra.mxu0 0.0
        %2123 = vmatprep.subr.mxu0 0.0
        %2124 = vmatpush2.msra.mxu0 0.0
        %2125 = vmatprep.subr.mxu0 0.0
        %2126 = vmatpush2.msra.mxu0 0.0
        %2127 = vmatprep.subr.mxu0 0.0
        %2128 = vmatpush2.msra.mxu0 0.0
        %2129 = vmatprep.subr.mxu0 0.0
        %2130 = vmatpush2.msra.mxu0 0.0
        %2131 = vmatprep.subr.mxu0 0.0
        %2132 = vmatpush2.msra.mxu0 0.0
        %2133 = vmatprep.subr.mxu0 0.0
        %2134 = vmatpush2.msra.mxu0 0.0
        %2135 = vmatprep.subr.mxu0 0.0
        %2136 = vmatpush2.msra.mxu0 0.0
        %2137 = vmatprep.subr.mxu0 0.0
        %2138 = vmatpush2.msra.mxu0 0.0
        %2139 = vmatprep.subr.mxu0 0.0
        %2140 = vmatpush2.msra.mxu0 0.0
        %2141 = vmatprep.subr.mxu0 0.0
        %2142 = vmatpush2.msra.mxu0 0.0
        %2143 = vmatprep.subr.mxu0 0.0
        %2144 = vmatpush2.msra.mxu0 0.0
        %2145 = vmatprep.subr.mxu0 0.0
        %2146 = vmatpush2.msra.mxu0 0.0
        %2147 = vmatprep.subr.mxu0 0.0
        %2148 = vmatpush2.msra.mxu0 0.0
        %2149 = vmatprep.subr.mxu0 0.0
        %2150 = vmatpush2.msra.mxu0 0.0
        %2151 = vmatprep.mubr.f32.mxu0 0.0
        %2152 = vmatmul.mubr.f32.gmra.mxu0 %v1945
        %v2153 = vpop.f32.mrf.mxu0
        %v2154 = vadd.f32 0.0, %v2153
        %v2155 = vpop.f32.mrf.mxu0
        %v2156 = vadd.f32 0.0, %v2155
        %2157 = vdwg.mxu0
        %v2158 = vadd.f32 %v1948, %v2083
        %v2159 = vadd.f32 %v1949, %v2085
        %v2160 = vadd.f32 %v1950, %v2154
        %v2161 = vadd.f32 %v1951, %v2156
        %v2162 = vxor.u32 %v2158, 2147483648
        %v2163 = vxor.u32 %v2159, 2147483648
        %v2164 = vxor.u32 %v2160, 2147483648
        %v2165 = vmul.f32 %v2162, 1.442695
        %v2166 = vpow.pop %v2165
        %v2167 = vmul.f32 %v2163, 1.442695
        %v2168 = vpow.pop %v2167
        %v2169 = vmul.f32 %v2164, 1.442695
        %v2170 = vpow.pop %v2169
        %v2171 = vadd.f32 %v2166, 1.0
        %v2172 = vadd.f32 %v2168, 1.0
        %v2173 = vadd.f32 %v2170, 1.0
        %v2174 = vrcp.pop %v2171
        %v2175 = vmul.f32 1.0, %v2174
        %v2176 = vrcp.pop %v2172
        %v2177 = vmul.f32 1.0, %v2176
        %v2178 = vrcp.pop %v2173
        %v2179 = vmul.f32 1.0, %v2178
        %v2180 = vtanh.pop %v2161
        %v2181 = vmul.f32 %v2177, %v1947
        %v2182 = vmul.f32 %v2175, %v2180
        %v2183 = vadd.f32 %v2181, %v2182
        %v2184 = vtanh.pop %v2183
        %v2185 = vmul.f32 %v2179, %v2184
        %v2186 = vld [vmem:[%s931] sm:$0xff]
        %v2187 = vld [vmem:[%s931 + $0x8] sm:$0xff]
        %v2188 = vld [vmem:[%s931 + $0x10] sm:$0xff]
        %v2189 = vld [vmem:[%s931 + $0x18] sm:$0xff]
        %2190 = vmatprep.subr.mxu0 %v2013
        %2191 = vmatpush1.msra.mxu0 %v2012
        %2192 = vmatprep.subr.mxu0 %v2009
        %2193 = vmatpush1.msra.mxu0 %v2008
        %2194 = vmatprep.subr.mxu0 %v2005
        %2195 = vmatpush1.msra.mxu0 %v2004
        %2196 = vmatprep.subr.mxu0 %v2001
        %2197 = vmatpush1.msra.mxu0 %v2000
        %2198 = vmatprep.subr.mxu0 %v1997
        %2199 = vmatpush1.msra.mxu0 %v1996
        %2200 = vmatprep.subr.mxu0 %v1993
        %2201 = vmatpush1.msra.mxu0 %v1992
        %2202 = vmatprep.subr.mxu0 %v1989
        %2203 = vmatpush1.msra.mxu0 %v1988
        %2204 = vmatprep.subr.mxu0 %v1985
        %2205 = vmatpush1.msra.mxu0 %v1984
        %2206 = vmatprep.subr.mxu0 %v1981
        %2207 = vmatpush1.msra.mxu0 %v1980
        %2208 = vmatprep.subr.mxu0 %v1977
        %2209 = vmatpush1.msra.mxu0 %v1976
        %2210 = vmatprep.subr.mxu0 %v1973
        %2211 = vmatpush1.msra.mxu0 %v1972
        %2212 = vmatprep.subr.mxu0 %v1969
        %2213 = vmatpush1.msra.mxu0 %v1968
        %2214 = vmatprep.subr.mxu0 %v1965
        %2215 = vmatpush1.msra.mxu0 %v1964
        %2216 = vmatprep.subr.mxu0 %v1961
        %2217 = vmatpush1.msra.mxu0 %v1960
        %2218 = vmatprep.subr.mxu0 %v1957
        %2219 = vmatpush1.msra.mxu0 %v1956
        %2220 = vmatprep.subr.mxu0 %v1953
        %2221 = vmatpush1.msra.mxu0 %v1952
        %2222 = vmatprep.subr.mxu0 0.0
        %2223 = vmatpush2.msra.mxu0 0.0
        %2224 = vmatprep.subr.mxu0 0.0
        %2225 = vmatpush2.msra.mxu0 0.0
        %2226 = vmatprep.subr.mxu0 0.0
        %2227 = vmatpush2.msra.mxu0 0.0
        %2228 = vmatprep.subr.mxu0 0.0
        %2229 = vmatpush2.msra.mxu0 0.0
        %2230 = vmatprep.subr.mxu0 0.0
        %2231 = vmatpush2.msra.mxu0 0.0
        %2232 = vmatprep.subr.mxu0 0.0
        %2233 = vmatpush2.msra.mxu0 0.0
        %2234 = vmatprep.subr.mxu0 0.0
        %2235 = vmatpush2.msra.mxu0 0.0
        %2236 = vmatprep.subr.mxu0 0.0
        %2237 = vmatpush2.msra.mxu0 0.0
        %2238 = vmatprep.subr.mxu0 0.0
        %2239 = vmatpush2.msra.mxu0 0.0
        %2240 = vmatprep.subr.mxu0 0.0
        %2241 = vmatpush2.msra.mxu0 0.0
        %2242 = vmatprep.subr.mxu0 0.0
        %2243 = vmatpush2.msra.mxu0 0.0
        %2244 = vmatprep.subr.mxu0 0.0
        %2245 = vmatpush2.msra.mxu0 0.0
        %2246 = vmatprep.subr.mxu0 0.0
        %2247 = vmatpush2.msra.mxu0 0.0
        %2248 = vmatprep.subr.mxu0 0.0
        %2249 = vmatpush2.msra.mxu0 0.0
        %2250 = vmatprep.subr.mxu0 0.0
        %2251 = vmatpush2.msra.mxu0 0.0
        %2252 = vmatprep.subr.mxu0 0.0
        %2253 = vmatpush2.msra.mxu0 0.0
        %2254 = vmatprep.mubr.f32.mxu0 0.0
        %2255 = vmatmul.mubr.f32.gmra.mxu0 %v2185
        %v2256 = vpop.f32.mrf.mxu0
        %v2257 = vadd.f32 0.0, %v2256
        %v2258 = vpop.f32.mrf.mxu0
        %v2259 = vadd.f32 0.0, %v2258
        %2260 = vdwg.mxu0
        %2261 = vmatprep.subr.mxu0 %v2015
        %2262 = vmatpush1.msra.mxu0 %v2014
        %2263 = vmatprep.subr.mxu0 %v2011
        %2264 = vmatpush1.msra.mxu0 %v2010
        %2265 = vmatprep.subr.mxu0 %v2007
        %2266 = vmatpush1.msra.mxu0 %v2006
        %2267 = vmatprep.subr.mxu0 %v2003
        %2268 = vmatpush1.msra.mxu0 %v2002
        %2269 = vmatprep.subr.mxu0 %v1999
        %2270 = vmatpush1.msra.mxu0 %v1998
        %2271 = vmatprep.subr.mxu0 %v1995
        %2272 = vmatpush1.msra.mxu0 %v1994
        %2273 = vmatprep.subr.mxu0 %v1991
        %2274 = vmatpush1.msra.mxu0 %v1990
        %2275 = vmatprep.subr.mxu0 %v1987
        %2276 = vmatpush1.msra.mxu0 %v1986
        %2277 = vmatprep.subr.mxu0 %v1983
        %2278 = vmatpush1.msra.mxu0 %v1982
        %2279 = vmatprep.subr.mxu0 %v1979
        %2280 = vmatpush1.msra.mxu0 %v1978
        %2281 = vmatprep.subr.mxu0 %v1975
        %2282 = vmatpush1.msra.mxu0 %v1974
        %2283 = vmatprep.subr.mxu0 %v1971
        %2284 = vmatpush1.msra.mxu0 %v1970
        %2285 = vmatprep.subr.mxu0 %v1967
        %2286 = vmatpush1.msra.mxu0 %v1966
        %2287 = vmatprep.subr.mxu0 %v1963
        %2288 = vmatpush1.msra.mxu0 %v1962
        %2289 = vmatprep.subr.mxu0 %v1959
        %2290 = vmatpush1.msra.mxu0 %v1958
        %2291 = vmatprep.subr.mxu0 %v1955
        %2292 = vmatpush1.msra.mxu0 %v1954
        %2293 = vmatprep.subr.mxu0 0.0
        %2294 = vmatpush2.msra.mxu0 0.0
        %2295 = vmatprep.subr.mxu0 0.0
        %2296 = vmatpush2.msra.mxu0 0.0
        %2297 = vmatprep.subr.mxu0 0.0
        %2298 = vmatpush2.msra.mxu0 0.0
        %2299 = vmatprep.subr.mxu0 0.0
        %2300 = vmatpush2.msra.mxu0 0.0
        %2301 = vmatprep.subr.mxu0 0.0
        %2302 = vmatpush2.msra.mxu0 0.0
        %2303 = vmatprep.subr.mxu0 0.0
        %2304 = vmatpush2.msra.mxu0 0.0
        %2305 = vmatprep.subr.mxu0 0.0
        %2306 = vmatpush2.msra.mxu0 0.0
        %2307 = vmatprep.subr.mxu0 0.0
        %2308 = vmatpush2.msra.mxu0 0.0
        %2309 = vmatprep.subr.mxu0 0.0
        %2310 = vmatpush2.msra.mxu0 0.0
        %2311 = vmatprep.subr.mxu0 0.0
        %2312 = vmatpush2.msra.mxu0 0.0
        %2313 = vmatprep.subr.mxu0 0.0
        %2314 = vmatpush2.msra.mxu0 0.0
        %2315 = vmatprep.subr.mxu0 0.0
        %2316 = vmatpush2.msra.mxu0 0.0
        %2317 = vmatprep.subr.mxu0 0.0
        %2318 = vmatpush2.msra.mxu0 0.0
        %2319 = vmatprep.subr.mxu0 0.0
        %2320 = vmatpush2.msra.mxu0 0.0
        %2321 = vmatprep.subr.mxu0 0.0
        %2322 = vmatpush2.msra.mxu0 0.0
        %2323 = vmatprep.subr.mxu0 0.0
        %2324 = vmatpush2.msra.mxu0 0.0
        %2325 = vmatprep.mubr.f32.mxu0 0.0
        %2326 = vmatmul.mubr.f32.gmra.mxu0 %v2185
        %v2327 = vpop.f32.mrf.mxu0
        %v2328 = vadd.f32 0.0, %v2327
        %v2329 = vpop.f32.mrf.mxu0
        %v2330 = vadd.f32 0.0, %v2329
        %2331 = vdwg.mxu0
        %v2332 = vadd.f32 %v2186, %v2257
        %v2333 = vadd.f32 %v2187, %v2259
        %v2334 = vadd.f32 %v2188, %v2328
        %v2335 = vadd.f32 %v2189, %v2330
        %v2336 = vxor.u32 %v2332, 2147483648
        %v2337 = vxor.u32 %v2333, 2147483648
        %v2338 = vxor.u32 %v2334, 2147483648
        %v2339 = vmul.f32 %v2336, 1.442695
        %v2340 = vpow.pop %v2339
        %v2341 = vmul.f32 %v2337, 1.442695
        %v2342 = vpow.pop %v2341
        %v2343 = vmul.f32 %v2338, 1.442695
        %v2344 = vpow.pop %v2343
        %v2345 = vadd.f32 %v2340, 1.0
        %v2346 = vadd.f32 %v2342, 1.0
        %v2347 = vadd.f32 %v2344, 1.0
        %v2348 = vrcp.pop %v2345
        %v2349 = vmul.f32 1.0, %v2348
        %v2350 = vrcp.pop %v2346
        %v2351 = vmul.f32 1.0, %v2350
        %v2352 = vrcp.pop %v2347
        %v2353 = vmul.f32 1.0, %v2352
        %v2354 = vtanh.pop %v2335
        %v2355 = vmul.f32 %v2351, %v2183
        %v2356 = vmul.f32 %v2349, %v2354
        %v2357 = vadd.f32 %v2355, %v2356
        %v2358 = vtanh.pop %v2357
        %v2359 = vmul.f32 %v2353, %v2358
        %v2360 = vld [vmem:[%s1174] sm:$0xff]
        %v2361 = vld [vmem:[%s1174 + $0x8] sm:$0xff]
        %v2362 = vld [vmem:[%s1174 + $0x10] sm:$0xff]
        %v2363 = vld [vmem:[%s1174 + $0x18] sm:$0xff]
        %2364 = vmatprep.subr.mxu0 %v2013
        %2365 = vmatpush1.msra.mxu0 %v2012
        %2366 = vmatprep.subr.mxu0 %v2009
        %2367 = vmatpush1.msra.mxu0 %v2008
        %2368 = vmatprep.subr.mxu0 %v2005
        %2369 = vmatpush1.msra.mxu0 %v2004
        %2370 = vmatprep.subr.mxu0 %v2001
        %2371 = vmatpush1.msra.mxu0 %v2000
        %2372 = vmatprep.subr.mxu0 %v1997
        %2373 = vmatpush1.msra.mxu0 %v1996
        %2374 = vmatprep.subr.mxu0 %v1993
        %2375 = vmatpush1.msra.mxu0 %v1992
        %2376 = vmatprep.subr.mxu0 %v1989
        %2377 = vmatpush1.msra.mxu0 %v1988
        %2378 = vmatprep.subr.mxu0 %v1985
        %2379 = vmatpush1.msra.mxu0 %v1984
        %2380 = vmatprep.subr.mxu0 %v1981
        %2381 = vmatpush1.msra.mxu0 %v1980
        %2382 = vmatprep.subr.mxu0 %v1977
        %2383 = vmatpush1.msra.mxu0 %v1976
        %2384 = vmatprep.subr.mxu0 %v1973
        %2385 = vmatpush1.msra.mxu0 %v1972
        %2386 = vmatprep.subr.mxu0 %v1969
        %2387 = vmatpush1.msra.mxu0 %v1968
        %2388 = vmatprep.subr.mxu0 %v1965
        %2389 = vmatpush1.msra.mxu0 %v1964
        %2390 = vmatprep.subr.mxu0 %v1961
        %2391 = vmatpush1.msra.mxu0 %v1960
        %2392 = vmatprep.subr.mxu0 %v1957
        %2393 = vmatpush1.msra.mxu0 %v1956
        %2394 = vmatprep.subr.mxu0 %v1953
        %2395 = vmatpush1.msra.mxu0 %v1952
        %2396 = vmatprep.subr.mxu0 0.0
        %2397 = vmatpush2.msra.mxu0 0.0
        %2398 = vmatprep.subr.mxu0 0.0
        %2399 = vmatpush2.msra.mxu0 0.0
        %2400 = vmatprep.subr.mxu0 0.0
        %2401 = vmatpush2.msra.mxu0 0.0
        %2402 = vmatprep.subr.mxu0 0.0
        %2403 = vmatpush2.msra.mxu0 0.0
        %2404 = vmatprep.subr.mxu0 0.0
        %2405 = vmatpush2.msra.mxu0 0.0
        %2406 = vmatprep.subr.mxu0 0.0
        %2407 = vmatpush2.msra.mxu0 0.0
        %2408 = vmatprep.subr.mxu0 0.0
        %2409 = vmatpush2.msra.mxu0 0.0
        %2410 = vmatprep.subr.mxu0 0.0
        %2411 = vmatpush2.msra.mxu0 0.0
        %2412 = vmatprep.subr.mxu0 0.0
        %2413 = vmatpush2.msra.mxu0 0.0
        %2414 = vmatprep.subr.mxu0 0.0
        %2415 = vmatpush2.msra.mxu0 0.0
        %2416 = vmatprep.subr.mxu0 0.0
        %2417 = vmatpush2.msra.mxu0 0.0
        %2418 = vmatprep.subr.mxu0 0.0
        %2419 = vmatpush2.msra.mxu0 0.0
        %2420 = vmatprep.subr.mxu0 0.0
        %2421 = vmatpush2.msra.mxu0 0.0
        %2422 = vmatprep.subr.mxu0 0.0
        %2423 = vmatpush2.msra.mxu0 0.0
        %2424 = vmatprep.subr.mxu0 0.0
        %2425 = vmatpush2.msra.mxu0 0.0
        %2426 = vmatprep.subr.mxu0 0.0
        %2427 = vmatpush2.msra.mxu0 0.0
        %2428 = vmatprep.mubr.f32.mxu0 0.0
        %2429 = vmatmul.mubr.f32.gmra.mxu0 %v2359
        %v2430 = vpop.f32.mrf.mxu0
        %v2431 = vadd.f32 0.0, %v2430
        %v2432 = vpop.f32.mrf.mxu0
        %v2433 = vadd.f32 0.0, %v2432
        %2434 = vdwg.mxu0
        %2435 = vmatprep.subr.mxu0 %v2015
        %2436 = vmatpush1.msra.mxu0 %v2014
        %2437 = vmatprep.subr.mxu0 %v2011
        %2438 = vmatpush1.msra.mxu0 %v2010
        %2439 = vmatprep.subr.mxu0 %v2007
        %2440 = vmatpush1.msra.mxu0 %v2006
        %2441 = vmatprep.subr.mxu0 %v2003
        %2442 = vmatpush1.msra.mxu0 %v2002
        %2443 = vmatprep.subr.mxu0 %v1999
        %2444 = vmatpush1.msra.mxu0 %v1998
        %2445 = vmatprep.subr.mxu0 %v1995
        %2446 = vmatpush1.msra.mxu0 %v1994
        %2447 = vmatprep.subr.mxu0 %v1991
        %2448 = vmatpush1.msra.mxu0 %v1990
        %2449 = vmatprep.subr.mxu0 %v1987
        %2450 = vmatpush1.msra.mxu0 %v1986
        %2451 = vmatprep.subr.mxu0 %v1983
        %2452 = vmatpush1.msra.mxu0 %v1982
        %2453 = vmatprep.subr.mxu0 %v1979
        %2454 = vmatpush1.msra.mxu0 %v1978
        %2455 = vmatprep.subr.mxu0 %v1975
        %2456 = vmatpush1.msra.mxu0 %v1974
        %2457 = vmatprep.subr.mxu0 %v1971
        %2458 = vmatpush1.msra.mxu0 %v1970
        %2459 = vmatprep.subr.mxu0 %v1967
        %2460 = vmatpush1.msra.mxu0 %v1966
        %2461 = vmatprep.subr.mxu0 %v1963
        %2462 = vmatpush1.msra.mxu0 %v1962
        %2463 = vmatprep.subr.mxu0 %v1959
        %2464 = vmatpush1.msra.mxu0 %v1958
        %2465 = vmatprep.subr.mxu0 %v1955
        %2466 = vmatpush1.msra.mxu0 %v1954
        %2467 = vmatprep.subr.mxu0 0.0
        %2468 = vmatpush2.msra.mxu0 0.0
        %2469 = vmatprep.subr.mxu0 0.0
        %2470 = vmatpush2.msra.mxu0 0.0
        %2471 = vmatprep.subr.mxu0 0.0
        %2472 = vmatpush2.msra.mxu0 0.0
        %2473 = vmatprep.subr.mxu0 0.0
        %2474 = vmatpush2.msra.mxu0 0.0
        %2475 = vmatprep.subr.mxu0 0.0
        %2476 = vmatpush2.msra.mxu0 0.0
        %2477 = vmatprep.subr.mxu0 0.0
        %2478 = vmatpush2.msra.mxu0 0.0
        %2479 = vmatprep.subr.mxu0 0.0
        %2480 = vmatpush2.msra.mxu0 0.0
        %2481 = vmatprep.subr.mxu0 0.0
        %2482 = vmatpush2.msra.mxu0 0.0
        %2483 = vmatprep.subr.mxu0 0.0
        %2484 = vmatpush2.msra.mxu0 0.0
        %2485 = vmatprep.subr.mxu0 0.0
        %2486 = vmatpush2.msra.mxu0 0.0
        %2487 = vmatprep.subr.mxu0 0.0
        %2488 = vmatpush2.msra.mxu0 0.0
        %2489 = vmatprep.subr.mxu0 0.0
        %2490 = vmatpush2.msra.mxu0 0.0
        %2491 = vmatprep.subr.mxu0 0.0
        %2492 = vmatpush2.msra.mxu0 0.0
        %2493 = vmatprep.subr.mxu0 0.0
        %2494 = vmatpush2.msra.mxu0 0.0
        %2495 = vmatprep.subr.mxu0 0.0
        %2496 = vmatpush2.msra.mxu0 0.0
        %2497 = vmatprep.subr.mxu0 0.0
        %2498 = vmatpush2.msra.mxu0 0.0
        %2499 = vmatprep.mubr.f32.mxu0 0.0
        %2500 = vmatmul.mubr.f32.gmra.mxu0 %v2359
        %v2501 = vpop.f32.mrf.mxu0
        %v2502 = vadd.f32 0.0, %v2501
        %v2503 = vpop.f32.mrf.mxu0
        %v2504 = vadd.f32 0.0, %v2503
        %2505 = vdwg.mxu0
        %v2506 = vadd.f32 %v2360, %v2431
        %v2507 = vadd.f32 %v2361, %v2433
        %v2508 = vadd.f32 %v2362, %v2502
        %v2509 = vadd.f32 %v2363, %v2504
        %v2510 = vxor.u32 %v2506, 2147483648
        %v2511 = vxor.u32 %v2507, 2147483648
        %v2512 = vxor.u32 %v2508, 2147483648
        %v2513 = vmul.f32 %v2510, 1.442695
        %v2514 = vpow.pop %v2513
        %v2515 = vmul.f32 %v2511, 1.442695
        %v2516 = vpow.pop %v2515
        %v2517 = vmul.f32 %v2512, 1.442695
        %v2518 = vpow.pop %v2517
        %v2519 = vadd.f32 %v2514, 1.0
        %v2520 = vadd.f32 %v2516, 1.0
        %v2521 = vadd.f32 %v2518, 1.0
        %v2522 = vrcp.pop %v2519
        %v2523 = vmul.f32 1.0, %v2522
        %v2524 = vrcp.pop %v2520
        %v2525 = vmul.f32 1.0, %v2524
        %v2526 = vrcp.pop %v2521
        %v2527 = vmul.f32 1.0, %v2526
        %v2528 = vtanh.pop %v2509
        %v2529 = vmul.f32 %v2525, %v2357
        %v2530 = vmul.f32 %v2523, %v2528
        %v2531 = vadd.f32 %v2529, %v2530
        %v2532 = vtanh.pop %v2531
        %v2533 = vmul.f32 %v2527, %v2532
        %v2534 = vld [vmem:[%s1417] sm:$0xff]
        %v2535 = vld [vmem:[%s1417 + $0x8] sm:$0xff]
        %v2536 = vld [vmem:[%s1417 + $0x10] sm:$0xff]
        %v2537 = vld [vmem:[%s1417 + $0x18] sm:$0xff]
        %2538 = vmatprep.subr.mxu0 %v2013
        %2539 = vmatpush1.msra.mxu0 %v2012
        %2540 = vmatprep.subr.mxu0 %v2009
        %2541 = vmatpush1.msra.mxu0 %v2008
        %2542 = vmatprep.subr.mxu0 %v2005
        %2543 = vmatpush1.msra.mxu0 %v2004
        %2544 = vmatprep.subr.mxu0 %v2001
        %2545 = vmatpush1.msra.mxu0 %v2000
        %2546 = vmatprep.subr.mxu0 %v1997
        %2547 = vmatpush1.msra.mxu0 %v1996
        %2548 = vmatprep.subr.mxu0 %v1993
        %2549 = vmatpush1.msra.mxu0 %v1992
        %2550 = vmatprep.subr.mxu0 %v1989
        %2551 = vmatpush1.msra.mxu0 %v1988
        %2552 = vmatprep.subr.mxu0 %v1985
        %2553 = vmatpush1.msra.mxu0 %v1984
        %2554 = vmatprep.subr.mxu0 %v1981
        %2555 = vmatpush1.msra.mxu0 %v1980
        %2556 = vmatprep.subr.mxu0 %v1977
        %2557 = vmatpush1.msra.mxu0 %v1976
        %2558 = vmatprep.subr.mxu0 %v1973
        %2559 = vmatpush1.msra.mxu0 %v1972
        %2560 = vmatprep.subr.mxu0 %v1969
        %2561 = vmatpush1.msra.mxu0 %v1968
        %2562 = vmatprep.subr.mxu0 %v1965
        %2563 = vmatpush1.msra.mxu0 %v1964
        %2564 = vmatprep.subr.mxu0 %v1961
        %2565 = vmatpush1.msra.mxu0 %v1960
        %2566 = vmatprep.subr.mxu0 %v1957
        %2567 = vmatpush1.msra.mxu0 %v1956
        %2568 = vmatprep.subr.mxu0 %v1953
        %2569 = vmatpush1.msra.mxu0 %v1952
        %2570 = vmatprep.subr.mxu0 0.0
        %2571 = vmatpush2.msra.mxu0 0.0
        %2572 = vmatprep.subr.mxu0 0.0
        %2573 = vmatpush2.msra.mxu0 0.0
        %2574 = vmatprep.subr.mxu0 0.0
        %2575 = vmatpush2.msra.mxu0 0.0
        %2576 = vmatprep.subr.mxu0 0.0
        %2577 = vmatpush2.msra.mxu0 0.0
        %2578 = vmatprep.subr.mxu0 0.0
        %2579 = vmatpush2.msra.mxu0 0.0
        %2580 = vmatprep.subr.mxu0 0.0
        %2581 = vmatpush2.msra.mxu0 0.0
        %2582 = vmatprep.subr.mxu0 0.0
        %2583 = vmatpush2.msra.mxu0 0.0
        %2584 = vmatprep.subr.mxu0 0.0
        %2585 = vmatpush2.msra.mxu0 0.0
        %2586 = vmatprep.subr.mxu0 0.0
        %2587 = vmatpush2.msra.mxu0 0.0
        %2588 = vmatprep.subr.mxu0 0.0
        %2589 = vmatpush2.msra.mxu0 0.0
        %2590 = vmatprep.subr.mxu0 0.0
        %2591 = vmatpush2.msra.mxu0 0.0
        %2592 = vmatprep.subr.mxu0 0.0
        %2593 = vmatpush2.msra.mxu0 0.0
        %2594 = vmatprep.subr.mxu0 0.0
        %2595 = vmatpush2.msra.mxu0 0.0
        %2596 = vmatprep.subr.mxu0 0.0
        %2597 = vmatpush2.msra.mxu0 0.0
        %2598 = vmatprep.subr.mxu0 0.0
        %2599 = vmatpush2.msra.mxu0 0.0
        %2600 = vmatprep.subr.mxu0 0.0
        %2601 = vmatpush2.msra.mxu0 0.0
        %2602 = vmatprep.mubr.f32.mxu0 0.0
        %2603 = vmatmul.mubr.f32.gmra.mxu0 %v2533
        %v2604 = vpop.f32.mrf.mxu0
        %v2605 = vadd.f32 0.0, %v2604
        %v2606 = vpop.f32.mrf.mxu0
        %v2607 = vadd.f32 0.0, %v2606
        %2608 = vdwg.mxu0
        %2609 = vmatprep.subr.mxu0 %v2015
        %2610 = vmatpush1.msra.mxu0 %v2014
        %2611 = vmatprep.subr.mxu0 %v2011
        %2612 = vmatpush1.msra.mxu0 %v2010
        %2613 = vmatprep.subr.mxu0 %v2007
        %2614 = vmatpush1.msra.mxu0 %v2006
        %2615 = vmatprep.subr.mxu0 %v2003
        %2616 = vmatpush1.msra.mxu0 %v2002
        %2617 = vmatprep.subr.mxu0 %v1999
        %2618 = vmatpush1.msra.mxu0 %v1998
        %2619 = vmatprep.subr.mxu0 %v1995
        %2620 = vmatpush1.msra.mxu0 %v1994
        %2621 = vmatprep.subr.mxu0 %v1991
        %2622 = vmatpush1.msra.mxu0 %v1990
        %2623 = vmatprep.subr.mxu0 %v1987
        %2624 = vmatpush1.msra.mxu0 %v1986
        %2625 = vmatprep.subr.mxu0 %v1983
        %2626 = vmatpush1.msra.mxu0 %v1982
        %2627 = vmatprep.subr.mxu0 %v1979
        %2628 = vmatpush1.msra.mxu0 %v1978
        %2629 = vmatprep.subr.mxu0 %v1975
        %2630 = vmatpush1.msra.mxu0 %v1974
        %2631 = vmatprep.subr.mxu0 %v1971
        %2632 = vmatpush1.msra.mxu0 %v1970
        %2633 = vmatprep.subr.mxu0 %v1967
        %2634 = vmatpush1.msra.mxu0 %v1966
        %2635 = vmatprep.subr.mxu0 %v1963
        %2636 = vmatpush1.msra.mxu0 %v1962
        %2637 = vmatprep.subr.mxu0 %v1959
        %2638 = vmatpush1.msra.mxu0 %v1958
        %2639 = vmatprep.subr.mxu0 %v1955
        %2640 = vmatpush1.msra.mxu0 %v1954
        %2641 = vmatprep.subr.mxu0 0.0
        %2642 = vmatpush2.msra.mxu0 0.0
        %2643 = vmatprep.subr.mxu0 0.0
        %2644 = vmatpush2.msra.mxu0 0.0
        %2645 = vmatprep.subr.mxu0 0.0
        %2646 = vmatpush2.msra.mxu0 0.0
        %2647 = vmatprep.subr.mxu0 0.0
        %2648 = vmatpush2.msra.mxu0 0.0
        %2649 = vmatprep.subr.mxu0 0.0
        %2650 = vmatpush2.msra.mxu0 0.0
        %2651 = vmatprep.subr.mxu0 0.0
        %2652 = vmatpush2.msra.mxu0 0.0
        %2653 = vmatprep.subr.mxu0 0.0
        %2654 = vmatpush2.msra.mxu0 0.0
        %2655 = vmatprep.subr.mxu0 0.0
        %2656 = vmatpush2.msra.mxu0 0.0
        %2657 = vmatprep.subr.mxu0 0.0
        %2658 = vmatpush2.msra.mxu0 0.0
        %2659 = vmatprep.subr.mxu0 0.0
        %2660 = vmatpush2.msra.mxu0 0.0
        %2661 = vmatprep.subr.mxu0 0.0
        %2662 = vmatpush2.msra.mxu0 0.0
        %2663 = vmatprep.subr.mxu0 0.0
        %2664 = vmatpush2.msra.mxu0 0.0
        %2665 = vmatprep.subr.mxu0 0.0
        %2666 = vmatpush2.msra.mxu0 0.0
        %2667 = vmatprep.subr.mxu0 0.0
        %2668 = vmatpush2.msra.mxu0 0.0
        %2669 = vmatprep.subr.mxu0 0.0
        %2670 = vmatpush2.msra.mxu0 0.0
        %2671 = vmatprep.subr.mxu0 0.0
        %2672 = vmatpush2.msra.mxu0 0.0
        %2673 = vmatprep.mubr.f32.mxu0 0.0
        %2674 = vmatmul.mubr.f32.gmra.mxu0 %v2533
        %v2675 = vpop.f32.mrf.mxu0
        %v2676 = vadd.f32 0.0, %v2675
        %v2677 = vpop.f32.mrf.mxu0
        %v2678 = vadd.f32 0.0, %v2677
        %2679 = vdwg.mxu0
        %v2680 = vadd.f32 %v2534, %v2605
        %v2681 = vadd.f32 %v2535, %v2607
        %v2682 = vadd.f32 %v2536, %v2676
        %v2683 = vadd.f32 %v2537, %v2678
        %v2684 = vxor.u32 %v2680, 2147483648
        %v2685 = vxor.u32 %v2681, 2147483648
        %v2686 = vxor.u32 %v2682, 2147483648
        %v2687 = vmul.f32 %v2684, 1.442695
        %v2688 = vpow.pop %v2687
        %v2689 = vmul.f32 %v2685, 1.442695
        %v2690 = vpow.pop %v2689
        %v2691 = vmul.f32 %v2686, 1.442695
        %v2692 = vpow.pop %v2691
        %v2693 = vadd.f32 %v2688, 1.0
        %v2694 = vadd.f32 %v2690, 1.0
        %v2695 = vadd.f32 %v2692, 1.0
        %v2696 = vrcp.pop %v2693
        %v2697 = vmul.f32 1.0, %v2696
        %v2698 = vrcp.pop %v2694
        %v2699 = vmul.f32 1.0, %v2698
        %v2700 = vrcp.pop %v2695
        %v2701 = vmul.f32 1.0, %v2700
        %v2702 = vtanh.pop %v2683
        %v2703 = vmul.f32 %v2699, %v2531
        %v2704 = vmul.f32 %v2697, %v2702
        %v2705 = vadd.f32 %v2703, %v2704
        %v2706 = vtanh.pop %v2705
        %v2707 = vmul.f32 %v2701, %v2706
        %2708 = vst [vmem:[%s1944] sm:$0xff] %v2707
        %2709 = vst [vmem:[%s1946] sm:$0xff] %v2705
        %p2710 = scmp.eq.s32.totalorder %s23, 1
        // Predicated region
        $region81: #{rnn_forward.1} parent=55 // pred_check
          %p2711 = pneg %p2710
        $region82: #{rnn_forward.1} parent=55 // pred_check_branch
          %2713 = sbr.rel (%p2711) target = $region84
        $region83: #{rnn_forward.1} parent=55 // pred_region
          %v2714 = vld [vmem:[#allocation13] sm:$0xff]
          %v2715 = vld [vmem:[#allocation13 + $0x8] sm:$0xff]
          %v2716 = vld [vmem:[#allocation13 + $0x10] sm:$0xff]
          %v2717 = vld [vmem:[#allocation13 + $0x18] sm:$0xff]
          %v2718 = vld [vmem:[#allocation13 + $0x20] sm:$0xff]
          %v2719 = vld [vmem:[#allocation13 + $0x28] sm:$0xff]
          %v2720 = vld [vmem:[#allocation13 + $0x30] sm:$0xff]
          %v2721 = vld [vmem:[#allocation13 + $0x38] sm:$0xff]
          %v2722 = vld [vmem:[#allocation13 + $0x40] sm:$0xff]
          %v2723 = vld [vmem:[#allocation13 + $0x48] sm:$0xff]
          %v2724 = vld [vmem:[#allocation13 + $0x50] sm:$0xff]
          %v2725 = vld [vmem:[#allocation13 + $0x58] sm:$0xff]
          %v2726 = vld [vmem:[#allocation13 + $0x60] sm:$0xff]
          %v2727 = vld [vmem:[#allocation13 + $0x68] sm:$0xff]
          %v2728 = vld [vmem:[#allocation13 + $0x70] sm:$0xff]
          %v2729 = vld [vmem:[#allocation13 + $0x78] sm:$0xff]
          %v2730 = vld [vmem:[%s8] sm:$0x1]
          %v2732 = vlaneseq
          %v2733 = vshrl.u32 %v2732, 7
          %v2734 = vsub.s32 0, %v2733
          %v2735 = vrot.slane %v2730, %v2734
          %2737 = vmatprep.subr.mxu0 0.0
          %2738 = vmatpush1.msra.mxu0 %v2729
          %2739 = vmatprep.subr.mxu0 0.0
          %2740 = vmatpush1.msra.mxu0 %v2728
          %2741 = vmatprep.subr.mxu0 0.0
          %2742 = vmatpush1.msra.mxu0 %v2727
          %2743 = vmatprep.subr.mxu0 0.0
          %2744 = vmatpush1.msra.mxu0 %v2726
          %2745 = vmatprep.subr.mxu0 0.0
          %2746 = vmatpush1.msra.mxu0 %v2725
          %2747 = vmatprep.subr.mxu0 0.0
          %2748 = vmatpush1.msra.mxu0 %v2724
          %2749 = vmatprep.subr.mxu0 0.0
          %2750 = vmatpush1.msra.mxu0 %v2723
          %2751 = vmatprep.subr.mxu0 0.0
          %2752 = vmatpush1.msra.mxu0 %v2722
          %2753 = vmatprep.subr.mxu0 0.0
          %2754 = vmatpush1.msra.mxu0 %v2721
          %2755 = vmatprep.subr.mxu0 0.0
          %2756 = vmatpush1.msra.mxu0 %v2720
          %2757 = vmatprep.subr.mxu0 0.0
          %2758 = vmatpush1.msra.mxu0 %v2719
          %2759 = vmatprep.subr.mxu0 0.0
          %2760 = vmatpush1.msra.mxu0 %v2718
          %2761 = vmatprep.subr.mxu0 0.0
          %2762 = vmatpush1.msra.mxu0 %v2717
          %2763 = vmatprep.subr.mxu0 0.0
          %2764 = vmatpush1.msra.mxu0 %v2716
          %2765 = vmatprep.subr.mxu0 0.0
          %2766 = vmatpush1.msra.mxu0 %v2715
          %2767 = vmatprep.subr.mxu0 0.0
          %2768 = vmatpush1.msra.mxu0 %v2714
          %2769 = vmatprep.subr.mxu0 0.0
          %2770 = vmatpush2.msra.mxu0 0.0
          %2771 = vmatprep.subr.mxu0 0.0
          %2772 = vmatpush2.msra.mxu0 0.0
          %2773 = vmatprep.subr.mxu0 0.0
          %2774 = vmatpush2.msra.mxu0 0.0
          %2775 = vmatprep.subr.mxu0 0.0
          %2776 = vmatpush2.msra.mxu0 0.0
          %2777 = vmatprep.subr.mxu0 0.0
          %2778 = vmatpush2.msra.mxu0 0.0
          %2779 = vmatprep.subr.mxu0 0.0
          %2780 = vmatpush2.msra.mxu0 0.0
          %2781 = vmatprep.subr.mxu0 0.0
          %2782 = vmatpush2.msra.mxu0 0.0
          %2783 = vmatprep.subr.mxu0 0.0
          %2784 = vmatpush2.msra.mxu0 0.0
          %2785 = vmatprep.subr.mxu0 0.0
          %2786 = vmatpush2.msra.mxu0 0.0
          %2787 = vmatprep.subr.mxu0 0.0
          %2788 = vmatpush2.msra.mxu0 0.0
          %2789 = vmatprep.subr.mxu0 0.0
          %2790 = vmatpush2.msra.mxu0 0.0
          %2791 = vmatprep.subr.mxu0 0.0
          %2792 = vmatpush2.msra.mxu0 0.0
          %2793 = vmatprep.subr.mxu0 0.0
          %2794 = vmatpush2.msra.mxu0 0.0
          %2795 = vmatprep.subr.mxu0 0.0
          %2796 = vmatpush2.msra.mxu0 0.0
          %2797 = vmatprep.subr.mxu0 0.0
          %2798 = vmatpush2.msra.mxu0 0.0
          %2799 = vmatprep.subr.mxu0 0.0
          %2800 = vmatpush2.msra.mxu0 0.0
          %2801 = vmatprep.mubr.f32.mxu0 0.0
          %2802 = vmatmul.mubr.f32.gmra.mxu0 %v2707
          %v2803 = vpop.f32.mrf.mxu0
          %v2804 = vadd.f32 %v2735, %v2803
          %v2805 = vpop.f32.mrf.mxu0
          %2806 = vdwg.mxu0
          %2807 = vst [vmem:[%s9] sm:$0xff] %v2804
        $region84: #{rnn_forward.1} parent=55 // pred_fallthru
          _
        // Predicated region
        $region85: #{rnn_forward.1} parent=55 // pred_check
          %p2808 = pneg %p230
        $region86: #{rnn_forward.1} parent=55 // pred_check_branch
          %2810 = sbr.rel (%p2808) target = $region88
        $region87: #{rnn_forward.1} parent=55 // pred_region
          _
        $region88: #{rnn_forward.1} parent=55 // pred_fallthru
          _
        // Predicated region
        $region89: #{rnn_forward.1} parent=55 // pred_check
          %p2811 = pneg %p230
        $region90: #{rnn_forward.1} parent=55 // pred_check_branch
          %2813 = sbr.rel (%p2811) target = $region92
        $region91: #{rnn_forward.1} parent=55 // pred_region
          _
        $region92: #{rnn_forward.1} parent=55 // pred_fallthru
          _
      $region56: #{rnn_forward.1} parent=5 // pred_fallthru
        _
      %p2814 = scmp.le.s32.totalorder 2, %s18
      // Predicated region
      $region93: #{rnn_forward.1} parent=5 // pred_check
        %p2815 = pneg %p2814
      $region94: #{rnn_forward.1} parent=5 // pred_check_branch
        %2817 = sbr.rel (%p2815) target = $region96
      $region95: #{rnn_forward.1} parent=5 // pred_region
        %s2818 = ssub.s32 %s18, 2
      $region96: #{rnn_forward.1} parent=5 // pred_fallthru
        _
    $region6: #{rnn_forward.1} parent=1 // loop_footer
      %s22 = sadd.s32 1, %s18
    $region7: #{rnn_forward.1} parent=1 // loop_footer_branch
      %17 = sbr.rel target = $region3
    $region8: #{rnn_forward.1} parent=1 // loop_exit
      _
    %2819 = vsyncpa [#allocation7], 1
    %s2820 = scalar_lea.sflag [#allocation7], 1
    %2821 = vsyncpa %s2820, 1
    %2822 = vsyncpa [#allocation9], 1
    %2823 = vsyncpa [#allocation12], 1

</llo_original>
